<compile_context>
chip_gen: v7x
topology: tpu7x:2x2x1
jax: 0.10.0
libtpu: 0.0.40
codegen_flags: <defaults>
</compile_context>

<pallas_src>
import functools

import jax
import jax.numpy as jnp
from jax import lax
from jax.experimental import pallas as pl
from jax.experimental.pallas import tpu as pltpu


# ---------------------------------------------------------------------------
# Fused kernel:
#   x_mid_ref : (1, TH, W, Cin)   current row tile of x
#   x_top_ref : (1, 1, W, Cin)    row above the tile (clamped at image top)
#   x_bot_ref : (1, 1, W, Cin)    row below the tile (clamped at image bottom)
#   w1_ref    : (Cin, C)          conv1 weight with BN scale folded in
#   b1_ref    : (1, C) f32        conv1 folded BN bias
#   w2_ref    : (3, 3, C, C)      conv2 weight (HWIO) with BN scale folded in
#   b2_ref    : (1, C) f32        conv2 folded BN bias
#   o_ref     : (1, TH, W, C)
#   y1_buf    : VMEM (TH+2, W+2, C)  zero-padded conv1 activations (I/O dtype)
# ---------------------------------------------------------------------------
def residual_block_kernel(x_mid_ref, x_top_ref, x_bot_ref,
                          w1_ref, b1_ref, w2_ref, b2_ref,
                          o_ref, y1_buf, *, add_residual):
    TH = x_mid_ref.shape[1]
    W = x_mid_ref.shape[2]
    Cin = x_mid_ref.shape[3]
    C = o_ref.shape[3]
    buf_dt = y1_buf.dtype

    w1 = w1_ref[...]                    # (Cin, C), BN scale already folded
    b1 = b1_ref[...]                    # (1, C) f32

    def conv1(x3d):                     # x3d: (R, W, Cin) value
        r = x3d.shape[0]
        y = jnp.dot(x3d.reshape(r * W, Cin), w1,
                    preferred_element_type=jnp.float32)
        y = y + b1
        y = y * (1.0 / (1.0 + jnp.exp(-y)))        # SiLU, f32 epilogue
        return y.reshape(r, W, C).astype(buf_dt)

    t = pl.program_id(1)
    last_t = pl.num_programs(1) - 1

    # Zero the 1-pixel left/right padding columns (2 columns — cheap).
    zcol = jnp.zeros((TH + 2, 1, C), buf_dt)
    y1_buf[:, 0:1, :] = zcol
    y1_buf[:, W + 1:W + 2, :] = zcol

    # conv1 + BN + SiLU on the tile interior.
    y1_buf[1:TH + 1, 1:W + 1, :] = conv1(x_mid_ref[0])

    # Halo rows: compute conv1 only when the neighbouring row exists; at the
    # image border the 3x3 conv sees true zero padding (correct, since the
    # BN-folded conv1 of a zero-padded pixel is NOT zero).
    @pl.when(t > 0)
    def _():
        y1_buf[0:1, 1:W + 1, :] = conv1(x_top_ref[0])

    @pl.when(t == 0)
    def _():
        y1_buf[0:1, 1:W + 1, :] = jnp.zeros((1, W, C), buf_dt)

    @pl.when(t < last_t)
    def _():
        y1_buf[TH + 1:TH + 2, 1:W + 1, :] = conv1(x_bot_ref[0])

    @pl.when(t == last_t)
    def _():
        y1_buf[TH + 1:TH + 2, 1:W + 1, :] = jnp.zeros((1, W, C), buf_dt)

    # 3x3 conv as 9 shifted matmuls (MXU), accumulated as an f32 value so the
    # partial sums stay in vregs / the MXU result buffer instead of VMEM.
    acc = None
    for dh in range(3):
        for dw in range(3):
            patch = y1_buf[dh:dh + TH, dw:dw + W, :].reshape(TH * W, C)
            contrib = jnp.dot(patch, w2_ref[dh, dw],
                              preferred_element_type=jnp.float32)
            acc = contrib if acc is None else acc + contrib

    y2 = acc + b2_ref[...]
    y2 = y2 * (1.0 / (1.0 + jnp.exp(-y2)))         # SiLU, f32
    if add_residual:
        # Residual is the same x tile already in VMEM — no extra HBM read.
        y2 = y2 + x_mid_ref[0].reshape(TH * W, Cin).astype(jnp.float32)
    o_ref[0] = y2.reshape(TH, W, C).astype(o_ref.dtype)


# ---------------------------------------------------------------------------
# Row-tile chooser: largest divisor of H that fits a conservative VMEM budget
# (safe under v7x's 64 MiB VMEM / 32 MiB scoped limit), keeping >= 2 grid
# slices when possible so a second TensorCore gets work.
# ---------------------------------------------------------------------------
def _pick_row_tile(n, h, w, cin, cout, itemsize,
                   budget_bytes=12 * 1024 * 1024):
    def vmem_estimate(th):
        act = 2 * th * w * cin * itemsize            # x row tile, double buffered
        halo = 4 * w * cin * itemsize                # top/bottom halo rows
        out = 2 * th * w * cout * itemsize           # output tile, double buffered
        wgt = 2 * ((cin * cout + 9 * cout * cout) * itemsize + 2 * cout * 4)
        scr = (th + 2) * (w + 2) * cout * itemsize   # padded conv1 scratch
        regs = th * w * cout * 4                     # f32 tap accumulator
        return act + halo + out + wgt + scr + regs

    divisors = [d for d in range(1, h + 1) if h % d == 0]
    fitting = [d for d in divisors if vmem_estimate(d) <= budget_bytes]
    th = max(fitting) if fitting else 1
    if n * (h // th) < 2:                            # give the 2nd TC some work
        smaller = [d for d in fitting if d < h]
        if smaller:
            th = max(smaller)
    return th


# ---------------------------------------------------------------------------
# Wrappers.  Core API is NHWC; a thin NCHW wrapper matches PyTorch for tests.
# Activation/weight I/O dtype follows x.dtype (f32 or bf16); accumulation and
# the bias/SiLU epilogue stay f32.  BN scales are folded into the conv
# weights here (weights are tiny — this is free, unlike scaling activations).
# ---------------------------------------------------------------------------
def residual_block_forward_nhwc(x_nhwc, params, shortcut=True, tile_h=None):
    N, H, W, Cin = x_nhwc.shape
    Cout = params["w1"].shape[1]
    dt = x_nhwc.dtype
    itemsize = jnp.dtype(dt).itemsize

    if tile_h is None:
        tile_h = _pick_row_tile(N, H, W, Cin, Cout, itemsize)
    assert H % tile_h == 0, "tile_h must divide H"
    nt = H // tile_h

    add_residual = bool(shortcut and Cin == Cout)
    kernel = functools.partial(residual_block_kernel, add_residual=add_residual)

    # Fold BN scale into conv weights; biases stay as f32 epilogue adds.
    w1 = (params["w1"].astype(jnp.float32) * params["s1"]).astype(dt)       # (Cin, Cout)
    b1 = params["b1"].astype(jnp.float32)                                    # (1, Cout)
    w2 = (params["w2"].astype(jnp.float32) * params["s2"][0]).astype(dt)     # (3,3,Cout,Cout)
    b2 = params["b2"].astype(jnp.float32)

    out = pl.pallas_call(
        kernel,
        out_shape=jax.ShapeDtypeStruct((N, H, W, Cout), dt),
        grid=(N, nt),
        in_specs=[
            # current row tile
            pl.BlockSpec((1, tile_h, W, Cin), lambda n, t: (n, t, 0, 0)),
            # 1-row halos (clamped at the image edge; zeroed in-kernel there)
            pl.BlockSpec((1, 1, W, Cin),
                         lambda n, t: (n, jnp.maximum(t * tile_h - 1, 0), 0, 0)),
            pl.BlockSpec((1, 1, W, Cin),
                         lambda n, t: (n, jnp.minimum((t + 1) * tile_h, H - 1), 0, 0)),
            # weights / folded-BN biases: constant index -> fetched once
            pl.BlockSpec((Cin, Cout), lambda n, t: (0, 0)),
            pl.BlockSpec((1, Cout), lambda n, t: (0, 0)),
            pl.BlockSpec((3, 3, Cout, Cout), lambda n, t: (0, 0, 0, 0)),
            pl.BlockSpec((1, Cout), lambda n, t: (0, 0)),
        ],
        out_specs=pl.BlockSpec((1, tile_h, W, Cout), lambda n, t: (n, t, 0, 0)),
        scratch_shapes=[
            pltpu.VMEM((tile_h + 2, W + 2, Cout), dt),       # padded conv1 act
        ],
        compiler_params=pltpu.CompilerParams(
            dimension_semantics=("parallel", "parallel"),
            vmem_limit_bytes=32 * 1024 * 1024,
        ),
    )(x_nhwc, x_nhwc, x_nhwc, w1, b1, w2, b2)
    return out


def residual_block_forward(x_nchw, params, shortcut=True, tile_h=None):
    x_nhwc = jnp.transpose(x_nchw, (0, 2, 3, 1))
    out = residual_block_forward_nhwc(x_nhwc, params, shortcut, tile_h)
    return jnp.transpose(out, (0, 3, 1, 2))


# ---------------------------------------------------------------------------
# Deterministic parameter init (same shapes as the PyTorch module) + BN fold
# ---------------------------------------------------------------------------
def init_params(key, c_in, c_out, eps=1e-5):
    ks = jax.random.split(key, 10)

    def bn_fold(kg, kb, km, kv, c):
        gamma = 1.0 + 0.1 * jax.random.normal(kg, (c,), jnp.float32)
        beta = 0.1 * jax.random.normal(kb, (c,), jnp.float32)
        mean = 0.1 * jax.random.normal(km, (c,), jnp.float32)
        var = jnp.abs(jax.random.normal(kv, (c,), jnp.float32)) + 0.5
        scale = gamma / jnp.sqrt(var + eps)
        bias = beta - mean * scale
        return scale.reshape(1, c), bias.reshape(1, c)

    # conv1 weight: PyTorch (Cout, Cin, 1, 1) -> (Cin, Cout)
    w1_t = 0.1 * jax.random.normal(ks[0], (c_out, c_in, 1, 1), jnp.float32)
    w1 = jnp.transpose(w1_t[:, :, 0, 0], (1, 0))
    s1, b1 = bn_fold(ks[1], ks[2], ks[3], ks[4], c_out)

    # conv2 weight: PyTorch (Cout, Cout, 3, 3) -> HWIO (3, 3, Cin=Cout, Cout)
    w2_t = 0.1 * jax.random.normal(ks[5], (c_out, c_out, 3, 3), jnp.float32)
    w2 = jnp.transpose(w2_t, (2, 3, 1, 0))
    s2, b2 = bn_fold(ks[6], ks[7], ks[8], ks[9], c_out)

    return {"w1": w1, "s1": s1, "b1": b1, "w2": w2, "s2": s2, "b2": b2}


# ---------------------------------------------------------------------------
# Pure-JAX reference (numerical sanity check)
# ---------------------------------------------------------------------------
def reference_forward(x_nchw, params, shortcut=True):
    x = jnp.transpose(x_nchw, (0, 2, 3, 1)).astype(jnp.float32)
    dn = ("NHWC", "HWIO", "NHWC")
    w1_hwio = params["w1"].reshape(1, 1, *params["w1"].shape)
    y1 = lax.conv_general_dilated(x, w1_hwio, (1, 1), "VALID",
                                  dimension_numbers=dn)
    y1 = y1 * params["s1"][0] + params["b1"][0]
    y1 = y1 * jax.nn.sigmoid(y1)
    y2 = lax.conv_general_dilated(y1, params["w2"], (1, 1), "SAME",
                                  dimension_numbers=dn)
    y2 = y2 * params["s2"][0] + params["b2"][0]
    y2 = y2 * jax.nn.sigmoid(y2)
    if shortcut and x.shape[-1] == y2.shape[-1]:
        y2 = y2 + x
    return jnp.transpose(y2, (0, 3, 1, 2))


if __name__ == "__main__":
    N, C, H, W = 2, 8, 16, 16          # in_channels == out_channels -> shortcut
    key = jax.random.PRNGKey(0)
    kx, kp = jax.random.split(key)

    x = jax.random.normal(kx, (N, C, H, W), jnp.float32)   # NCHW like PyTorch
    params = init_params(kp, C, C)

    ref = jax.block_until_ready(reference_forward(x, params, shortcut=True))

    # f32, two row tiles -> exercises halo fetch + edge zero-padding paths
    out = jax.block_until_ready(residual_block_forward(x, params, True, tile_h=8))
    assert out.shape == (N, C, H, W)
    assert jnp.allclose(out, ref, rtol=1e-4, atol=1e-4), \
        float(jnp.max(jnp.abs(out - ref)))

    # f32, auto tile size (single tile path: both halo rows are zero padding)
    out_auto = jax.block_until_ready(residual_block_forward(x, params, True))
    assert jnp.allclose(out_auto, ref, rtol=1e-4, atol=1e-4), \
        float(jnp.max(jnp.abs(out_auto - ref)))

    # bf16 I/O with f32 accumulation (halved HBM traffic); looser tolerance
    out_bf16 = residual_block_forward(x.astype(jnp.bfloat16), params, True,
                                      tile_h=8)
    out_bf16 = jax.block_until_ready(out_bf16).astype(jnp.float32)
    assert jnp.allclose(out_bf16, ref, rtol=5e-2, atol=5e-2), \
        float(jnp.max(jnp.abs(out_bf16 - ref)))

    # shortcut=False path (no residual add)
    ref_ns = jax.block_until_ready(reference_forward(x, params, shortcut=False))
    out_ns = jax.block_until_ready(residual_block_forward(x, params, False,
                                                          tile_h=8))
    assert jnp.allclose(out_ns, ref_ns, rtol=1e-4, atol=1e-4), \
        float(jnp.max(jnp.abs(out_ns - ref_ns)))

    print("KERNEL_OK")
</pallas_src>

<mosaic_0001>
module attributes {stable_mosaic.version = 11 : i64} {
  func.func @residual_block_kernel(%arg0: i32, %arg1: i32, %arg2: memref<1x8x16x8xf32, #tpu.memory_space<vmem>>, %arg3: memref<1x1x16x8xf32, #tpu.memory_space<vmem>>, %arg4: memref<1x1x16x8xf32, #tpu.memory_space<vmem>>, %arg5: memref<8x8xf32, #tpu.memory_space<vmem>>, %arg6: memref<1x8xf32, #tpu.memory_space<vmem>>, %arg7: memref<3x3x8x8xf32, #tpu.memory_space<vmem>>, %arg8: memref<1x8xf32, #tpu.memory_space<vmem>>, %arg9: memref<1x8x16x8xf32, #tpu.memory_space<vmem>>, %arg10: memref<10x18x8xf32, #tpu.memory_space<vmem>>) attributes {dimension_semantics = [#tpu.dimension_semantics<parallel>, #tpu.dimension_semantics<parallel>], iteration_bounds = array<i64: 2, 2>, scalar_prefetch = 0 : i64, scratch_operands = 1 : i64, tpu.core_type = #tpu.core_type<tc>, window_params = [{transform_indices = @transform_0, window_bounds = array<i64: 1, 8, 16, 8>}, {transform_indices = @transform_1, window_bounds = array<i64: 1, 1, 16, 8>}, {transform_indices = @transform_2, window_bounds = array<i64: 1, 1, 16, 8>}, {pipeline_mode = #tpu.pipeline_mode<synchronous>, transform_indices = @transform_3, window_bounds = array<i64: 8, 8>}, {pipeline_mode = #tpu.pipeline_mode<synchronous>, transform_indices = @transform_4, window_bounds = array<i64: 1, 8>}, {pipeline_mode = #tpu.pipeline_mode<synchronous>, transform_indices = @transform_5, window_bounds = array<i64: 3, 3, 8, 8>}, {pipeline_mode = #tpu.pipeline_mode<synchronous>, transform_indices = @transform_6, window_bounds = array<i64: 1, 8>}, {transform_indices = @transform_7, window_bounds = array<i64: 1, 8, 16, 8>}]} {
    %c0 = arith.constant 0 : index
    %c0_0 = arith.constant 0 : index
    %0 = vector.load %arg5[%c0, %c0_0] : memref<8x8xf32, #tpu.memory_space<vmem>>, vector<8x8xf32>
    %c0_1 = arith.constant 0 : index
    %c0_2 = arith.constant 0 : index
    %1 = vector.load %arg6[%c0_1, %c0_2] : memref<1x8xf32, #tpu.memory_space<vmem>>, vector<1x8xf32>
    %cst = arith.constant 0.000000e+00 : f32
    %2 = vector.broadcast %cst : f32 to vector<10x1x8xf32>
    %c0_3 = arith.constant 0 : index
    %c0_4 = arith.constant 0 : index
    %c0_5 = arith.constant 0 : index
    %3 = vector.load %arg10[%c0_3, %c0_4, %c0_5] : memref<10x18x8xf32, #tpu.memory_space<vmem>>, vector<10x1x8xf32>
    tpu.vector_store %arg10[%c0_3, %c0_4, %c0_5], %2 {strides = array<i32>} : memref<10x18x8xf32, #tpu.memory_space<vmem>>, vector<10x1x8xf32>,
    %c0_6 = arith.constant 0 : index
    %c17 = arith.constant 17 : index
    %c0_7 = arith.constant 0 : index
    %4 = vector.load %arg10[%c0_6, %c17, %c0_7] : memref<10x18x8xf32, #tpu.memory_space<vmem>>, vector<10x1x8xf32>
    tpu.vector_store %arg10[%c0_6, %c17, %c0_7], %2 {strides = array<i32>} : memref<10x18x8xf32, #tpu.memory_space<vmem>>, vector<10x1x8xf32>,
    %c0_8 = arith.constant 0 : index
    %c0_9 = arith.constant 0 : index
    %c0_10 = arith.constant 0 : index
    %c0_11 = arith.constant 0 : index
    %5 = vector.load %arg2[%c0_8, %c0_9, %c0_10, %c0_11] : memref<1x8x16x8xf32, #tpu.memory_space<vmem>>, vector<1x8x16x8xf32>
    %6 = vector.shape_cast %5 : vector<1x8x16x8xf32> to vector<8x16x8xf32>
    %7 = vector.shape_cast %6 : vector<8x16x8xf32> to vector<128x8xf32>
    %cst_12 = arith.constant dense<0.000000e+00> : vector<128x8xf32>
    %8 = tpu.matmul %7, %0, %cst_12 {dimension_numbers = #tpu.dot_dimension_numbers<[1], [0], [0], [1], [0, 0, 1, 1], [], []>} : vector<128x8xf32>, vector<8x8xf32>, vector<128x8xf32> -> vector<128x8xf32>
    %9 = vector.broadcast %1 : vector<1x8xf32> to vector<128x8xf32>
    %10 = arith.addf %8, %9 : vector<128x8xf32>
    %cst_13 = arith.constant 0.000000e+00 : f32
    %11 = vector.broadcast %cst_13 : f32 to vector<128x8xf32>
    %12 = arith.subf %11, %10 : vector<128x8xf32>
    %13 = math.exp %12 : vector<128x8xf32>
    %cst_14 = arith.constant 1.000000e+00 : f32
    %14 = vector.broadcast %cst_14 : f32 to vector<128x8xf32>
    %15 = arith.addf %14, %13 : vector<128x8xf32>
    %cst_15 = arith.constant 1.000000e+00 : f32
    %16 = vector.broadcast %cst_15 : f32 to vector<128x8xf32>
    %17 = arith.divf %16, %15 : vector<128x8xf32>
    %18 = arith.mulf %10, %17 : vector<128x8xf32>
    %19 = vector.shape_cast %18 : vector<128x8xf32> to vector<8x16x8xf32>
    %c1 = arith.constant 1 : index
    %c1_16 = arith.constant 1 : index
    %c0_17 = arith.constant 0 : index
    %20 = vector.load %arg10[%c1, %c1_16, %c0_17] : memref<10x18x8xf32, #tpu.memory_space<vmem>>, vector<8x16x8xf32>
    tpu.vector_store %arg10[%c1, %c1_16, %c0_17], %19 {strides = array<i32>} : memref<10x18x8xf32, #tpu.memory_space<vmem>>, vector<8x16x8xf32>,
    %c0_i32 = arith.constant 0 : i32
    %21 = arith.cmpi sgt, %arg1, %c0_i32 : i32
    %22 = arith.extui %21 : i1 to i32
    %c0_i32_18 = arith.constant 0 : i32
    %23 = arith.cmpi ne, %22, %c0_i32_18 : i32
    scf.if %23 {
      %c0_108 = arith.constant 0 : index
      %c0_109 = arith.constant 0 : index
      %c0_110 = arith.constant 0 : index
      %c0_111 = arith.constant 0 : index
      %105 = vector.load %arg3[%c0_108, %c0_109, %c0_110, %c0_111] : memref<1x1x16x8xf32, #tpu.memory_space<vmem>>, vector<1x1x16x8xf32>
      %106 = vector.shape_cast %105 : vector<1x1x16x8xf32> to vector<1x16x8xf32>
      %107 = vector.shape_cast %106 : vector<1x16x8xf32> to vector<16x8xf32>
      %cst_112 = arith.constant dense<0.000000e+00> : vector<16x8xf32>
      %108 = tpu.matmul %107, %0, %cst_112 {dimension_numbers = #tpu.dot_dimension_numbers<[1], [0], [0], [1], [0, 0, 1, 1], [], []>} : vector<16x8xf32>, vector<8x8xf32>, vector<16x8xf32> -> vector<16x8xf32>
      %109 = vector.broadcast %1 : vector<1x8xf32> to vector<16x8xf32>
      %110 = arith.addf %108, %109 : vector<16x8xf32>
      %cst_113 = arith.constant 0.000000e+00 : f32
      %111 = vector.broadcast %cst_113 : f32 to vector<16x8xf32>
      %112 = arith.subf %111, %110 : vector<16x8xf32>
      %113 = math.exp %112 : vector<16x8xf32>
      %cst_114 = arith.constant 1.000000e+00 : f32
      %114 = vector.broadcast %cst_114 : f32 to vector<16x8xf32>
      %115 = arith.addf %114, %113 : vector<16x8xf32>
      %cst_115 = arith.constant 1.000000e+00 : f32
      %116 = vector.broadcast %cst_115 : f32 to vector<16x8xf32>
      %117 = arith.divf %116, %115 : vector<16x8xf32>
      %118 = arith.mulf %110, %117 : vector<16x8xf32>
      %119 = vector.shape_cast %118 : vector<16x8xf32> to vector<1x16x8xf32>
      %c0_116 = arith.constant 0 : index
      %c1_117 = arith.constant 1 : index
      %c0_118 = arith.constant 0 : index
      %120 = vector.load %arg10[%c0_116, %c1_117, %c0_118] : memref<10x18x8xf32, #tpu.memory_space<vmem>>, vector<1x16x8xf32>
      tpu.vector_store %arg10[%c0_116, %c1_117, %c0_118], %119 {strides = array<i32>} : memref<10x18x8xf32, #tpu.memory_space<vmem>>, vector<1x16x8xf32>,
    } else {
    }
    %c0_i32_19 = arith.constant 0 : i32
    %24 = arith.cmpi eq, %arg1, %c0_i32_19 : i32
    %25 = arith.extui %24 : i1 to i32
    %c0_i32_20 = arith.constant 0 : i32
    %26 = arith.cmpi ne, %25, %c0_i32_20 : i32
    scf.if %26 {
      %cst_108 = arith.constant 0.000000e+00 : f32
      %105 = vector.broadcast %cst_108 : f32 to vector<1x16x8xf32>
      %c0_109 = arith.constant 0 : index
      %c1_110 = arith.constant 1 : index
      %c0_111 = arith.constant 0 : index
      %106 = vector.load %arg10[%c0_109, %c1_110, %c0_111] : memref<10x18x8xf32, #tpu.memory_space<vmem>>, vector<1x16x8xf32>
      tpu.vector_store %arg10[%c0_109, %c1_110, %c0_111], %105 {strides = array<i32>} : memref<10x18x8xf32, #tpu.memory_space<vmem>>, vector<1x16x8xf32>,
    } else {
    }
    %c1_i32 = arith.constant 1 : i32
    %27 = arith.cmpi slt, %arg1, %c1_i32 : i32
    %28 = arith.extui %27 : i1 to i32
    %c0_i32_21 = arith.constant 0 : i32
    %29 = arith.cmpi ne, %28, %c0_i32_21 : i32
    scf.if %29 {
      %c0_108 = arith.constant 0 : index
      %c0_109 = arith.constant 0 : index
      %c0_110 = arith.constant 0 : index
      %c0_111 = arith.constant 0 : index
      %105 = vector.load %arg4[%c0_108, %c0_109, %c0_110, %c0_111] : memref<1x1x16x8xf32, #tpu.memory_space<vmem>>, vector<1x1x16x8xf32>
      %106 = vector.shape_cast %105 : vector<1x1x16x8xf32> to vector<1x16x8xf32>
      %107 = vector.shape_cast %106 : vector<1x16x8xf32> to vector<16x8xf32>
      %cst_112 = arith.constant dense<0.000000e+00> : vector<16x8xf32>
      %108 = tpu.matmul %107, %0, %cst_112 {dimension_numbers = #tpu.dot_dimension_numbers<[1], [0], [0], [1], [0, 0, 1, 1], [], []>} : vector<16x8xf32>, vector<8x8xf32>, vector<16x8xf32> -> vector<16x8xf32>
      %109 = vector.broadcast %1 : vector<1x8xf32> to vector<16x8xf32>
      %110 = arith.addf %108, %109 : vector<16x8xf32>
      %cst_113 = arith.constant 0.000000e+00 : f32
      %111 = vector.broadcast %cst_113 : f32 to vector<16x8xf32>
      %112 = arith.subf %111, %110 : vector<16x8xf32>
      %113 = math.exp %112 : vector<16x8xf32>
      %cst_114 = arith.constant 1.000000e+00 : f32
      %114 = vector.broadcast %cst_114 : f32 to vector<16x8xf32>
      %115 = arith.addf %114, %113 : vector<16x8xf32>
      %cst_115 = arith.constant 1.000000e+00 : f32
      %116 = vector.broadcast %cst_115 : f32 to vector<16x8xf32>
      %117 = arith.divf %116, %115 : vector<16x8xf32>
      %118 = arith.mulf %110, %117 : vector<16x8xf32>
      %119 = vector.shape_cast %118 : vector<16x8xf32> to vector<1x16x8xf32>
      %c9 = arith.constant 9 : index
      %c1_116 = arith.constant 1 : index
      %c0_117 = arith.constant 0 : index
      %120 = vector.load %arg10[%c9, %c1_116, %c0_117] : memref<10x18x8xf32, #tpu.memory_space<vmem>>, vector<1x16x8xf32>
      tpu.vector_store %arg10[%c9, %c1_116, %c0_117], %119 {strides = array<i32>} : memref<10x18x8xf32, #tpu.memory_space<vmem>>, vector<1x16x8xf32>,
    } else {
    }
    %c1_i32_22 = arith.constant 1 : i32
    %30 = arith.cmpi eq, %arg1, %c1_i32_22 : i32
    %31 = arith.extui %30 : i1 to i32
    %c0_i32_23 = arith.constant 0 : i32
    %32 = arith.cmpi ne, %31, %c0_i32_23 : i32
    scf.if %32 {
      %cst_108 = arith.constant 0.000000e+00 : f32
      %105 = vector.broadcast %cst_108 : f32 to vector<1x16x8xf32>
      %c9 = arith.constant 9 : index
      %c1_109 = arith.constant 1 : index
      %c0_110 = arith.constant 0 : index
      %106 = vector.load %arg10[%c9, %c1_109, %c0_110] : memref<10x18x8xf32, #tpu.memory_space<vmem>>, vector<1x16x8xf32>
      tpu.vector_store %arg10[%c9, %c1_109, %c0_110], %105 {strides = array<i32>} : memref<10x18x8xf32, #tpu.memory_space<vmem>>, vector<1x16x8xf32>,
    } else {
    }
    %c0_24 = arith.constant 0 : index
    %c0_25 = arith.constant 0 : index
    %c0_26 = arith.constant 0 : index
    %33 = vector.load %arg10[%c0_24, %c0_25, %c0_26] : memref<10x18x8xf32, #tpu.memory_space<vmem>>, vector<8x16x8xf32>
    %34 = vector.shape_cast %33 : vector<8x16x8xf32> to vector<128x8xf32>
    %c0_27 = arith.constant 0 : index
    %c0_28 = arith.constant 0 : index
    %c0_29 = arith.constant 0 : index
    %c0_30 = arith.constant 0 : index
    %35 = vector.load %arg7[%c0_27, %c0_28, %c0_29, %c0_30] : memref<3x3x8x8xf32, #tpu.memory_space<vmem>>, vector<1x1x8x8xf32>
    %36 = vector.shape_cast %35 : vector<1x1x8x8xf32> to vector<8x8xf32>
    %cst_31 = arith.constant dense<0.000000e+00> : vector<128x8xf32>
    %37 = tpu.matmul %34, %36, %cst_31 {dimension_numbers = #tpu.dot_dimension_numbers<[1], [0], [0], [1], [0, 0, 1, 1], [], []>} : vector<128x8xf32>, vector<8x8xf32>, vector<128x8xf32> -> vector<128x8xf32>
    %c0_32 = arith.constant 0 : index
    %c1_33 = arith.constant 1 : index
    %c0_34 = arith.constant 0 : index
    %38 = vector.load %arg10[%c0_32, %c1_33, %c0_34] : memref<10x18x8xf32, #tpu.memory_space<vmem>>, vector<8x16x8xf32>
    %39 = vector.shape_cast %38 : vector<8x16x8xf32> to vector<128x8xf32>
    %c0_35 = arith.constant 0 : index
    %c1_36 = arith.constant 1 : index
    %c0_37 = arith.constant 0 : index
    %c0_38 = arith.constant 0 : index
    %40 = vector.load %arg7[%c0_35, %c1_36, %c0_37, %c0_38] : memref<3x3x8x8xf32, #tpu.memory_space<vmem>>, vector<1x1x8x8xf32>
    %41 = vector.shape_cast %40 : vector<1x1x8x8xf32> to vector<8x8xf32>
    %cst_39 = arith.constant dense<0.000000e+00> : vector<128x8xf32>
    %42 = tpu.matmul %39, %41, %cst_39 {dimension_numbers = #tpu.dot_dimension_numbers<[1], [0], [0], [1], [0, 0, 1, 1], [], []>} : vector<128x8xf32>, vector<8x8xf32>, vector<128x8xf32> -> vector<128x8xf32>
    %43 = arith.addf %37, %42 : vector<128x8xf32>
    %c0_40 = arith.constant 0 : index
    %c2 = arith.constant 2 : index
    %c0_41 = arith.constant 0 : index
    %44 = vector.load %arg10[%c0_40, %c2, %c0_41] : memref<10x18x8xf32, #tpu.memory_space<vmem>>, vector<8x16x8xf32>
    %45 = vector.shape_cast %44 : vector<8x16x8xf32> to vector<128x8xf32>
    %c0_42 = arith.constant 0 : index
    %c2_43 = arith.constant 2 : index
    %c0_44 = arith.constant 0 : index
    %c0_45 = arith.constant 0 : index
    %46 = vector.load %arg7[%c0_42, %c2_43, %c0_44, %c0_45] : memref<3x3x8x8xf32, #tpu.memory_space<vmem>>, vector<1x1x8x8xf32>
    %47 = vector.shape_cast %46 : vector<1x1x8x8xf32> to vector<8x8xf32>
    %cst_46 = arith.constant dense<0.000000e+00> : vector<128x8xf32>
    %48 = tpu.matmul %45, %47, %cst_46 {dimension_numbers = #tpu.dot_dimension_numbers<[1], [0], [0], [1], [0, 0, 1, 1], [], []>} : vector<128x8xf32>, vector<8x8xf32>, vector<128x8xf32> -> vector<128x8xf32>
    %49 = arith.addf %43, %48 : vector<128x8xf32>
    %c1_47 = arith.constant 1 : index
    %c0_48 = arith.constant 0 : index
    %c0_49 = arith.constant 0 : index
    %50 = vector.load %arg10[%c1_47, %c0_48, %c0_49] : memref<10x18x8xf32, #tpu.memory_space<vmem>>, vector<8x16x8xf32>
    %51 = vector.shape_cast %50 : vector<8x16x8xf32> to vector<128x8xf32>
    %c1_50 = arith.constant 1 : index
    %c0_51 = arith.constant 0 : index
    %c0_52 = arith.constant 0 : index
    %c0_53 = arith.constant 0 : index
    %52 = vector.load %arg7[%c1_50, %c0_51, %c0_52, %c0_53] : memref<3x3x8x8xf32, #tpu.memory_space<vmem>>, vector<1x1x8x8xf32>
    %53 = vector.shape_cast %52 : vector<1x1x8x8xf32> to vector<8x8xf32>
    %cst_54 = arith.constant dense<0.000000e+00> : vector<128x8xf32>
    %54 = tpu.matmul %51, %53, %cst_54 {dimension_numbers = #tpu.dot_dimension_numbers<[1], [0], [0], [1], [0, 0, 1, 1], [], []>} : vector<128x8xf32>, vector<8x8xf32>, vector<128x8xf32> -> vector<128x8xf32>
    %55 = arith.addf %49, %54 : vector<128x8xf32>
    %c1_55 = arith.constant 1 : index
    %c1_56 = arith.constant 1 : index
    %c0_57 = arith.constant 0 : index
    %56 = vector.load %arg10[%c1_55, %c1_56, %c0_57] : memref<10x18x8xf32, #tpu.memory_space<vmem>>, vector<8x16x8xf32>
    %57 = vector.shape_cast %56 : vector<8x16x8xf32> to vector<128x8xf32>
    %c1_58 = arith.constant 1 : index
    %c1_59 = arith.constant 1 : index
    %c0_60 = arith.constant 0 : index
    %c0_61 = arith.constant 0 : index
    %58 = vector.load %arg7[%c1_58, %c1_59, %c0_60, %c0_61] : memref<3x3x8x8xf32, #tpu.memory_space<vmem>>, vector<1x1x8x8xf32>
    %59 = vector.shape_cast %58 : vector<1x1x8x8xf32> to vector<8x8xf32>
    %cst_62 = arith.constant dense<0.000000e+00> : vector<128x8xf32>
    %60 = tpu.matmul %57, %59, %cst_62 {dimension_numbers = #tpu.dot_dimension_numbers<[1], [0], [0], [1], [0, 0, 1, 1], [], []>} : vector<128x8xf32>, vector<8x8xf32>, vector<128x8xf32> -> vector<128x8xf32>
    %61 = arith.addf %55, %60 : vector<128x8xf32>
    %c1_63 = arith.constant 1 : index
    %c2_64 = arith.constant 2 : index
    %c0_65 = arith.constant 0 : index
    %62 = vector.load %arg10[%c1_63, %c2_64, %c0_65] : memref<10x18x8xf32, #tpu.memory_space<vmem>>, vector<8x16x8xf32>
    %63 = vector.shape_cast %62 : vector<8x16x8xf32> to vector<128x8xf32>
    %c1_66 = arith.constant 1 : index
    %c2_67 = arith.constant 2 : index
    %c0_68 = arith.constant 0 : index
    %c0_69 = arith.constant 0 : index
    %64 = vector.load %arg7[%c1_66, %c2_67, %c0_68, %c0_69] : memref<3x3x8x8xf32, #tpu.memory_space<vmem>>, vector<1x1x8x8xf32>
    %65 = vector.shape_cast %64 : vector<1x1x8x8xf32> to vector<8x8xf32>
    %cst_70 = arith.constant dense<0.000000e+00> : vector<128x8xf32>
    %66 = tpu.matmul %63, %65, %cst_70 {dimension_numbers = #tpu.dot_dimension_numbers<[1], [0], [0], [1], [0, 0, 1, 1], [], []>} : vector<128x8xf32>, vector<8x8xf32>, vector<128x8xf32> -> vector<128x8xf32>
    %67 = arith.addf %61, %66 : vector<128x8xf32>
    %c2_71 = arith.constant 2 : index
    %c0_72 = arith.constant 0 : index
    %c0_73 = arith.constant 0 : index
    %68 = vector.load %arg10[%c2_71, %c0_72, %c0_73] : memref<10x18x8xf32, #tpu.memory_space<vmem>>, vector<8x16x8xf32>
    %69 = vector.shape_cast %68 : vector<8x16x8xf32> to vector<128x8xf32>
    %c2_74 = arith.constant 2 : index
    %c0_75 = arith.constant 0 : index
    %c0_76 = arith.constant 0 : index
    %c0_77 = arith.constant 0 : index
    %70 = vector.load %arg7[%c2_74, %c0_75, %c0_76, %c0_77] : memref<3x3x8x8xf32, #tpu.memory_space<vmem>>, vector<1x1x8x8xf32>
    %71 = vector.shape_cast %70 : vector<1x1x8x8xf32> to vector<8x8xf32>
    %cst_78 = arith.constant dense<0.000000e+00> : vector<128x8xf32>
    %72 = tpu.matmul %69, %71, %cst_78 {dimension_numbers = #tpu.dot_dimension_numbers<[1], [0], [0], [1], [0, 0, 1, 1], [], []>} : vector<128x8xf32>, vector<8x8xf32>, vector<128x8xf32> -> vector<128x8xf32>
    %73 = arith.addf %67, %72 : vector<128x8xf32>
    %c2_79 = arith.constant 2 : index
    %c1_80 = arith.constant 1 : index
    %c0_81 = arith.constant 0 : index
    %74 = vector.load %arg10[%c2_79, %c1_80, %c0_81] : memref<10x18x8xf32, #tpu.memory_space<vmem>>, vector<8x16x8xf32>
    %75 = vector.shape_cast %74 : vector<8x16x8xf32> to vector<128x8xf32>
    %c2_82 = arith.constant 2 : index
    %c1_83 = arith.constant 1 : index
    %c0_84 = arith.constant 0 : index
    %c0_85 = arith.constant 0 : index
    %76 = vector.load %arg7[%c2_82, %c1_83, %c0_84, %c0_85] : memref<3x3x8x8xf32, #tpu.memory_space<vmem>>, vector<1x1x8x8xf32>
    %77 = vector.shape_cast %76 : vector<1x1x8x8xf32> to vector<8x8xf32>
    %cst_86 = arith.constant dense<0.000000e+00> : vector<128x8xf32>
    %78 = tpu.matmul %75, %77, %cst_86 {dimension_numbers = #tpu.dot_dimension_numbers<[1], [0], [0], [1], [0, 0, 1, 1], [], []>} : vector<128x8xf32>, vector<8x8xf32>, vector<128x8xf32> -> vector<128x8xf32>
    %79 = arith.addf %73, %78 : vector<128x8xf32>
    %c2_87 = arith.constant 2 : index
    %c2_88 = arith.constant 2 : index
    %c0_89 = arith.constant 0 : index
    %80 = vector.load %arg10[%c2_87, %c2_88, %c0_89] : memref<10x18x8xf32, #tpu.memory_space<vmem>>, vector<8x16x8xf32>
    %81 = vector.shape_cast %80 : vector<8x16x8xf32> to vector<128x8xf32>
    %c2_90 = arith.constant 2 : index
    %c2_91 = arith.constant 2 : index
    %c0_92 = arith.constant 0 : index
    %c0_93 = arith.constant 0 : index
    %82 = vector.load %arg7[%c2_90, %c2_91, %c0_92, %c0_93] : memref<3x3x8x8xf32, #tpu.memory_space<vmem>>, vector<1x1x8x8xf32>
    %83 = vector.shape_cast %82 : vector<1x1x8x8xf32> to vector<8x8xf32>
    %cst_94 = arith.constant dense<0.000000e+00> : vector<128x8xf32>
    %84 = tpu.matmul %81, %83, %cst_94 {dimension_numbers = #tpu.dot_dimension_numbers<[1], [0], [0], [1], [0, 0, 1, 1], [], []>} : vector<128x8xf32>, vector<8x8xf32>, vector<128x8xf32> -> vector<128x8xf32>
    %85 = arith.addf %79, %84 : vector<128x8xf32>
    %c0_95 = arith.constant 0 : index
    %c0_96 = arith.constant 0 : index
    %86 = vector.load %arg8[%c0_95, %c0_96] : memref<1x8xf32, #tpu.memory_space<vmem>>, vector<1x8xf32>
    %87 = vector.broadcast %86 : vector<1x8xf32> to vector<128x8xf32>
    %88 = arith.addf %85, %87 : vector<128x8xf32>
    %cst_97 = arith.constant 0.000000e+00 : f32
    %89 = vector.broadcast %cst_97 : f32 to vector<128x8xf32>
    %90 = arith.subf %89, %88 : vector<128x8xf32>
    %91 = math.exp %90 : vector<128x8xf32>
    %cst_98 = arith.constant 1.000000e+00 : f32
    %92 = vector.broadcast %cst_98 : f32 to vector<128x8xf32>
    %93 = arith.addf %92, %91 : vector<128x8xf32>
    %cst_99 = arith.constant 1.000000e+00 : f32
    %94 = vector.broadcast %cst_99 : f32 to vector<128x8xf32>
    %95 = arith.divf %94, %93 : vector<128x8xf32>
    %96 = arith.mulf %88, %95 : vector<128x8xf32>
    %c0_100 = arith.constant 0 : index
    %c0_101 = arith.constant 0 : index
    %c0_102 = arith.constant 0 : index
    %c0_103 = arith.constant 0 : index
    %97 = vector.load %arg2[%c0_100, %c0_101, %c0_102, %c0_103] : memref<1x8x16x8xf32, #tpu.memory_space<vmem>>, vector<1x8x16x8xf32>
    %98 = vector.shape_cast %97 : vector<1x8x16x8xf32> to vector<8x16x8xf32>
    %99 = vector.shape_cast %98 : vector<8x16x8xf32> to vector<128x8xf32>
    %100 = arith.addf %96, %99 : vector<128x8xf32>
    %101 = vector.shape_cast %100 : vector<128x8xf32> to vector<8x16x8xf32>
    %c0_104 = arith.constant 0 : index
    %c0_105 = arith.constant 0 : index
    %c0_106 = arith.constant 0 : index
    %c0_107 = arith.constant 0 : index
    %102 = vector.load %arg9[%c0_104, %c0_105, %c0_106, %c0_107] : memref<1x8x16x8xf32, #tpu.memory_space<vmem>>, vector<1x8x16x8xf32>
    %103 = vector.shape_cast %102 : vector<1x8x16x8xf32> to vector<8x16x8xf32>
    %104 = vector.shape_cast %101 : vector<8x16x8xf32> to vector<1x8x16x8xf32>
    tpu.vector_store %arg9[%c0_104, %c0_105, %c0_106, %c0_107], %104 {strides = array<i32>} : memref<1x8x16x8xf32, #tpu.memory_space<vmem>>, vector<1x8x16x8xf32>,
    return
  }
  func.func @transform_0(%arg0: i32, %arg1: i32) -> (i32, i32, i32, i32) {
    %c0_i32 = arith.constant 0 : i32
    %c0_i32_0 = arith.constant 0 : i32
    %c0_i32_1 = arith.constant 0 : i32
    return %arg0, %arg1, %c0_i32, %c0_i32_0 : i32, i32, i32, i32
  }
  func.func @transform_1(%arg0: i32, %arg1: i32) -> (i32, i32, i32, i32) {
    %c8_i32 = arith.constant 8 : i32
    %0 = arith.muli %arg1, %c8_i32 : i32
    %c1_i32 = arith.constant 1 : i32
    %1 = arith.subi %0, %c1_i32 : i32
    %c0_i32 = arith.constant 0 : i32
    %2 = arith.maxsi %1, %c0_i32 : i32
    %c0_i32_0 = arith.constant 0 : i32
    %c0_i32_1 = arith.constant 0 : i32
    %c0_i32_2 = arith.constant 0 : i32
    return %arg0, %2, %c0_i32_0, %c0_i32_1 : i32, i32, i32, i32
  }
  func.func @transform_2(%arg0: i32, %arg1: i32) -> (i32, i32, i32, i32) {
    %c1_i32 = arith.constant 1 : i32
    %0 = arith.addi %arg1, %c1_i32 : i32
    %c8_i32 = arith.constant 8 : i32
    %1 = arith.muli %0, %c8_i32 : i32
    %c15_i32 = arith.constant 15 : i32
    %2 = arith.minsi %1, %c15_i32 : i32
    %c0_i32 = arith.constant 0 : i32
    %c0_i32_0 = arith.constant 0 : i32
    %c0_i32_1 = arith.constant 0 : i32
    return %arg0, %2, %c0_i32, %c0_i32_0 : i32, i32, i32, i32
  }
  func.func @transform_3(%arg0: i32, %arg1: i32) -> (i32, i32) {
    %c0_i32 = arith.constant 0 : i32
    %c0_i32_0 = arith.constant 0 : i32
    %c0_i32_1 = arith.constant 0 : i32
    return %c0_i32, %c0_i32_0 : i32, i32
  }
  func.func @transform_4(%arg0: i32, %arg1: i32) -> (i32, i32) {
    %c0_i32 = arith.constant 0 : i32
    %c0_i32_0 = arith.constant 0 : i32
    %c0_i32_1 = arith.constant 0 : i32
    return %c0_i32, %c0_i32_0 : i32, i32
  }
  func.func @transform_5(%arg0: i32, %arg1: i32) -> (i32, i32, i32, i32) {
    %c0_i32 = arith.constant 0 : i32
    %c0_i32_0 = arith.constant 0 : i32
    %c0_i32_1 = arith.constant 0 : i32
    %c0_i32_2 = arith.constant 0 : i32
    %c0_i32_3 = arith.constant 0 : i32
    return %c0_i32, %c0_i32_0, %c0_i32_1, %c0_i32_2 : i32, i32, i32, i32
  }
  func.func @transform_6(%arg0: i32, %arg1: i32) -> (i32, i32) {
    %c0_i32 = arith.constant 0 : i32
    %c0_i32_0 = arith.constant 0 : i32
    %c0_i32_1 = arith.constant 0 : i32
    return %c0_i32, %c0_i32_0 : i32, i32
  }
  func.func @transform_7(%arg0: i32, %arg1: i32) -> (i32, i32, i32, i32) {
    %c0_i32 = arith.constant 0 : i32
    %c0_i32_0 = arith.constant 0 : i32
    %c0_i32_1 = arith.constant 0 : i32
    return %arg0, %arg1, %c0_i32, %c0_i32_0 : i32, i32, i32, i32
  }
}

</mosaic_0001>

<llo_original>
// kernel: tpu_custom_call.1
$region0: #{tpu_custom_call.1}
  #allocation0 [shape = 'u32[]', space=smem, size = 0x4, offset = 0x4, fixed_abs, tag = 'smem constant byte address 0x4 - core index']
  #allocation1 [shape = 'u32[144,128]{1,0:T(1,128)}', space=vmem, size = 0x12000, scoped, tag = 'internal scratch']
  #allocation2 [shape = 'f32[10,18,8]{2,1,0:T(8,128)}', space=vmem, size = 0x1e000, scoped, tag = 'scratch operand']
  %s0 = inlined_call_operand.vmem [shape: f32[2,16,16,8], index: 0, kind: input, shape index: {}]
  %s1 = inlined_call_operand.vmem [shape: f32[2,16,16,8], index: 1, kind: input, shape index: {}]
  %s2 = inlined_call_operand.vmem [shape: f32[2,16,16,8], index: 2, kind: input, shape index: {}]
  %s3 = inlined_call_operand.vmem [shape: f32[8,8], index: 3, kind: input, shape index: {}]
  %s4 = inlined_call_operand.vmem [shape: f32[1,8], index: 4, kind: input, shape index: {}]
  %s5 = inlined_call_operand.vmem [shape: f32[3,3,8,8], index: 5, kind: input, shape index: {}]
  %s6 = inlined_call_operand.vmem [shape: f32[1,8], index: 6, kind: input, shape index: {}]
  %s7 = inlined_call_operand.vmem [shape: f32[2,16,16,8], index: 7, kind: output, shape index: {}]
  %s8 = sld [smem:[#allocation0]]
  $region77: #{tpu_custom_call.1} parent=0
    _
  %s10 = ssub.s32 1, %s8
  %s11 = scalar_select 0, %s10, %s8
  loop: start=0, step=1, limit=6
  $region2: #{tpu_custom_call.1} parent=0 // loop_pre_header
    _
  $region3: #{tpu_custom_call.1} parent=0 // loop_header
    %s13 = sphi 0, %s17
    %p14 = scmp.ge.s32.totalorder %s13, 6
    %s20 = sphi 0, %s32
    %s21 = sphi 0, %s28
    %s22 = sphi 0, %s20
    %s23 = sphi 0, %s21
    %s24 = sphi 0, %s22
    %s25 = sphi 0, %s23
    %s37 = sphi 0, %s39
    %s40 = sphi 0, %s37
    %s41 = sphi 0, %s40
    %s57 = sphi 0, %s41
    %s73 = sphi 0, %s75
    %s76 = sphi 0, %s73
    %s77 = sphi 0, %s76
    %s93 = sphi 0, %s77
    %s109 = sphi 0, %s111
    %s112 = sphi 0, %s109
    %s113 = sphi 0, %s112
    %s129 = sphi 0, %s113
    %s133 = sphi 0, %s133
    %s135 = sphi 0, %s133
    %s136 = sphi 0, %s135
    %s150 = sphi 0, %s136
    %s154 = sphi 0, %s154
    %s156 = sphi 0, %s154
    %s157 = sphi 0, %s156
    %s171 = sphi 0, %s157
    %s175 = sphi 0, %s175
    %s177 = sphi 0, %s175
    %s178 = sphi 0, %s177
    %s192 = sphi 0, %s178
    %s196 = sphi 0, %s196
    %s198 = sphi 0, %s196
    %s199 = sphi 0, %s198
    %s213 = sphi 0, %s199
    %s221 = sphi 0, %s223
    %s224 = sphi 0, %s221
    %s225 = sphi 0, %s224
    %s241 = sphi 0, %s225
  $region4: #{tpu_custom_call.1} parent=0 // loop_header_branch
    %16 = sbr.rel (%p14) target = $region8
  $region5: #{tpu_custom_call.1} parent=0 // loop_body
    %s18 = ssub.s32 %s13, 1
    %s19 = ssub.s32 %s13, 2
    %s26 = sadd.s32 1, %s21
    %p27 = scmp.ge.s32.totalorder %s26, 2
    %s28 = scalar_select %p27, 0, %s26
    %s29 = sadd.s32 1, %s20
    %s30 = scalar_select %p27, %s29, %s20
    %p31 = scmp.ge.s32.totalorder %s30, 2
    %s32 = scalar_select %p31, 0, %s30
    %s33 = ssub.s32 %s20, %s32
    %s34 = ssub.s32 %s21, %s28
    %s35 = sor.u32 %s33, %s34
    %p36 = scmp.eq.s32.totalorder %s35, 0
    %s38 = sadd.s32 %s37, 1
    %s39 = scalar_select %p36, %s37, %s38
    %p42 = pneg %p36
    %p43 = scmp.eq.s32.totalorder %s13, 3
    %p44 = por %p42, %p43
    %p45 = scmp.ne.s32.totalorder %s37, %s40
    %p46 = scmp.eq.s32.totalorder %s13, 0
    %p47 = por %p45, %p46
    %p48 = scmp.ne.s32.totalorder %s37, %s40
    %p49 = scmp.eq.s32.totalorder %s18, 3
    %p50 = por %p48, %p49
    %p51 = scmp.ne.s32.totalorder %s40, %s41
    %p52 = scmp.eq.s32.totalorder %s18, 0
    %p53 = por %p51, %p52
    %p54 = scmp.ne.s32.totalorder %s40, %s41
    %p55 = scmp.eq.s32.totalorder %s19, 3
    %p56 = por %p54, %p55
    %p58 = scmp.ne.s32.totalorder %s41, %s57
    %p59 = scmp.eq.s32.totalorder %s19, 0
    %p60 = por %p58, %p59
    %s61 = smul.u32 %s21, 8
    %s62 = ssub.s32 %s61, 1
    %p63 = scmp.gt.s32.totalorder %s62, 0
    %s64 = scalar_select %p63, %s62, 0
    %s65 = smul.u32 %s28, 8
    %s66 = ssub.s32 %s65, 1
    %p67 = scmp.gt.s32.totalorder %s66, 0
    %s68 = scalar_select %p67, %s66, 0
    %s69 = ssub.s32 %s20, %s32
    %s70 = ssub.s32 %s64, %s68
    %s71 = sor.u32 %s69, %s70
    %p72 = scmp.eq.s32.totalorder %s71, 0
    %s74 = sadd.s32 %s73, 1
    %s75 = scalar_select %p72, %s73, %s74
    %p78 = pneg %p72
    %p79 = scmp.eq.s32.totalorder %s13, 3
    %p80 = por %p78, %p79
    %p81 = scmp.ne.s32.totalorder %s73, %s76
    %p82 = scmp.eq.s32.totalorder %s13, 0
    %p83 = por %p81, %p82
    %p84 = scmp.ne.s32.totalorder %s73, %s76
    %p85 = scmp.eq.s32.totalorder %s18, 3
    %p86 = por %p84, %p85
    %p87 = scmp.ne.s32.totalorder %s76, %s77
    %p88 = scmp.eq.s32.totalorder %s18, 0
    %p89 = por %p87, %p88
    %p90 = scmp.ne.s32.totalorder %s76, %s77
    %p91 = scmp.eq.s32.totalorder %s19, 3
    %p92 = por %p90, %p91
    %p94 = scmp.ne.s32.totalorder %s77, %s93
    %p95 = scmp.eq.s32.totalorder %s19, 0
    %p96 = por %p94, %p95
    %s97 = sadd.s32 %s21, 1
    %s98 = smul.u32 %s97, 8
    %p99 = scmp.lt.s32.totalorder %s98, 15
    %s100 = scalar_select %p99, %s98, 15
    %s101 = sadd.s32 %s28, 1
    %s102 = smul.u32 %s101, 8
    %p103 = scmp.lt.s32.totalorder %s102, 15
    %s104 = scalar_select %p103, %s102, 15
    %s105 = ssub.s32 %s20, %s32
    %s106 = ssub.s32 %s100, %s104
    %s107 = sor.u32 %s105, %s106
    %p108 = scmp.eq.s32.totalorder %s107, 0
    %s110 = sadd.s32 %s109, 1
    %s111 = scalar_select %p108, %s109, %s110
    %p114 = pneg %p108
    %p115 = scmp.eq.s32.totalorder %s13, 3
    %p116 = por %p114, %p115
    %p117 = scmp.ne.s32.totalorder %s109, %s112
    %p118 = scmp.eq.s32.totalorder %s13, 0
    %p119 = por %p117, %p118
    %p120 = scmp.ne.s32.totalorder %s109, %s112
    %p121 = scmp.eq.s32.totalorder %s18, 3
    %p122 = por %p120, %p121
    %p123 = scmp.ne.s32.totalorder %s112, %s113
    %p124 = scmp.eq.s32.totalorder %s18, 0
    %p125 = por %p123, %p124
    %p126 = scmp.ne.s32.totalorder %s112, %s113
    %p127 = scmp.eq.s32.totalorder %s19, 3
    %p128 = por %p126, %p127
    %p130 = scmp.ne.s32.totalorder %s113, %s129
    %p131 = scmp.eq.s32.totalorder %s19, 0
    %p132 = por %p130, %p131
    %s134 = sadd.s32 %s133, 1
    %p137 = scmp.eq.s32.totalorder %s13, 3
    %p138 = scmp.ne.s32.totalorder %s133, %s135
    %p139 = scmp.eq.s32.totalorder %s13, 0
    %p140 = por %p138, %p139
    %p141 = scmp.ne.s32.totalorder %s133, %s135
    %p142 = scmp.eq.s32.totalorder %s18, 3
    %p143 = por %p141, %p142
    %p144 = scmp.ne.s32.totalorder %s135, %s136
    %p145 = scmp.eq.s32.totalorder %s18, 0
    %p146 = por %p144, %p145
    %p147 = scmp.ne.s32.totalorder %s135, %s136
    %p148 = scmp.eq.s32.totalorder %s19, 3
    %p149 = por %p147, %p148
    %p151 = scmp.ne.s32.totalorder %s136, %s150
    %p152 = scmp.eq.s32.totalorder %s19, 0
    %p153 = por %p151, %p152
    %s155 = sadd.s32 %s154, 1
    %p158 = scmp.eq.s32.totalorder %s13, 3
    %p159 = scmp.ne.s32.totalorder %s154, %s156
    %p160 = scmp.eq.s32.totalorder %s13, 0
    %p161 = por %p159, %p160
    %p162 = scmp.ne.s32.totalorder %s154, %s156
    %p163 = scmp.eq.s32.totalorder %s18, 3
    %p164 = por %p162, %p163
    %p165 = scmp.ne.s32.totalorder %s156, %s157
    %p166 = scmp.eq.s32.totalorder %s18, 0
    %p167 = por %p165, %p166
    %p168 = scmp.ne.s32.totalorder %s156, %s157
    %p169 = scmp.eq.s32.totalorder %s19, 3
    %p170 = por %p168, %p169
    %p172 = scmp.ne.s32.totalorder %s157, %s171
    %p173 = scmp.eq.s32.totalorder %s19, 0
    %p174 = por %p172, %p173
    %s176 = sadd.s32 %s175, 1
    %p179 = scmp.eq.s32.totalorder %s13, 3
    %p180 = scmp.ne.s32.totalorder %s175, %s177
    %p181 = scmp.eq.s32.totalorder %s13, 0
    %p182 = por %p180, %p181
    %p183 = scmp.ne.s32.totalorder %s175, %s177
    %p184 = scmp.eq.s32.totalorder %s18, 3
    %p185 = por %p183, %p184
    %p186 = scmp.ne.s32.totalorder %s177, %s178
    %p187 = scmp.eq.s32.totalorder %s18, 0
    %p188 = por %p186, %p187
    %p189 = scmp.ne.s32.totalorder %s177, %s178
    %p190 = scmp.eq.s32.totalorder %s19, 3
    %p191 = por %p189, %p190
    %p193 = scmp.ne.s32.totalorder %s178, %s192
    %p194 = scmp.eq.s32.totalorder %s19, 0
    %p195 = por %p193, %p194
    %s197 = sadd.s32 %s196, 1
    %p200 = scmp.eq.s32.totalorder %s13, 3
    %p201 = scmp.ne.s32.totalorder %s196, %s198
    %p202 = scmp.eq.s32.totalorder %s13, 0
    %p203 = por %p201, %p202
    %p204 = scmp.ne.s32.totalorder %s196, %s198
    %p205 = scmp.eq.s32.totalorder %s18, 3
    %p206 = por %p204, %p205
    %p207 = scmp.ne.s32.totalorder %s198, %s199
    %p208 = scmp.eq.s32.totalorder %s18, 0
    %p209 = por %p207, %p208
    %p210 = scmp.ne.s32.totalorder %s198, %s199
    %p211 = scmp.eq.s32.totalorder %s19, 3
    %p212 = por %p210, %p211
    %p214 = scmp.ne.s32.totalorder %s199, %s213
    %p215 = scmp.eq.s32.totalorder %s19, 0
    %p216 = por %p214, %p215
    %s217 = ssub.s32 %s20, %s32
    %s218 = ssub.s32 %s21, %s28
    %s219 = sor.u32 %s217, %s218
    %p220 = scmp.eq.s32.totalorder %s219, 0
    %s222 = sadd.s32 %s221, 1
    %s223 = scalar_select %p220, %s221, %s222
    %p226 = pneg %p220
    %p227 = scmp.eq.s32.totalorder %s13, 3
    %p228 = por %p226, %p227
    %p229 = scmp.ne.s32.totalorder %s221, %s224
    %p230 = scmp.eq.s32.totalorder %s13, 0
    %p231 = por %p229, %p230
    %p232 = scmp.ne.s32.totalorder %s221, %s224
    %p233 = scmp.eq.s32.totalorder %s18, 3
    %p234 = por %p232, %p233
    %p235 = scmp.ne.s32.totalorder %s224, %s225
    %p236 = scmp.eq.s32.totalorder %s18, 0
    %p237 = por %p235, %p236
    %p238 = scmp.ne.s32.totalorder %s224, %s225
    %p239 = scmp.eq.s32.totalorder %s19, 3
    %p240 = por %p238, %p239
    %p242 = scmp.ne.s32.totalorder %s225, %s241
    %p243 = scmp.eq.s32.totalorder %s19, 0
    %p244 = por %p242, %p243
    %p245 = scmp.le.s32.totalorder 1, %s13
    %p246 = scmp.lt.s32.totalorder %s13, 5
    %p247 = pnand %p245, %p246
    %p248 = pneg %p247
    // Predicated region
    $region9: #{tpu_custom_call.1} parent=5 // pred_check
      _
    $region10: #{tpu_custom_call.1} parent=5 // pred_check_branch
      %250 = sbr.rel (%p247) target = $region12
    $region11: #{tpu_custom_call.1} parent=5 // pred_region
      %s251 = ssub.s32 %s13, 1
      // Predicated region
      $region13: #{tpu_custom_call.1} parent=11 // pred_check
        %p252 = pneg %p146
      $region14: #{tpu_custom_call.1} parent=11 // pred_check_branch
        %254 = sbr.rel (%p252) target = $region16
      $region15: #{tpu_custom_call.1} parent=11 // pred_region
        _
      $region16: #{tpu_custom_call.1} parent=11 // pred_fallthru
        _
      // Predicated region
      $region17: #{tpu_custom_call.1} parent=11 // pred_check
        %p255 = pneg %p167
      $region18: #{tpu_custom_call.1} parent=11 // pred_check_branch
        %257 = sbr.rel (%p255) target = $region20
      $region19: #{tpu_custom_call.1} parent=11 // pred_region
        _
      $region20: #{tpu_custom_call.1} parent=11 // pred_fallthru
        _
      // Predicated region
      $region21: #{tpu_custom_call.1} parent=11 // pred_check
        %p258 = pneg %p188
      $region22: #{tpu_custom_call.1} parent=11 // pred_check_branch
        %260 = sbr.rel (%p258) target = $region24
      $region23: #{tpu_custom_call.1} parent=11 // pred_region
        _
      $region24: #{tpu_custom_call.1} parent=11 // pred_fallthru
        _
      // Predicated region
      $region25: #{tpu_custom_call.1} parent=11 // pred_check
        %p261 = pneg %p209
      $region26: #{tpu_custom_call.1} parent=11 // pred_check_branch
        %263 = sbr.rel (%p261) target = $region28
      $region27: #{tpu_custom_call.1} parent=11 // pred_region
        _
      $region28: #{tpu_custom_call.1} parent=11 // pred_fallthru
        _
    $region12: #{tpu_custom_call.1} parent=5 // pred_fallthru
      _
    %p264 = scmp.lt.s32.totalorder %s13, 4
    // Predicated region
    $region29: #{tpu_custom_call.1} parent=5 // pred_check
      %p265 = pneg %p264
    $region30: #{tpu_custom_call.1} parent=5 // pred_check_branch
      %267 = sbr.rel (%p265) target = $region32
    $region31: #{tpu_custom_call.1} parent=5 // pred_region
      // Predicated region
      $region33: #{tpu_custom_call.1} parent=31 // pred_check
        %p268 = pneg %p47
      $region34: #{tpu_custom_call.1} parent=31 // pred_check_branch
        %270 = sbr.rel (%p268) target = $region36
      $region35: #{tpu_custom_call.1} parent=31 // pred_region
        %s271 = smul.u32 8, %s21
        %p272 = scmp.lt.s32.totalorder %s20, 1
        %s273 = scalar_select %p272, %s20, 1
        %p274 = scmp.lt.s32.totalorder %s271, 15
        %s275 = scalar_select %p274, %s271, 15
        %s276 = smul.addr %s275, 2
        %s277 = smul.addr %s273, 32
        %s278 = sadd.s32 %s276, %s277
        %s279 = smul.addr %s278, 8
        %s280 = scalar_lea.vmem %s0, %s279
        %s281 = smul.u32 8, %s21
      $region36: #{tpu_custom_call.1} parent=31 // pred_fallthru
        _
      // Predicated region
      $region37: #{tpu_custom_call.1} parent=31 // pred_check
        %p282 = pneg %p83
      $region38: #{tpu_custom_call.1} parent=31 // pred_check_branch
        %284 = sbr.rel (%p282) target = $region40
      $region39: #{tpu_custom_call.1} parent=31 // pred_region
        %s285 = smul.u32 %s21, 8
        %s286 = ssub.s32 %s285, 1
        %p287 = scmp.gt.s32.totalorder %s286, 0
        %s288 = scalar_select %p287, %s286, 0
        %p289 = scmp.lt.s32.totalorder %s20, 1
        %s290 = scalar_select %p289, %s20, 1
        %p291 = scmp.lt.s32.totalorder %s288, 15
        %s292 = scalar_select %p291, %s288, 15
        %s293 = smul.addr %s292, 2
        %s294 = smul.addr %s290, 32
        %s295 = sadd.s32 %s293, %s294
        %s296 = smul.addr %s295, 8
        %s297 = scalar_lea.vmem %s1, %s296
        %s298 = smul.u32 %s21, 8
        %s299 = ssub.s32 %s298, 1
        %p300 = scmp.gt.s32.totalorder %s299, 0
        %s301 = scalar_select %p300, %s299, 0
      $region40: #{tpu_custom_call.1} parent=31 // pred_fallthru
        _
      // Predicated region
      $region41: #{tpu_custom_call.1} parent=31 // pred_check
        %p302 = pneg %p119
      $region42: #{tpu_custom_call.1} parent=31 // pred_check_branch
        %304 = sbr.rel (%p302) target = $region44
      $region43: #{tpu_custom_call.1} parent=31 // pred_region
        %s305 = sadd.s32 %s21, 1
        %s306 = smul.u32 %s305, 8
        %p307 = scmp.lt.s32.totalorder %s306, 15
        %s308 = scalar_select %p307, %s306, 15
        %p309 = scmp.lt.s32.totalorder %s20, 1
        %s310 = scalar_select %p309, %s20, 1
        %p311 = scmp.lt.s32.totalorder %s308, 15
        %s312 = scalar_select %p311, %s308, 15
        %s313 = smul.addr %s312, 2
        %s314 = smul.addr %s310, 32
        %s315 = sadd.s32 %s313, %s314
        %s316 = smul.addr %s315, 8
        %s317 = scalar_lea.vmem %s2, %s316
        %s318 = sadd.s32 %s21, 1
        %s319 = smul.u32 %s318, 8
        %p320 = scmp.lt.s32.totalorder %s319, 15
        %s321 = scalar_select %p320, %s319, 15
      $region44: #{tpu_custom_call.1} parent=31 // pred_fallthru
        _
    $region32: #{tpu_custom_call.1} parent=5 // pred_fallthru
      _
    %p322 = scmp.le.s32.totalorder 1, %s13
    %p323 = scmp.lt.s32.totalorder %s13, 5
    %p324 = pnand %p322, %p323
    %p325 = pneg %p324
    // Predicated region
    $region45: #{tpu_custom_call.1} parent=5 // pred_check
      _
    $region46: #{tpu_custom_call.1} parent=5 // pred_check_branch
      %327 = sbr.rel (%p324) target = $region48
    $region47: #{tpu_custom_call.1} parent=5 // pred_region
      %s328 = ssub.s32 %s13, 1
      %s329 = smul.u32 8, %s23
      %p330 = scmp.lt.s32.totalorder %s22, 1
      %s331 = scalar_select %p330, %s22, 1
      %p332 = scmp.lt.s32.totalorder %s329, 15
      %s333 = scalar_select %p332, %s329, 15
      %s334 = smul.addr %s333, 2
      %s335 = smul.addr %s331, 32
      %s336 = sadd.s32 %s334, %s335
      %s337 = smul.addr %s336, 8
      %s338 = scalar_lea.vmem %s0, %s337
      %p339 = pneg %p53
      %p340 = pneg %p50
      %s341 = smul.u32 %s23, 8
      %s342 = ssub.s32 %s341, 1
      %p343 = scmp.gt.s32.totalorder %s342, 0
      %s344 = scalar_select %p343, %s342, 0
      %p345 = scmp.lt.s32.totalorder %s22, 1
      %s346 = scalar_select %p345, %s22, 1
      %p347 = scmp.lt.s32.totalorder %s344, 15
      %s348 = scalar_select %p347, %s344, 15
      %s349 = smul.addr %s348, 2
      %s350 = smul.addr %s346, 32
      %s351 = sadd.s32 %s349, %s350
      %s352 = smul.addr %s351, 8
      %s353 = scalar_lea.vmem %s1, %s352
      %p354 = pneg %p89
      %p355 = pneg %p86
      %s356 = sadd.s32 %s23, 1
      %s357 = smul.u32 %s356, 8
      %p358 = scmp.lt.s32.totalorder %s357, 15
      %s359 = scalar_select %p358, %s357, 15
      %p360 = scmp.lt.s32.totalorder %s22, 1
      %s361 = scalar_select %p360, %s22, 1
      %p362 = scmp.lt.s32.totalorder %s359, 15
      %s363 = scalar_select %p362, %s359, 15
      %s364 = smul.addr %s363, 2
      %s365 = smul.addr %s361, 32
      %s366 = sadd.s32 %s364, %s365
      %s367 = smul.addr %s366, 8
      %s368 = scalar_lea.vmem %s2, %s367
      %p369 = pneg %p125
      %p370 = pneg %p122
      %p371 = pneg %p146
      %p372 = pneg %p143
      %p373 = pneg %p167
      %p374 = pneg %p164
      %p375 = pneg %p188
      %p376 = pneg %p185
      %p377 = pneg %p209
      %p378 = pneg %p206
      %p379 = pneg %p237
      %p380 = pneg %p234
      %s381 = smul.u32 8, %s23
      %p382 = scmp.lt.s32.totalorder %s22, 1
      %s383 = scalar_select %p382, %s22, 1
      %p384 = scmp.lt.s32.totalorder %s381, 15
      %s385 = scalar_select %p384, %s381, 15
      %s386 = smul.addr %s385, 2
      %s387 = smul.addr %s383, 32
      %s388 = sadd.s32 %s386, %s387
      %s389 = smul.addr %s388, 8
      %s390 = scalar_lea.vmem %s7, %s389
      %s391 = smul.u32 8, %s23
      %p392 = scmp.lt.s32.totalorder %s22, 1
      %s393 = scalar_select %p392, %s22, 1
      %p394 = scmp.lt.s32.totalorder %s391, 15
      %s395 = scalar_select %p394, %s391, 15
      %s396 = smul.addr %s395, 2
      %s397 = smul.addr %s393, 32
      %s398 = sadd.s32 %s396, %s397
      %s399 = smul.addr %s398, 8
      %s400 = scalar_lea.vmem %s0, %s399
      %s401 = smul.u32 8, %s23
      %s402 = smul.u32 %s23, 8
      %s403 = ssub.s32 %s402, 1
      %p404 = scmp.gt.s32.totalorder %s403, 0
      %s405 = scalar_select %p404, %s403, 0
      %p406 = scmp.lt.s32.totalorder %s22, 1
      %s407 = scalar_select %p406, %s22, 1
      %p408 = scmp.lt.s32.totalorder %s405, 15
      %s409 = scalar_select %p408, %s405, 15
      %s410 = smul.addr %s409, 2
      %s411 = smul.addr %s407, 32
      %s412 = sadd.s32 %s410, %s411
      %s413 = smul.addr %s412, 8
      %s414 = scalar_lea.vmem %s1, %s413
      %s415 = smul.u32 %s23, 8
      %s416 = ssub.s32 %s415, 1
      %p417 = scmp.gt.s32.totalorder %s416, 0
      %s418 = scalar_select %p417, %s416, 0
      %s419 = sadd.s32 %s23, 1
      %s420 = smul.u32 %s419, 8
      %p421 = scmp.lt.s32.totalorder %s420, 15
      %s422 = scalar_select %p421, %s420, 15
      %p423 = scmp.lt.s32.totalorder %s22, 1
      %s424 = scalar_select %p423, %s22, 1
      %p425 = scmp.lt.s32.totalorder %s422, 15
      %s426 = scalar_select %p425, %s422, 15
      %s427 = smul.addr %s426, 2
      %s428 = smul.addr %s424, 32
      %s429 = sadd.s32 %s427, %s428
      %s430 = smul.addr %s429, 8
      %s431 = scalar_lea.vmem %s2, %s430
      %s432 = sadd.s32 %s23, 1
      %s433 = smul.u32 %s432, 8
      %p434 = scmp.lt.s32.totalorder %s433, 15
      %s435 = scalar_select %p434, %s433, 15
      %s436 = smul.u32 8, %s23
      %p437 = scmp.lt.s32.totalorder %s22, 1
      %s438 = scalar_select %p437, %s22, 1
      %p439 = scmp.lt.s32.totalorder %s436, 15
      %s440 = scalar_select %p439, %s436, 15
      %s441 = smul.addr %s440, 2
      %s442 = smul.addr %s438, 32
      %s443 = sadd.s32 %s441, %s442
      %s444 = smul.addr %s443, 8
      %s445 = scalar_lea.vmem %s7, %s444
      %s446 = smul.u32 8, %s23
      %v447 = vld [vmem:[%s3] sm:$0xff]
      %v448 = vld [vmem:[%s4] sm:$0x1]
      %vm449 = vcmask 57344
      %450 = vst.msk [vmem:[#allocation2] sm:$0x1] %vm449, 0.0
      %451 = vst.msk [vmem:[#allocation2 + $0x18] sm:$0x1] %vm449, 0.0
      %452 = vst.msk [vmem:[#allocation2 + $0x30] sm:$0x1] %vm449, 0.0
      %453 = vst.msk [vmem:[#allocation2 + $0x48] sm:$0x1] %vm449, 0.0
      %454 = vst.msk [vmem:[#allocation2 + $0x60] sm:$0x1] %vm449, 0.0
      %455 = vst.msk [vmem:[#allocation2 + $0x78] sm:$0x1] %vm449, 0.0
      %456 = vst.msk [vmem:[#allocation2 + $0x90] sm:$0x1] %vm449, 0.0
      %457 = vst.msk [vmem:[#allocation2 + $0xa8] sm:$0x1] %vm449, 0.0
      %458 = vst.msk [vmem:[#allocation2 + $0xc0] sm:$0x1] %vm449, 0.0
      %459 = vst.msk [vmem:[#allocation2 + $0xd8] sm:$0x1] %vm449, 0.0
      %460 = vst.msk [vmem:[#allocation2 + $0x11] sm:$0x1] %vm449, 0.0
      %461 = vst.msk [vmem:[#allocation2 + $0x29] sm:$0x1] %vm449, 0.0
      %462 = vst.msk [vmem:[#allocation2 + $0x41] sm:$0x1] %vm449, 0.0
      %463 = vst.msk [vmem:[#allocation2 + $0x59] sm:$0x1] %vm449, 0.0
      %464 = vst.msk [vmem:[#allocation2 + $0x71] sm:$0x1] %vm449, 0.0
      %465 = vst.msk [vmem:[#allocation2 + $0x89] sm:$0x1] %vm449, 0.0
      %466 = vst.msk [vmem:[#allocation2 + $0xa1] sm:$0x1] %vm449, 0.0
      %467 = vst.msk [vmem:[#allocation2 + $0xb9] sm:$0x1] %vm449, 0.0
      %468 = vst.msk [vmem:[#allocation2 + $0xd1] sm:$0x1] %vm449, 0.0
      %469 = vst.msk [vmem:[#allocation2 + $0xe9] sm:$0x1] %vm449, 0.0
      %v470 = vld [vmem:[%s400] sm:$0xff]
      %v471 = vld [vmem:[%s400 + $0x8] sm:$0xff]
      %v472 = vld [vmem:[%s400 + $0x10] sm:$0xff]
      %v473 = vld [vmem:[%s400 + $0x18] sm:$0xff]
      %v474 = vld [vmem:[%s400 + $0x20] sm:$0xff]
      %v475 = vld [vmem:[%s400 + $0x28] sm:$0xff]
      %v476 = vld [vmem:[%s400 + $0x30] sm:$0xff]
      %v477 = vld [vmem:[%s400 + $0x38] sm:$0xff]
      %v478 = vld [vmem:[%s400 + $0x40] sm:$0xff]
      %v479 = vld [vmem:[%s400 + $0x48] sm:$0xff]
      %v480 = vld [vmem:[%s400 + $0x50] sm:$0xff]
      %v481 = vld [vmem:[%s400 + $0x58] sm:$0xff]
      %v482 = vld [vmem:[%s400 + $0x60] sm:$0xff]
      %v483 = vld [vmem:[%s400 + $0x68] sm:$0xff]
      %v484 = vld [vmem:[%s400 + $0x70] sm:$0xff]
      %v485 = vld [vmem:[%s400 + $0x78] sm:$0xff]
      %v487 = vlaneseq
      %v488 = vshrl.u32 %v487, 7
      %v489 = vsub.s32 0, %v488
      %v490 = vrot.slane %v448, %v489
      %vm492 = vcmask 64512
      %v494 = vsel %vm492, %v470, 0
      %v497 = vsel %vm492, %v471, 0
      %v500 = vsel %vm492, %v472, 0
      %v503 = vsel %vm492, %v473, 0
      %v506 = vsel %vm492, %v474, 0
      %v509 = vsel %vm492, %v475, 0
      %v512 = vsel %vm492, %v476, 0
      %v515 = vsel %vm492, %v477, 0
      %v518 = vsel %vm492, %v478, 0
      %v521 = vsel %vm492, %v479, 0
      %v524 = vsel %vm492, %v480, 0
      %v527 = vsel %vm492, %v481, 0
      %v530 = vsel %vm492, %v482, 0
      %v533 = vsel %vm492, %v483, 0
      %v536 = vsel %vm492, %v484, 0
      %v539 = vsel %vm492, %v485, 0
      %541 = vmatprep.subr.mxu0 0.0
      %542 = vmatpush1.msra.mxu0 %v447
      %543 = vmatprep.subr.mxu0 0.0
      %544 = vmatpush1.msra.mxu0 0.0
      %545 = vmatprep.subr.mxu0 0.0
      %546 = vmatpush1.msra.mxu0 0.0
      %547 = vmatprep.subr.mxu0 0.0
      %548 = vmatpush1.msra.mxu0 0.0
      %549 = vmatprep.subr.mxu0 0.0
      %550 = vmatpush1.msra.mxu0 0.0
      %551 = vmatprep.subr.mxu0 0.0
      %552 = vmatpush1.msra.mxu0 0.0
      %553 = vmatprep.subr.mxu0 0.0
      %554 = vmatpush1.msra.mxu0 0.0
      %555 = vmatprep.subr.mxu0 0.0
      %556 = vmatpush1.msra.mxu0 0.0
      %557 = vmatprep.subr.mxu0 0.0
      %558 = vmatpush1.msra.mxu0 0.0
      %559 = vmatprep.subr.mxu0 0.0
      %560 = vmatpush1.msra.mxu0 0.0
      %561 = vmatprep.subr.mxu0 0.0
      %562 = vmatpush1.msra.mxu0 0.0
      %563 = vmatprep.subr.mxu0 0.0
      %564 = vmatpush1.msra.mxu0 0.0
      %565 = vmatprep.subr.mxu0 0.0
      %566 = vmatpush1.msra.mxu0 0.0
      %567 = vmatprep.subr.mxu0 0.0
      %568 = vmatpush1.msra.mxu0 0.0
      %569 = vmatprep.subr.mxu0 0.0
      %570 = vmatpush1.msra.mxu0 0.0
      %571 = vmatprep.subr.mxu0 0.0
      %572 = vmatpush1.msra.mxu0 0.0
      %573 = vmatprep.subr.mxu0 0.0
      %574 = vmatpush1.msra.mxu0 0.0
      %575 = vmatprep.subr.mxu0 0.0
      %576 = vmatpush1.msra.mxu0 0.0
      %577 = vmatprep.subr.mxu0 0.0
      %578 = vmatpush1.msra.mxu0 0.0
      %579 = vmatprep.subr.mxu0 0.0
      %580 = vmatpush1.msra.mxu0 0.0
      %581 = vmatprep.subr.mxu0 0.0
      %582 = vmatpush1.msra.mxu0 0.0
      %583 = vmatprep.subr.mxu0 0.0
      %584 = vmatpush1.msra.mxu0 0.0
      %585 = vmatprep.subr.mxu0 0.0
      %586 = vmatpush1.msra.mxu0 0.0
      %587 = vmatprep.subr.mxu0 0.0
      %588 = vmatpush1.msra.mxu0 0.0
      %589 = vmatprep.subr.mxu0 0.0
      %590 = vmatpush1.msra.mxu0 0.0
      %591 = vmatprep.subr.mxu0 0.0
      %592 = vmatpush1.msra.mxu0 0.0
      %593 = vmatprep.subr.mxu0 0.0
      %594 = vmatpush1.msra.mxu0 0.0
      %595 = vmatprep.subr.mxu0 0.0
      %596 = vmatpush1.msra.mxu0 0.0
      %597 = vmatprep.subr.mxu0 0.0
      %598 = vmatpush1.msra.mxu0 0.0
      %599 = vmatprep.subr.mxu0 0.0
      %600 = vmatpush1.msra.mxu0 0.0
      %601 = vmatprep.subr.mxu0 0.0
      %602 = vmatpush1.msra.mxu0 0.0
      %603 = vmatprep.subr.mxu0 0.0
      %604 = vmatpush1.msra.mxu0 0.0
      %605 = vmatprep.mubr.f32.mxu0 0.0
      %606 = vmatmul.mubr.f32.gmra.mrb[0].mxu0 %v494
      %v607 = vpop.f32.mrb[0].mxu0
      %v608 = vadd.f32 %v490, %v607
      %v609 = vpop.f32.mrb[0].mxu0
      %610 = vmatprep.mubr.f32.mxu0 0.0
      %611 = vmatmul.mubr.f32.gmra.mrb[0].mxu0 %v497
      %v612 = vpop.f32.mrb[0].mxu0
      %v613 = vadd.f32 %v490, %v612
      %v614 = vpop.f32.mrb[0].mxu0
      %615 = vmatprep.mubr.f32.mxu0 0.0
      %616 = vmatmul.mubr.f32.gmra.mrb[0].mxu0 %v500
      %v617 = vpop.f32.mrb[0].mxu0
      %v618 = vadd.f32 %v490, %v617
      %v619 = vpop.f32.mrb[0].mxu0
      %620 = vmatprep.mubr.f32.mxu0 0.0
      %621 = vmatmul.mubr.f32.gmra.mrb[0].mxu0 %v503
      %v622 = vpop.f32.mrb[0].mxu0
      %v623 = vadd.f32 %v490, %v622
      %v624 = vpop.f32.mrb[0].mxu0
      %625 = vmatprep.mubr.f32.mxu0 0.0
      %626 = vmatmul.mubr.f32.gmra.mrb[0].mxu0 %v506
      %v627 = vpop.f32.mrb[0].mxu0
      %v628 = vadd.f32 %v490, %v627
      %v629 = vpop.f32.mrb[0].mxu0
      %630 = vmatprep.mubr.f32.mxu0 0.0
      %631 = vmatmul.mubr.f32.gmra.mrb[0].mxu0 %v509
      %v632 = vpop.f32.mrb[0].mxu0
      %v633 = vadd.f32 %v490, %v632
      %v634 = vpop.f32.mrb[0].mxu0
      %635 = vmatprep.mubr.f32.mxu0 0.0
      %636 = vmatmul.mubr.f32.gmra.mrb[0].mxu0 %v512
      %v637 = vpop.f32.mrb[0].mxu0
      %v638 = vadd.f32 %v490, %v637
      %v639 = vpop.f32.mrb[0].mxu0
      %640 = vmatprep.mubr.f32.mxu0 0.0
      %641 = vmatmul.mubr.f32.gmra.mrb[0].mxu0 %v515
      %v642 = vpop.f32.mrb[0].mxu0
      %v643 = vadd.f32 %v490, %v642
      %v644 = vpop.f32.mrb[0].mxu0
      %645 = vmatprep.mubr.f32.mxu0 0.0
      %646 = vmatmul.mubr.f32.gmra.mrb[0].mxu0 %v518
      %v647 = vpop.f32.mrb[0].mxu0
      %v648 = vadd.f32 %v490, %v647
      %v649 = vpop.f32.mrb[0].mxu0
      %650 = vmatprep.mubr.f32.mxu0 0.0
      %651 = vmatmul.mubr.f32.gmra.mrb[0].mxu0 %v521
      %v652 = vpop.f32.mrb[0].mxu0
      %v653 = vadd.f32 %v490, %v652
      %v654 = vpop.f32.mrb[0].mxu0
      %655 = vmatprep.mubr.f32.mxu0 0.0
      %656 = vmatmul.mubr.f32.gmra.mrb[0].mxu0 %v524
      %v657 = vpop.f32.mrb[0].mxu0
      %v658 = vadd.f32 %v490, %v657
      %v659 = vpop.f32.mrb[0].mxu0
      %660 = vmatprep.mubr.f32.mxu0 0.0
      %661 = vmatmul.mubr.f32.gmra.mrb[0].mxu0 %v527
      %v662 = vpop.f32.mrb[0].mxu0
      %v663 = vadd.f32 %v490, %v662
      %v664 = vpop.f32.mrb[0].mxu0
      %665 = vmatprep.mubr.f32.mxu0 0.0
      %666 = vmatmul.mubr.f32.gmra.mrb[0].mxu0 %v530
      %v667 = vpop.f32.mrb[0].mxu0
      %v668 = vadd.f32 %v490, %v667
      %v669 = vpop.f32.mrb[0].mxu0
      %670 = vmatprep.mubr.f32.mxu0 0.0
      %671 = vmatmul.mubr.f32.gmra.mrb[0].mxu0 %v533
      %v672 = vpop.f32.mrb[0].mxu0
      %v673 = vadd.f32 %v490, %v672
      %v674 = vpop.f32.mrb[0].mxu0
      %675 = vmatprep.mubr.f32.mxu0 0.0
      %676 = vmatmul.mubr.f32.gmra.mrb[0].mxu0 %v536
      %v677 = vpop.f32.mrb[0].mxu0
      %v678 = vadd.f32 %v490, %v677
      %v679 = vpop.f32.mrb[0].mxu0
      %680 = vmatprep.mubr.f32.mxu0 0.0
      %681 = vmatmul.mubr.f32.gmra.mrb[0].mxu0 %v539
      %v682 = vpop.f32.mrb[0].mxu0
      %v683 = vadd.f32 %v490, %v682
      %v684 = vpop.f32.mrb[0].mxu0
      %685 = vdwg.mxu0
      %v686 = vsub.f32 0.0, %v608
      %v687 = vsub.f32 0.0, %v613
      %v688 = vsub.f32 0.0, %v618
      %v689 = vsub.f32 0.0, %v623
      %v690 = vsub.f32 0.0, %v628
      %v691 = vsub.f32 0.0, %v633
      %v692 = vsub.f32 0.0, %v638
      %v693 = vsub.f32 0.0, %v643
      %v694 = vsub.f32 0.0, %v648
      %v695 = vsub.f32 0.0, %v653
      %v696 = vsub.f32 0.0, %v658
      %v697 = vsub.f32 0.0, %v663
      %v698 = vsub.f32 0.0, %v668
      %v699 = vsub.f32 0.0, %v673
      %v700 = vsub.f32 0.0, %v678
      %v701 = vsub.f32 0.0, %v683
      %v702 = vmul.f32 %v686, 1.442695
      %v703 = vpow.pop %v702
      %v704 = vmul.f32 %v687, 1.442695
      %v705 = vpow.pop %v704
      %v706 = vmul.f32 %v688, 1.442695
      %v707 = vpow.pop %v706
      %v708 = vmul.f32 %v689, 1.442695
      %v709 = vpow.pop %v708
      %v710 = vmul.f32 %v690, 1.442695
      %v711 = vpow.pop %v710
      %v712 = vmul.f32 %v691, 1.442695
      %v713 = vpow.pop %v712
      %v714 = vmul.f32 %v692, 1.442695
      %v715 = vpow.pop %v714
      %v716 = vmul.f32 %v693, 1.442695
      %v717 = vpow.pop %v716
      %v718 = vmul.f32 %v694, 1.442695
      %v719 = vpow.pop %v718
      %v720 = vmul.f32 %v695, 1.442695
      %v721 = vpow.pop %v720
      %v722 = vmul.f32 %v696, 1.442695
      %v723 = vpow.pop %v722
      %v724 = vmul.f32 %v697, 1.442695
      %v725 = vpow.pop %v724
      %v726 = vmul.f32 %v698, 1.442695
      %v727 = vpow.pop %v726
      %v728 = vmul.f32 %v699, 1.442695
      %v729 = vpow.pop %v728
      %v730 = vmul.f32 %v700, 1.442695
      %v731 = vpow.pop %v730
      %v732 = vmul.f32 %v701, 1.442695
      %v733 = vpow.pop %v732
      %v734 = vadd.f32 %v703, 1.0
      %v735 = vadd.f32 %v705, 1.0
      %v736 = vadd.f32 %v707, 1.0
      %v737 = vadd.f32 %v709, 1.0
      %v738 = vadd.f32 %v711, 1.0
      %v739 = vadd.f32 %v713, 1.0
      %v740 = vadd.f32 %v715, 1.0
      %v741 = vadd.f32 %v717, 1.0
      %v742 = vadd.f32 %v719, 1.0
      %v743 = vadd.f32 %v721, 1.0
      %v744 = vadd.f32 %v723, 1.0
      %v745 = vadd.f32 %v725, 1.0
      %v746 = vadd.f32 %v727, 1.0
      %v747 = vadd.f32 %v729, 1.0
      %v748 = vadd.f32 %v731, 1.0
      %v749 = vadd.f32 %v733, 1.0
      %v750 = vrcp.pop %v734
      %v751 = vmul.f32 1.0, %v750
      %v752 = vrcp.pop %v735
      %v753 = vmul.f32 1.0, %v752
      %v754 = vrcp.pop %v736
      %v755 = vmul.f32 1.0, %v754
      %v756 = vrcp.pop %v737
      %v757 = vmul.f32 1.0, %v756
      %v758 = vrcp.pop %v738
      %v759 = vmul.f32 1.0, %v758
      %v760 = vrcp.pop %v739
      %v761 = vmul.f32 1.0, %v760
      %v762 = vrcp.pop %v740
      %v763 = vmul.f32 1.0, %v762
      %v764 = vrcp.pop %v741
      %v765 = vmul.f32 1.0, %v764
      %v766 = vrcp.pop %v742
      %v767 = vmul.f32 1.0, %v766
      %v768 = vrcp.pop %v743
      %v769 = vmul.f32 1.0, %v768
      %v770 = vrcp.pop %v744
      %v771 = vmul.f32 1.0, %v770
      %v772 = vrcp.pop %v745
      %v773 = vmul.f32 1.0, %v772
      %v774 = vrcp.pop %v746
      %v775 = vmul.f32 1.0, %v774
      %v776 = vrcp.pop %v747
      %v777 = vmul.f32 1.0, %v776
      %v778 = vrcp.pop %v748
      %v779 = vmul.f32 1.0, %v778
      %v780 = vrcp.pop %v749
      %v781 = vmul.f32 1.0, %v780
      %v782 = vmul.f32 %v608, %v751
      %v783 = vmul.f32 %v613, %v753
      %v784 = vmul.f32 %v618, %v755
      %v785 = vmul.f32 %v623, %v757
      %v786 = vmul.f32 %v628, %v759
      %v787 = vmul.f32 %v633, %v761
      %v788 = vmul.f32 %v638, %v763
      %v789 = vmul.f32 %v643, %v765
      %v790 = vmul.f32 %v648, %v767
      %v791 = vmul.f32 %v653, %v769
      %v792 = vmul.f32 %v658, %v771
      %v793 = vmul.f32 %v663, %v773
      %v794 = vmul.f32 %v668, %v775
      %v795 = vmul.f32 %v673, %v777
      %v796 = vmul.f32 %v678, %v779
      %v797 = vmul.f32 %v683, %v781
      %s798 = scalar_lea.vmem [#allocation2], 24
      %799 = vst.msk [vmem:[%s798 + $0x1] sm:$0xff] %vm492, %v782
      %800 = vst.msk [vmem:[%s798 + $0x9] sm:$0xff] %vm492, %v783
      %801 = vst.msk [vmem:[%s798 + $0x19] sm:$0xff] %vm492, %v784
      %802 = vst.msk [vmem:[%s798 + $0x21] sm:$0xff] %vm492, %v785
      %803 = vst.msk [vmem:[%s798 + $0x31] sm:$0xff] %vm492, %v786
      %804 = vst.msk [vmem:[%s798 + $0x39] sm:$0xff] %vm492, %v787
      %805 = vst.msk [vmem:[%s798 + $0x49] sm:$0xff] %vm492, %v788
      %806 = vst.msk [vmem:[%s798 + $0x51] sm:$0xff] %vm492, %v789
      %807 = vst.msk [vmem:[%s798 + $0x61] sm:$0xff] %vm492, %v790
      %808 = vst.msk [vmem:[%s798 + $0x69] sm:$0xff] %vm492, %v791
      %809 = vst.msk [vmem:[%s798 + $0x79] sm:$0xff] %vm492, %v792
      %810 = vst.msk [vmem:[%s798 + $0x81] sm:$0xff] %vm492, %v793
      %811 = vst.msk [vmem:[%s798 + $0x91] sm:$0xff] %vm492, %v794
      %812 = vst.msk [vmem:[%s798 + $0x99] sm:$0xff] %vm492, %v795
      %813 = vst.msk [vmem:[%s798 + $0xa9] sm:$0xff] %vm492, %v796
      %814 = vst.msk [vmem:[%s798 + $0xb1] sm:$0xff] %vm492, %v797
      %p815 = scmp.gt.s32.totalorder %s23, 0
      // Predicated region
      $region49: #{tpu_custom_call.1} parent=47 // pred_check
        %p816 = pneg %p815
      $region50: #{tpu_custom_call.1} parent=47 // pred_check_branch
        %818 = sbr.rel (%p816) target = $region52
      $region51: #{tpu_custom_call.1} parent=47 // pred_region
        %v819 = vld [vmem:[%s414] sm:$0xff]
        %v820 = vld [vmem:[%s414 + $0x8] sm:$0xff]
        %v822 = vsel %vm492, %v819, 0
        %v825 = vsel %vm492, %v820, 0
        %827 = vmatprep.subr.mxu0 0.0
        %828 = vmatpush1.msra.mxu0 %v447
        %829 = vmatprep.subr.mxu0 0.0
        %830 = vmatpush1.msra.mxu0 0.0
        %831 = vmatprep.subr.mxu0 0.0
        %832 = vmatpush1.msra.mxu0 0.0
        %833 = vmatprep.subr.mxu0 0.0
        %834 = vmatpush1.msra.mxu0 0.0
        %835 = vmatprep.subr.mxu0 0.0
        %836 = vmatpush1.msra.mxu0 0.0
        %837 = vmatprep.subr.mxu0 0.0
        %838 = vmatpush1.msra.mxu0 0.0
        %839 = vmatprep.subr.mxu0 0.0
        %840 = vmatpush1.msra.mxu0 0.0
        %841 = vmatprep.subr.mxu0 0.0
        %842 = vmatpush1.msra.mxu0 0.0
        %843 = vmatprep.subr.mxu0 0.0
        %844 = vmatpush1.msra.mxu0 0.0
        %845 = vmatprep.subr.mxu0 0.0
        %846 = vmatpush1.msra.mxu0 0.0
        %847 = vmatprep.subr.mxu0 0.0
        %848 = vmatpush1.msra.mxu0 0.0
        %849 = vmatprep.subr.mxu0 0.0
        %850 = vmatpush1.msra.mxu0 0.0
        %851 = vmatprep.subr.mxu0 0.0
        %852 = vmatpush1.msra.mxu0 0.0
        %853 = vmatprep.subr.mxu0 0.0
        %854 = vmatpush1.msra.mxu0 0.0
        %855 = vmatprep.subr.mxu0 0.0
        %856 = vmatpush1.msra.mxu0 0.0
        %857 = vmatprep.subr.mxu0 0.0
        %858 = vmatpush1.msra.mxu0 0.0
        %859 = vmatprep.subr.mxu0 0.0
        %860 = vmatpush1.msra.mxu0 0.0
        %861 = vmatprep.subr.mxu0 0.0
        %862 = vmatpush1.msra.mxu0 0.0
        %863 = vmatprep.subr.mxu0 0.0
        %864 = vmatpush1.msra.mxu0 0.0
        %865 = vmatprep.subr.mxu0 0.0
        %866 = vmatpush1.msra.mxu0 0.0
        %867 = vmatprep.subr.mxu0 0.0
        %868 = vmatpush1.msra.mxu0 0.0
        %869 = vmatprep.subr.mxu0 0.0
        %870 = vmatpush1.msra.mxu0 0.0
        %871 = vmatprep.subr.mxu0 0.0
        %872 = vmatpush1.msra.mxu0 0.0
        %873 = vmatprep.subr.mxu0 0.0
        %874 = vmatpush1.msra.mxu0 0.0
        %875 = vmatprep.subr.mxu0 0.0
        %876 = vmatpush1.msra.mxu0 0.0
        %877 = vmatprep.subr.mxu0 0.0
        %878 = vmatpush1.msra.mxu0 0.0
        %879 = vmatprep.subr.mxu0 0.0
        %880 = vmatpush1.msra.mxu0 0.0
        %881 = vmatprep.subr.mxu0 0.0
        %882 = vmatpush1.msra.mxu0 0.0
        %883 = vmatprep.subr.mxu0 0.0
        %884 = vmatpush1.msra.mxu0 0.0
        %885 = vmatprep.subr.mxu0 0.0
        %886 = vmatpush1.msra.mxu0 0.0
        %887 = vmatprep.subr.mxu0 0.0
        %888 = vmatpush1.msra.mxu0 0.0
        %889 = vmatprep.subr.mxu0 0.0
        %890 = vmatpush1.msra.mxu0 0.0
        %891 = vmatprep.mubr.f32.mxu0 0.0
        %892 = vmatmul.mubr.f32.gmra.mrb[0].mxu0 %v822
        %v893 = vpop.f32.mrb[0].mxu0
        %v894 = vadd.f32 %v490, %v893
        %v895 = vpop.f32.mrb[0].mxu0
        %896 = vmatprep.mubr.f32.mxu0 0.0
        %897 = vmatmul.mubr.f32.gmra.mrb[0].mxu0 %v825
        %v898 = vpop.f32.mrb[0].mxu0
        %v899 = vadd.f32 %v490, %v898
        %v900 = vpop.f32.mrb[0].mxu0
        %901 = vdwg.mxu0
        %v902 = vsub.f32 0.0, %v894
        %v903 = vsub.f32 0.0, %v899
        %v904 = vmul.f32 %v902, 1.442695
        %v905 = vpow.pop %v904
        %v906 = vmul.f32 %v903, 1.442695
        %v907 = vpow.pop %v906
        %v908 = vadd.f32 %v905, 1.0
        %v909 = vadd.f32 %v907, 1.0
        %v910 = vrcp.pop %v908
        %v911 = vmul.f32 1.0, %v910
        %v912 = vrcp.pop %v909
        %v913 = vmul.f32 1.0, %v912
        %v914 = vmul.f32 %v894, %v911
        %v915 = vmul.f32 %v899, %v913
        %916 = vst.msk [vmem:[#allocation2 + $0x1] sm:$0xff] %vm492, %v914
        %917 = vst.msk [vmem:[#allocation2 + $0x9] sm:$0xff] %vm492, %v915
      $region52: #{tpu_custom_call.1} parent=47 // pred_fallthru
        _
      %p918 = scmp.eq.s32.totalorder %s23, 0
      // Predicated region
      $region53: #{tpu_custom_call.1} parent=47 // pred_check
        %p919 = pneg %p918
      $region54: #{tpu_custom_call.1} parent=47 // pred_check_branch
        %921 = sbr.rel (%p919) target = $region56
      $region55: #{tpu_custom_call.1} parent=47 // pred_region
        %922 = vst.msk [vmem:[#allocation2 + $0x1] sm:$0xff] %vm492, 0.0
        %923 = vst.msk [vmem:[#allocation2 + $0x9] sm:$0xff] %vm492, 0.0
      $region56: #{tpu_custom_call.1} parent=47 // pred_fallthru
        _
      %p924 = scmp.lt.s32.totalorder %s23, 1
      // Predicated region
      $region57: #{tpu_custom_call.1} parent=47 // pred_check
        %p925 = pneg %p924
      $region58: #{tpu_custom_call.1} parent=47 // pred_check_branch
        %927 = sbr.rel (%p925) target = $region60
      $region59: #{tpu_custom_call.1} parent=47 // pred_region
        %v928 = vld [vmem:[%s431] sm:$0xff]
        %v929 = vld [vmem:[%s431 + $0x8] sm:$0xff]
        %v931 = vsel %vm492, %v928, 0
        %v934 = vsel %vm492, %v929, 0
        %936 = vmatprep.subr.mxu0 0.0
        %937 = vmatpush1.msra.mxu0 %v447
        %938 = vmatprep.subr.mxu0 0.0
        %939 = vmatpush1.msra.mxu0 0.0
        %940 = vmatprep.subr.mxu0 0.0
        %941 = vmatpush1.msra.mxu0 0.0
        %942 = vmatprep.subr.mxu0 0.0
        %943 = vmatpush1.msra.mxu0 0.0
        %944 = vmatprep.subr.mxu0 0.0
        %945 = vmatpush1.msra.mxu0 0.0
        %946 = vmatprep.subr.mxu0 0.0
        %947 = vmatpush1.msra.mxu0 0.0
        %948 = vmatprep.subr.mxu0 0.0
        %949 = vmatpush1.msra.mxu0 0.0
        %950 = vmatprep.subr.mxu0 0.0
        %951 = vmatpush1.msra.mxu0 0.0
        %952 = vmatprep.subr.mxu0 0.0
        %953 = vmatpush1.msra.mxu0 0.0
        %954 = vmatprep.subr.mxu0 0.0
        %955 = vmatpush1.msra.mxu0 0.0
        %956 = vmatprep.subr.mxu0 0.0
        %957 = vmatpush1.msra.mxu0 0.0
        %958 = vmatprep.subr.mxu0 0.0
        %959 = vmatpush1.msra.mxu0 0.0
        %960 = vmatprep.subr.mxu0 0.0
        %961 = vmatpush1.msra.mxu0 0.0
        %962 = vmatprep.subr.mxu0 0.0
        %963 = vmatpush1.msra.mxu0 0.0
        %964 = vmatprep.subr.mxu0 0.0
        %965 = vmatpush1.msra.mxu0 0.0
        %966 = vmatprep.subr.mxu0 0.0
        %967 = vmatpush1.msra.mxu0 0.0
        %968 = vmatprep.subr.mxu0 0.0
        %969 = vmatpush1.msra.mxu0 0.0
        %970 = vmatprep.subr.mxu0 0.0
        %971 = vmatpush1.msra.mxu0 0.0
        %972 = vmatprep.subr.mxu0 0.0
        %973 = vmatpush1.msra.mxu0 0.0
        %974 = vmatprep.subr.mxu0 0.0
        %975 = vmatpush1.msra.mxu0 0.0
        %976 = vmatprep.subr.mxu0 0.0
        %977 = vmatpush1.msra.mxu0 0.0
        %978 = vmatprep.subr.mxu0 0.0
        %979 = vmatpush1.msra.mxu0 0.0
        %980 = vmatprep.subr.mxu0 0.0
        %981 = vmatpush1.msra.mxu0 0.0
        %982 = vmatprep.subr.mxu0 0.0
        %983 = vmatpush1.msra.mxu0 0.0
        %984 = vmatprep.subr.mxu0 0.0
        %985 = vmatpush1.msra.mxu0 0.0
        %986 = vmatprep.subr.mxu0 0.0
        %987 = vmatpush1.msra.mxu0 0.0
        %988 = vmatprep.subr.mxu0 0.0
        %989 = vmatpush1.msra.mxu0 0.0
        %990 = vmatprep.subr.mxu0 0.0
        %991 = vmatpush1.msra.mxu0 0.0
        %992 = vmatprep.subr.mxu0 0.0
        %993 = vmatpush1.msra.mxu0 0.0
        %994 = vmatprep.subr.mxu0 0.0
        %995 = vmatpush1.msra.mxu0 0.0
        %996 = vmatprep.subr.mxu0 0.0
        %997 = vmatpush1.msra.mxu0 0.0
        %998 = vmatprep.subr.mxu0 0.0
        %999 = vmatpush1.msra.mxu0 0.0
        %1000 = vmatprep.mubr.f32.mxu0 0.0
        %1001 = vmatmul.mubr.f32.gmra.mrb[0].mxu0 %v931
        %v1002 = vpop.f32.mrb[0].mxu0
        %v1003 = vadd.f32 %v490, %v1002
        %v1004 = vpop.f32.mrb[0].mxu0
        %1005 = vmatprep.mubr.f32.mxu0 0.0
        %1006 = vmatmul.mubr.f32.gmra.mrb[0].mxu0 %v934
        %v1007 = vpop.f32.mrb[0].mxu0
        %v1008 = vadd.f32 %v490, %v1007
        %v1009 = vpop.f32.mrb[0].mxu0
        %1010 = vdwg.mxu0
        %v1011 = vsub.f32 0.0, %v1003
        %v1012 = vsub.f32 0.0, %v1008
        %v1013 = vmul.f32 %v1011, 1.442695
        %v1014 = vpow.pop %v1013
        %v1015 = vmul.f32 %v1012, 1.442695
        %v1016 = vpow.pop %v1015
        %v1017 = vadd.f32 %v1014, 1.0
        %v1018 = vadd.f32 %v1016, 1.0
        %v1019 = vrcp.pop %v1017
        %v1020 = vmul.f32 1.0, %v1019
        %v1021 = vrcp.pop %v1018
        %v1022 = vmul.f32 1.0, %v1021
        %v1023 = vmul.f32 %v1003, %v1020
        %v1024 = vmul.f32 %v1008, %v1022
        %s1025 = scalar_lea.vmem [#allocation2], 216
        %1026 = vst.msk [vmem:[%s1025 + $0x1] sm:$0xff] %vm492, %v1023
        %1027 = vst.msk [vmem:[%s1025 + $0x9] sm:$0xff] %vm492, %v1024
      $region60: #{tpu_custom_call.1} parent=47 // pred_fallthru
        _
      %p1028 = scmp.eq.s32.totalorder %s23, 1
      // Predicated region
      $region61: #{tpu_custom_call.1} parent=47 // pred_check
        %p1029 = pneg %p1028
      $region62: #{tpu_custom_call.1} parent=47 // pred_check_branch
        %1031 = sbr.rel (%p1029) target = $region64
      $region63: #{tpu_custom_call.1} parent=47 // pred_region
        %s1032 = scalar_lea.vmem [#allocation2], 216
        %1033 = vst.msk [vmem:[%s1032 + $0x1] sm:$0xff] %vm492, 0.0
        %1034 = vst.msk [vmem:[%s1032 + $0x9] sm:$0xff] %vm492, 0.0
      $region64: #{tpu_custom_call.1} parent=47 // pred_fallthru
        _
      %v1035 = vld [vmem:[#allocation2] sm:$0xff]
      %v1036 = vld [vmem:[#allocation2 + $0x8] sm:$0xff]
      %v1037 = vld [vmem:[#allocation2 + $0x18] sm:$0xff]
      %v1038 = vld [vmem:[#allocation2 + $0x20] sm:$0xff]
      %v1039 = vld [vmem:[#allocation2 + $0x30] sm:$0xff]
      %v1040 = vld [vmem:[#allocation2 + $0x38] sm:$0xff]
      %v1041 = vld [vmem:[#allocation2 + $0x48] sm:$0xff]
      %v1042 = vld [vmem:[#allocation2 + $0x50] sm:$0xff]
      %v1043 = vld [vmem:[#allocation2 + $0x60] sm:$0xff]
      %v1044 = vld [vmem:[#allocation2 + $0x68] sm:$0xff]
      %v1045 = vld [vmem:[#allocation2 + $0x78] sm:$0xff]
      %v1046 = vld [vmem:[#allocation2 + $0x80] sm:$0xff]
      %v1047 = vld [vmem:[#allocation2 + $0x90] sm:$0xff]
      %v1048 = vld [vmem:[#allocation2 + $0x98] sm:$0xff]
      %v1049 = vld [vmem:[#allocation2 + $0xa8] sm:$0xff]
      %v1050 = vld [vmem:[#allocation2 + $0xb0] sm:$0xff]
      %v1051 = vld [vmem:[%s5] sm:$0xff]
      %v1052 = vld [vmem:[#allocation2 + $0x1] sm:$0xff]
      %v1053 = vld [vmem:[#allocation2 + $0x9] sm:$0xff]
      %v1054 = vld [vmem:[#allocation2 + $0x19] sm:$0xff]
      %v1055 = vld [vmem:[#allocation2 + $0x21] sm:$0xff]
      %v1056 = vld [vmem:[#allocation2 + $0x31] sm:$0xff]
      %v1057 = vld [vmem:[#allocation2 + $0x39] sm:$0xff]
      %v1058 = vld [vmem:[#allocation2 + $0x49] sm:$0xff]
      %v1059 = vld [vmem:[#allocation2 + $0x51] sm:$0xff]
      %v1060 = vld [vmem:[#allocation2 + $0x61] sm:$0xff]
      %v1061 = vld [vmem:[#allocation2 + $0x69] sm:$0xff]
      %v1062 = vld [vmem:[#allocation2 + $0x79] sm:$0xff]
      %v1063 = vld [vmem:[#allocation2 + $0x81] sm:$0xff]
      %v1064 = vld [vmem:[#allocation2 + $0x91] sm:$0xff]
      %v1065 = vld [vmem:[#allocation2 + $0x99] sm:$0xff]
      %v1066 = vld [vmem:[#allocation2 + $0xa9] sm:$0xff]
      %v1067 = vld [vmem:[#allocation2 + $0xb1] sm:$0xff]
      %s1068 = scalar_lea.vmem %s5, 8
      %v1069 = vld [vmem:[%s1068] sm:$0xff]
      %v1071 = vsel %vm492, %v1052, 0
      %v1074 = vsel %vm492, %v1053, 0
      %v1077 = vsel %vm492, %v1054, 0
      %v1080 = vsel %vm492, %v1055, 0
      %v1083 = vsel %vm492, %v1056, 0
      %v1086 = vsel %vm492, %v1057, 0
      %v1089 = vsel %vm492, %v1058, 0
      %v1092 = vsel %vm492, %v1059, 0
      %v1095 = vsel %vm492, %v1060, 0
      %v1098 = vsel %vm492, %v1061, 0
      %v1101 = vsel %vm492, %v1062, 0
      %v1104 = vsel %vm492, %v1063, 0
      %v1107 = vsel %vm492, %v1064, 0
      %v1110 = vsel %vm492, %v1065, 0
      %v1113 = vsel %vm492, %v1066, 0
      %v1116 = vsel %vm492, %v1067, 0
      %1118 = vmatprep.subr.mxu0 0.0
      %1119 = vmatpush1.msra.mxu0 %v1069
      %1120 = vmatprep.subr.mxu0 0.0
      %1121 = vmatpush1.msra.mxu0 0.0
      %1122 = vmatprep.subr.mxu0 0.0
      %1123 = vmatpush1.msra.mxu0 0.0
      %1124 = vmatprep.subr.mxu0 0.0
      %1125 = vmatpush1.msra.mxu0 0.0
      %1126 = vmatprep.subr.mxu0 0.0
      %1127 = vmatpush1.msra.mxu0 0.0
      %1128 = vmatprep.subr.mxu0 0.0
      %1129 = vmatpush1.msra.mxu0 0.0
      %1130 = vmatprep.subr.mxu0 0.0
      %1131 = vmatpush1.msra.mxu0 0.0
      %1132 = vmatprep.subr.mxu0 0.0
      %1133 = vmatpush1.msra.mxu0 0.0
      %1134 = vmatprep.subr.mxu0 0.0
      %1135 = vmatpush1.msra.mxu0 0.0
      %1136 = vmatprep.subr.mxu0 0.0
      %1137 = vmatpush1.msra.mxu0 0.0
      %1138 = vmatprep.subr.mxu0 0.0
      %1139 = vmatpush1.msra.mxu0 0.0
      %1140 = vmatprep.subr.mxu0 0.0
      %1141 = vmatpush1.msra.mxu0 0.0
      %1142 = vmatprep.subr.mxu0 0.0
      %1143 = vmatpush1.msra.mxu0 0.0
      %1144 = vmatprep.subr.mxu0 0.0
      %1145 = vmatpush1.msra.mxu0 0.0
      %1146 = vmatprep.subr.mxu0 0.0
      %1147 = vmatpush1.msra.mxu0 0.0
      %1148 = vmatprep.subr.mxu0 0.0
      %1149 = vmatpush1.msra.mxu0 0.0
      %1150 = vmatprep.subr.mxu0 0.0
      %1151 = vmatpush1.msra.mxu0 0.0
      %1152 = vmatprep.subr.mxu0 0.0
      %1153 = vmatpush1.msra.mxu0 0.0
      %1154 = vmatprep.subr.mxu0 0.0
      %1155 = vmatpush1.msra.mxu0 0.0
      %1156 = vmatprep.subr.mxu0 0.0
      %1157 = vmatpush1.msra.mxu0 0.0
      %1158 = vmatprep.subr.mxu0 0.0
      %1159 = vmatpush1.msra.mxu0 0.0
      %1160 = vmatprep.subr.mxu0 0.0
      %1161 = vmatpush1.msra.mxu0 0.0
      %1162 = vmatprep.subr.mxu0 0.0
      %1163 = vmatpush1.msra.mxu0 0.0
      %1164 = vmatprep.subr.mxu0 0.0
      %1165 = vmatpush1.msra.mxu0 0.0
      %1166 = vmatprep.subr.mxu0 0.0
      %1167 = vmatpush1.msra.mxu0 0.0
      %1168 = vmatprep.subr.mxu0 0.0
      %1169 = vmatpush1.msra.mxu0 0.0
      %1170 = vmatprep.subr.mxu0 0.0
      %1171 = vmatpush1.msra.mxu0 0.0
      %1172 = vmatprep.subr.mxu0 0.0
      %1173 = vmatpush1.msra.mxu0 0.0
      %1174 = vmatprep.subr.mxu0 0.0
      %1175 = vmatpush1.msra.mxu0 0.0
      %1176 = vmatprep.subr.mxu0 0.0
      %1177 = vmatpush1.msra.mxu0 0.0
      %1178 = vmatprep.subr.mxu0 0.0
      %1179 = vmatpush1.msra.mxu0 0.0
      %1180 = vmatprep.subr.mxu0 0.0
      %1181 = vmatpush1.msra.mxu0 0.0
      %1182 = vmatprep.mubr.f32.mxu0 0.0
      %1183 = vmatmul.mubr.f32.gmra.mrb[0].mxu0 %v1071
      %v1184 = vpop.f32.mrb[0].mxu0
      %v1185 = vadd.f32 0.0, %v1184
      %v1186 = vpop.f32.mrb[0].mxu0
      %1187 = vmatprep.mubr.f32.mxu0 0.0
      %1188 = vmatmul.mubr.f32.gmra.mrb[0].mxu0 %v1074
      %v1189 = vpop.f32.mrb[0].mxu0
      %v1190 = vadd.f32 0.0, %v1189
      %v1191 = vpop.f32.mrb[0].mxu0
      %1192 = vmatprep.mubr.f32.mxu0 0.0
      %1193 = vmatmul.mubr.f32.gmra.mrb[0].mxu0 %v1077
      %v1194 = vpop.f32.mrb[0].mxu0
      %v1195 = vadd.f32 0.0, %v1194
      %v1196 = vpop.f32.mrb[0].mxu0
      %1197 = vmatprep.mubr.f32.mxu0 0.0
      %1198 = vmatmul.mubr.f32.gmra.mrb[0].mxu0 %v1080
      %v1199 = vpop.f32.mrb[0].mxu0
      %v1200 = vadd.f32 0.0, %v1199
      %v1201 = vpop.f32.mrb[0].mxu0
      %1202 = vmatprep.mubr.f32.mxu0 0.0
      %1203 = vmatmul.mubr.f32.gmra.mrb[0].mxu0 %v1083
      %v1204 = vpop.f32.mrb[0].mxu0
      %v1205 = vadd.f32 0.0, %v1204
      %v1206 = vpop.f32.mrb[0].mxu0
      %1207 = vmatprep.mubr.f32.mxu0 0.0
      %1208 = vmatmul.mubr.f32.gmra.mrb[0].mxu0 %v1086
      %v1209 = vpop.f32.mrb[0].mxu0
      %v1210 = vadd.f32 0.0, %v1209
      %v1211 = vpop.f32.mrb[0].mxu0
      %1212 = vmatprep.mubr.f32.mxu0 0.0
      %1213 = vmatmul.mubr.f32.gmra.mrb[0].mxu0 %v1089
      %v1214 = vpop.f32.mrb[0].mxu0
      %v1215 = vadd.f32 0.0, %v1214
      %v1216 = vpop.f32.mrb[0].mxu0
      %1217 = vmatprep.mubr.f32.mxu0 0.0
      %1218 = vmatmul.mubr.f32.gmra.mrb[0].mxu0 %v1092
      %v1219 = vpop.f32.mrb[0].mxu0
      %v1220 = vadd.f32 0.0, %v1219
      %v1221 = vpop.f32.mrb[0].mxu0
      %1222 = vmatprep.mubr.f32.mxu0 0.0
      %1223 = vmatmul.mubr.f32.gmra.mrb[0].mxu0 %v1095
      %v1224 = vpop.f32.mrb[0].mxu0
      %v1225 = vadd.f32 0.0, %v1224
      %v1226 = vpop.f32.mrb[0].mxu0
      %1227 = vmatprep.mubr.f32.mxu0 0.0
      %1228 = vmatmul.mubr.f32.gmra.mrb[0].mxu0 %v1098
      %v1229 = vpop.f32.mrb[0].mxu0
      %v1230 = vadd.f32 0.0, %v1229
      %v1231 = vpop.f32.mrb[0].mxu0
      %1232 = vmatprep.mubr.f32.mxu0 0.0
      %1233 = vmatmul.mubr.f32.gmra.mrb[0].mxu0 %v1101
      %v1234 = vpop.f32.mrb[0].mxu0
      %v1235 = vadd.f32 0.0, %v1234
      %v1236 = vpop.f32.mrb[0].mxu0
      %1237 = vmatprep.mubr.f32.mxu0 0.0
      %1238 = vmatmul.mubr.f32.gmra.mrb[0].mxu0 %v1104
      %v1239 = vpop.f32.mrb[0].mxu0
      %v1240 = vadd.f32 0.0, %v1239
      %v1241 = vpop.f32.mrb[0].mxu0
      %1242 = vmatprep.mubr.f32.mxu0 0.0
      %1243 = vmatmul.mubr.f32.gmra.mrb[0].mxu0 %v1107
      %v1244 = vpop.f32.mrb[0].mxu0
      %v1245 = vadd.f32 0.0, %v1244
      %v1246 = vpop.f32.mrb[0].mxu0
      %1247 = vmatprep.mubr.f32.mxu0 0.0
      %1248 = vmatmul.mubr.f32.gmra.mrb[0].mxu0 %v1110
      %v1249 = vpop.f32.mrb[0].mxu0
      %v1250 = vadd.f32 0.0, %v1249
      %v1251 = vpop.f32.mrb[0].mxu0
      %1252 = vmatprep.mubr.f32.mxu0 0.0
      %1253 = vmatmul.mubr.f32.gmra.mrb[0].mxu0 %v1113
      %v1254 = vpop.f32.mrb[0].mxu0
      %v1255 = vadd.f32 0.0, %v1254
      %v1256 = vpop.f32.mrb[0].mxu0
      %1257 = vmatprep.mubr.f32.mxu0 0.0
      %1258 = vmatmul.mubr.f32.gmra.mrb[0].mxu0 %v1116
      %v1259 = vpop.f32.mrb[0].mxu0
      %v1260 = vadd.f32 0.0, %v1259
      %v1261 = vpop.f32.mrb[0].mxu0
      %1262 = vdwg.mxu0
      %v1264 = vsel %vm492, %v1035, 0
      %v1267 = vsel %vm492, %v1036, 0
      %v1270 = vsel %vm492, %v1037, 0
      %v1273 = vsel %vm492, %v1038, 0
      %v1276 = vsel %vm492, %v1039, 0
      %v1279 = vsel %vm492, %v1040, 0
      %v1282 = vsel %vm492, %v1041, 0
      %v1285 = vsel %vm492, %v1042, 0
      %v1288 = vsel %vm492, %v1043, 0
      %v1291 = vsel %vm492, %v1044, 0
      %v1294 = vsel %vm492, %v1045, 0
      %v1297 = vsel %vm492, %v1046, 0
      %v1300 = vsel %vm492, %v1047, 0
      %v1303 = vsel %vm492, %v1048, 0
      %v1306 = vsel %vm492, %v1049, 0
      %v1309 = vsel %vm492, %v1050, 0
      %1311 = vmatprep.subr.mxu0 0.0
      %1312 = vmatpush1.msra.mxu0 %v1051
      %1313 = vmatprep.subr.mxu0 0.0
      %1314 = vmatpush1.msra.mxu0 0.0
      %1315 = vmatprep.subr.mxu0 0.0
      %1316 = vmatpush1.msra.mxu0 0.0
      %1317 = vmatprep.subr.mxu0 0.0
      %1318 = vmatpush1.msra.mxu0 0.0
      %1319 = vmatprep.subr.mxu0 0.0
      %1320 = vmatpush1.msra.mxu0 0.0
      %1321 = vmatprep.subr.mxu0 0.0
      %1322 = vmatpush1.msra.mxu0 0.0
      %1323 = vmatprep.subr.mxu0 0.0
      %1324 = vmatpush1.msra.mxu0 0.0
      %1325 = vmatprep.subr.mxu0 0.0
      %1326 = vmatpush1.msra.mxu0 0.0
      %1327 = vmatprep.subr.mxu0 0.0
      %1328 = vmatpush1.msra.mxu0 0.0
      %1329 = vmatprep.subr.mxu0 0.0
      %1330 = vmatpush1.msra.mxu0 0.0
      %1331 = vmatprep.subr.mxu0 0.0
      %1332 = vmatpush1.msra.mxu0 0.0
      %1333 = vmatprep.subr.mxu0 0.0
      %1334 = vmatpush1.msra.mxu0 0.0
      %1335 = vmatprep.subr.mxu0 0.0
      %1336 = vmatpush1.msra.mxu0 0.0
      %1337 = vmatprep.subr.mxu0 0.0
      %1338 = vmatpush1.msra.mxu0 0.0
      %1339 = vmatprep.subr.mxu0 0.0
      %1340 = vmatpush1.msra.mxu0 0.0
      %1341 = vmatprep.subr.mxu0 0.0
      %1342 = vmatpush1.msra.mxu0 0.0
      %1343 = vmatprep.subr.mxu0 0.0
      %1344 = vmatpush1.msra.mxu0 0.0
      %1345 = vmatprep.subr.mxu0 0.0
      %1346 = vmatpush1.msra.mxu0 0.0
      %1347 = vmatprep.subr.mxu0 0.0
      %1348 = vmatpush1.msra.mxu0 0.0
      %1349 = vmatprep.subr.mxu0 0.0
      %1350 = vmatpush1.msra.mxu0 0.0
      %1351 = vmatprep.subr.mxu0 0.0
      %1352 = vmatpush1.msra.mxu0 0.0
      %1353 = vmatprep.subr.mxu0 0.0
      %1354 = vmatpush1.msra.mxu0 0.0
      %1355 = vmatprep.subr.mxu0 0.0
      %1356 = vmatpush1.msra.mxu0 0.0
      %1357 = vmatprep.subr.mxu0 0.0
      %1358 = vmatpush1.msra.mxu0 0.0
      %1359 = vmatprep.subr.mxu0 0.0
      %1360 = vmatpush1.msra.mxu0 0.0
      %1361 = vmatprep.subr.mxu0 0.0
      %1362 = vmatpush1.msra.mxu0 0.0
      %1363 = vmatprep.subr.mxu0 0.0
      %1364 = vmatpush1.msra.mxu0 0.0
      %1365 = vmatprep.subr.mxu0 0.0
      %1366 = vmatpush1.msra.mxu0 0.0
      %1367 = vmatprep.subr.mxu0 0.0
      %1368 = vmatpush1.msra.mxu0 0.0
      %1369 = vmatprep.subr.mxu0 0.0
      %1370 = vmatpush1.msra.mxu0 0.0
      %1371 = vmatprep.subr.mxu0 0.0
      %1372 = vmatpush1.msra.mxu0 0.0
      %1373 = vmatprep.subr.mxu0 0.0
      %1374 = vmatpush1.msra.mxu0 0.0
      %1375 = vmatprep.mubr.f32.mxu0 0.0
      %1376 = vmatmul.mubr.f32.gmra.mrb[0].mxu0 %v1264
      %v1377 = vpop.f32.mrb[0].mxu0
      %v1378 = vadd.f32 %v1185, %v1377
      %v1379 = vpop.f32.mrb[0].mxu0
      %1380 = vmatprep.mubr.f32.mxu0 0.0
      %1381 = vmatmul.mubr.f32.gmra.mrb[0].mxu0 %v1267
      %v1382 = vpop.f32.mrb[0].mxu0
      %v1383 = vadd.f32 %v1190, %v1382
      %v1384 = vpop.f32.mrb[0].mxu0
      %1385 = vmatprep.mubr.f32.mxu0 0.0
      %1386 = vmatmul.mubr.f32.gmra.mrb[0].mxu0 %v1270
      %v1387 = vpop.f32.mrb[0].mxu0
      %v1388 = vadd.f32 %v1195, %v1387
      %v1389 = vpop.f32.mrb[0].mxu0
      %1390 = vmatprep.mubr.f32.mxu0 0.0
      %1391 = vmatmul.mubr.f32.gmra.mrb[0].mxu0 %v1273
      %v1392 = vpop.f32.mrb[0].mxu0
      %v1393 = vadd.f32 %v1200, %v1392
      %v1394 = vpop.f32.mrb[0].mxu0
      %1395 = vmatprep.mubr.f32.mxu0 0.0
      %1396 = vmatmul.mubr.f32.gmra.mrb[0].mxu0 %v1276
      %v1397 = vpop.f32.mrb[0].mxu0
      %v1398 = vadd.f32 %v1205, %v1397
      %v1399 = vpop.f32.mrb[0].mxu0
      %1400 = vmatprep.mubr.f32.mxu0 0.0
      %1401 = vmatmul.mubr.f32.gmra.mrb[0].mxu0 %v1279
      %v1402 = vpop.f32.mrb[0].mxu0
      %v1403 = vadd.f32 %v1210, %v1402
      %v1404 = vpop.f32.mrb[0].mxu0
      %1405 = vmatprep.mubr.f32.mxu0 0.0
      %1406 = vmatmul.mubr.f32.gmra.mrb[0].mxu0 %v1282
      %v1407 = vpop.f32.mrb[0].mxu0
      %v1408 = vadd.f32 %v1215, %v1407
      %v1409 = vpop.f32.mrb[0].mxu0
      %1410 = vmatprep.mubr.f32.mxu0 0.0
      %1411 = vmatmul.mubr.f32.gmra.mrb[0].mxu0 %v1285
      %v1412 = vpop.f32.mrb[0].mxu0
      %v1413 = vadd.f32 %v1220, %v1412
      %v1414 = vpop.f32.mrb[0].mxu0
      %1415 = vmatprep.mubr.f32.mxu0 0.0
      %1416 = vmatmul.mubr.f32.gmra.mrb[0].mxu0 %v1288
      %v1417 = vpop.f32.mrb[0].mxu0
      %v1418 = vadd.f32 %v1225, %v1417
      %v1419 = vpop.f32.mrb[0].mxu0
      %1420 = vmatprep.mubr.f32.mxu0 0.0
      %1421 = vmatmul.mubr.f32.gmra.mrb[0].mxu0 %v1291
      %v1422 = vpop.f32.mrb[0].mxu0
      %v1423 = vadd.f32 %v1230, %v1422
      %v1424 = vpop.f32.mrb[0].mxu0
      %1425 = vmatprep.mubr.f32.mxu0 0.0
      %1426 = vmatmul.mubr.f32.gmra.mrb[0].mxu0 %v1294
      %v1427 = vpop.f32.mrb[0].mxu0
      %v1428 = vadd.f32 %v1235, %v1427
      %v1429 = vpop.f32.mrb[0].mxu0
      %1430 = vmatprep.mubr.f32.mxu0 0.0
      %1431 = vmatmul.mubr.f32.gmra.mrb[0].mxu0 %v1297
      %v1432 = vpop.f32.mrb[0].mxu0
      %v1433 = vadd.f32 %v1240, %v1432
      %v1434 = vpop.f32.mrb[0].mxu0
      %1435 = vmatprep.mubr.f32.mxu0 0.0
      %1436 = vmatmul.mubr.f32.gmra.mrb[0].mxu0 %v1300
      %v1437 = vpop.f32.mrb[0].mxu0
      %v1438 = vadd.f32 %v1245, %v1437
      %v1439 = vpop.f32.mrb[0].mxu0
      %1440 = vmatprep.mubr.f32.mxu0 0.0
      %1441 = vmatmul.mubr.f32.gmra.mrb[0].mxu0 %v1303
      %v1442 = vpop.f32.mrb[0].mxu0
      %v1443 = vadd.f32 %v1250, %v1442
      %v1444 = vpop.f32.mrb[0].mxu0
      %1445 = vmatprep.mubr.f32.mxu0 0.0
      %1446 = vmatmul.mubr.f32.gmra.mrb[0].mxu0 %v1306
      %v1447 = vpop.f32.mrb[0].mxu0
      %v1448 = vadd.f32 %v1255, %v1447
      %v1449 = vpop.f32.mrb[0].mxu0
      %1450 = vmatprep.mubr.f32.mxu0 0.0
      %1451 = vmatmul.mubr.f32.gmra.mrb[0].mxu0 %v1309
      %v1452 = vpop.f32.mrb[0].mxu0
      %v1453 = vadd.f32 %v1260, %v1452
      %v1454 = vpop.f32.mrb[0].mxu0
      %1455 = vdwg.mxu0
      %v1456 = vld [vmem:[#allocation2 + $0x2] sm:$0xff]
      %v1457 = vld [vmem:[#allocation2 + $0xa] sm:$0xff]
      %v1458 = vld [vmem:[#allocation2 + $0x1a] sm:$0xff]
      %v1459 = vld [vmem:[#allocation2 + $0x22] sm:$0xff]
      %v1460 = vld [vmem:[#allocation2 + $0x32] sm:$0xff]
      %v1461 = vld [vmem:[#allocation2 + $0x3a] sm:$0xff]
      %v1462 = vld [vmem:[#allocation2 + $0x4a] sm:$0xff]
      %v1463 = vld [vmem:[#allocation2 + $0x52] sm:$0xff]
      %v1464 = vld [vmem:[#allocation2 + $0x62] sm:$0xff]
      %v1465 = vld [vmem:[#allocation2 + $0x6a] sm:$0xff]
      %v1466 = vld [vmem:[#allocation2 + $0x7a] sm:$0xff]
      %v1467 = vld [vmem:[#allocation2 + $0x82] sm:$0xff]
      %v1468 = vld [vmem:[#allocation2 + $0x92] sm:$0xff]
      %v1469 = vld [vmem:[#allocation2 + $0x9a] sm:$0xff]
      %v1470 = vld [vmem:[#allocation2 + $0xaa] sm:$0xff]
      %v1471 = vld [vmem:[#allocation2 + $0xb2] sm:$0xff]
      %s1472 = scalar_lea.vmem %s5, 16
      %v1473 = vld [vmem:[%s1472] sm:$0xff]
      %v1475 = vsel %vm492, %v1456, 0
      %v1478 = vsel %vm492, %v1457, 0
      %v1481 = vsel %vm492, %v1458, 0
      %v1484 = vsel %vm492, %v1459, 0
      %v1487 = vsel %vm492, %v1460, 0
      %v1490 = vsel %vm492, %v1461, 0
      %v1493 = vsel %vm492, %v1462, 0
      %v1496 = vsel %vm492, %v1463, 0
      %v1499 = vsel %vm492, %v1464, 0
      %v1502 = vsel %vm492, %v1465, 0
      %v1505 = vsel %vm492, %v1466, 0
      %v1508 = vsel %vm492, %v1467, 0
      %v1511 = vsel %vm492, %v1468, 0
      %v1514 = vsel %vm492, %v1469, 0
      %v1517 = vsel %vm492, %v1470, 0
      %v1520 = vsel %vm492, %v1471, 0
      %1522 = vmatprep.subr.mxu0 0.0
      %1523 = vmatpush1.msra.mxu0 %v1473
      %1524 = vmatprep.subr.mxu0 0.0
      %1525 = vmatpush1.msra.mxu0 0.0
      %1526 = vmatprep.subr.mxu0 0.0
      %1527 = vmatpush1.msra.mxu0 0.0
      %1528 = vmatprep.subr.mxu0 0.0
      %1529 = vmatpush1.msra.mxu0 0.0
      %1530 = vmatprep.subr.mxu0 0.0
      %1531 = vmatpush1.msra.mxu0 0.0
      %1532 = vmatprep.subr.mxu0 0.0
      %1533 = vmatpush1.msra.mxu0 0.0
      %1534 = vmatprep.subr.mxu0 0.0
      %1535 = vmatpush1.msra.mxu0 0.0
      %1536 = vmatprep.subr.mxu0 0.0
      %1537 = vmatpush1.msra.mxu0 0.0
      %1538 = vmatprep.subr.mxu0 0.0
      %1539 = vmatpush1.msra.mxu0 0.0
      %1540 = vmatprep.subr.mxu0 0.0
      %1541 = vmatpush1.msra.mxu0 0.0
      %1542 = vmatprep.subr.mxu0 0.0
      %1543 = vmatpush1.msra.mxu0 0.0
      %1544 = vmatprep.subr.mxu0 0.0
      %1545 = vmatpush1.msra.mxu0 0.0
      %1546 = vmatprep.subr.mxu0 0.0
      %1547 = vmatpush1.msra.mxu0 0.0
      %1548 = vmatprep.subr.mxu0 0.0
      %1549 = vmatpush1.msra.mxu0 0.0
      %1550 = vmatprep.subr.mxu0 0.0
      %1551 = vmatpush1.msra.mxu0 0.0
      %1552 = vmatprep.subr.mxu0 0.0
      %1553 = vmatpush1.msra.mxu0 0.0
      %1554 = vmatprep.subr.mxu0 0.0
      %1555 = vmatpush1.msra.mxu0 0.0
      %1556 = vmatprep.subr.mxu0 0.0
      %1557 = vmatpush1.msra.mxu0 0.0
      %1558 = vmatprep.subr.mxu0 0.0
      %1559 = vmatpush1.msra.mxu0 0.0
      %1560 = vmatprep.subr.mxu0 0.0
      %1561 = vmatpush1.msra.mxu0 0.0
      %1562 = vmatprep.subr.mxu0 0.0
      %1563 = vmatpush1.msra.mxu0 0.0
      %1564 = vmatprep.subr.mxu0 0.0
      %1565 = vmatpush1.msra.mxu0 0.0
      %1566 = vmatprep.subr.mxu0 0.0
      %1567 = vmatpush1.msra.mxu0 0.0
      %1568 = vmatprep.subr.mxu0 0.0
      %1569 = vmatpush1.msra.mxu0 0.0
      %1570 = vmatprep.subr.mxu0 0.0
      %1571 = vmatpush1.msra.mxu0 0.0
      %1572 = vmatprep.subr.mxu0 0.0
      %1573 = vmatpush1.msra.mxu0 0.0
      %1574 = vmatprep.subr.mxu0 0.0
      %1575 = vmatpush1.msra.mxu0 0.0
      %1576 = vmatprep.subr.mxu0 0.0
      %1577 = vmatpush1.msra.mxu0 0.0
      %1578 = vmatprep.subr.mxu0 0.0
      %1579 = vmatpush1.msra.mxu0 0.0
      %1580 = vmatprep.subr.mxu0 0.0
      %1581 = vmatpush1.msra.mxu0 0.0
      %1582 = vmatprep.subr.mxu0 0.0
      %1583 = vmatpush1.msra.mxu0 0.0
      %1584 = vmatprep.subr.mxu0 0.0
      %1585 = vmatpush1.msra.mxu0 0.0
      %1586 = vmatprep.mubr.f32.mxu0 0.0
      %1587 = vmatmul.mubr.f32.gmra.mrb[0].mxu0 %v1475
      %v1588 = vpop.f32.mrb[0].mxu0
      %v1589 = vadd.f32 0.0, %v1588
      %v1590 = vpop.f32.mrb[0].mxu0
      %1591 = vmatprep.mubr.f32.mxu0 0.0
      %1592 = vmatmul.mubr.f32.gmra.mrb[0].mxu0 %v1478
      %v1593 = vpop.f32.mrb[0].mxu0
      %v1594 = vadd.f32 0.0, %v1593
      %v1595 = vpop.f32.mrb[0].mxu0
      %1596 = vmatprep.mubr.f32.mxu0 0.0
      %1597 = vmatmul.mubr.f32.gmra.mrb[0].mxu0 %v1481
      %v1598 = vpop.f32.mrb[0].mxu0
      %v1599 = vadd.f32 0.0, %v1598
      %v1600 = vpop.f32.mrb[0].mxu0
      %1601 = vmatprep.mubr.f32.mxu0 0.0
      %1602 = vmatmul.mubr.f32.gmra.mrb[0].mxu0 %v1484
      %v1603 = vpop.f32.mrb[0].mxu0
      %v1604 = vadd.f32 0.0, %v1603
      %v1605 = vpop.f32.mrb[0].mxu0
      %1606 = vmatprep.mubr.f32.mxu0 0.0
      %1607 = vmatmul.mubr.f32.gmra.mrb[0].mxu0 %v1487
      %v1608 = vpop.f32.mrb[0].mxu0
      %v1609 = vadd.f32 0.0, %v1608
      %v1610 = vpop.f32.mrb[0].mxu0
      %1611 = vmatprep.mubr.f32.mxu0 0.0
      %1612 = vmatmul.mubr.f32.gmra.mrb[0].mxu0 %v1490
      %v1613 = vpop.f32.mrb[0].mxu0
      %v1614 = vadd.f32 0.0, %v1613
      %v1615 = vpop.f32.mrb[0].mxu0
      %1616 = vmatprep.mubr.f32.mxu0 0.0
      %1617 = vmatmul.mubr.f32.gmra.mrb[0].mxu0 %v1493
      %v1618 = vpop.f32.mrb[0].mxu0
      %v1619 = vadd.f32 0.0, %v1618
      %v1620 = vpop.f32.mrb[0].mxu0
      %1621 = vmatprep.mubr.f32.mxu0 0.0
      %1622 = vmatmul.mubr.f32.gmra.mrb[0].mxu0 %v1496
      %v1623 = vpop.f32.mrb[0].mxu0
      %v1624 = vadd.f32 0.0, %v1623
      %v1625 = vpop.f32.mrb[0].mxu0
      %1626 = vmatprep.mubr.f32.mxu0 0.0
      %1627 = vmatmul.mubr.f32.gmra.mrb[0].mxu0 %v1499
      %v1628 = vpop.f32.mrb[0].mxu0
      %v1629 = vadd.f32 0.0, %v1628
      %v1630 = vpop.f32.mrb[0].mxu0
      %1631 = vmatprep.mubr.f32.mxu0 0.0
      %1632 = vmatmul.mubr.f32.gmra.mrb[0].mxu0 %v1502
      %v1633 = vpop.f32.mrb[0].mxu0
      %v1634 = vadd.f32 0.0, %v1633
      %v1635 = vpop.f32.mrb[0].mxu0
      %1636 = vmatprep.mubr.f32.mxu0 0.0
      %1637 = vmatmul.mubr.f32.gmra.mrb[0].mxu0 %v1505
      %v1638 = vpop.f32.mrb[0].mxu0
      %v1639 = vadd.f32 0.0, %v1638
      %v1640 = vpop.f32.mrb[0].mxu0
      %1641 = vmatprep.mubr.f32.mxu0 0.0
      %1642 = vmatmul.mubr.f32.gmra.mrb[0].mxu0 %v1508
      %v1643 = vpop.f32.mrb[0].mxu0
      %v1644 = vadd.f32 0.0, %v1643
      %v1645 = vpop.f32.mrb[0].mxu0
      %1646 = vmatprep.mubr.f32.mxu0 0.0
      %1647 = vmatmul.mubr.f32.gmra.mrb[0].mxu0 %v1511
      %v1648 = vpop.f32.mrb[0].mxu0
      %v1649 = vadd.f32 0.0, %v1648
      %v1650 = vpop.f32.mrb[0].mxu0
      %1651 = vmatprep.mubr.f32.mxu0 0.0
      %1652 = vmatmul.mubr.f32.gmra.mrb[0].mxu0 %v1514
      %v1653 = vpop.f32.mrb[0].mxu0
      %v1654 = vadd.f32 0.0, %v1653
      %v1655 = vpop.f32.mrb[0].mxu0
      %1656 = vmatprep.mubr.f32.mxu0 0.0
      %1657 = vmatmul.mubr.f32.gmra.mrb[0].mxu0 %v1517
      %v1658 = vpop.f32.mrb[0].mxu0
      %v1659 = vadd.f32 0.0, %v1658
      %v1660 = vpop.f32.mrb[0].mxu0
      %1661 = vmatprep.mubr.f32.mxu0 0.0
      %1662 = vmatmul.mubr.f32.gmra.mrb[0].mxu0 %v1520
      %v1663 = vpop.f32.mrb[0].mxu0
      %v1664 = vadd.f32 0.0, %v1663
      %v1665 = vpop.f32.mrb[0].mxu0
      %1666 = vdwg.mxu0
      %v1667 = vadd.f32 %v1378, %v1589
      %v1668 = vadd.f32 %v1383, %v1594
      %v1669 = vadd.f32 %v1388, %v1599
      %v1670 = vadd.f32 %v1393, %v1604
      %v1671 = vadd.f32 %v1398, %v1609
      %v1672 = vadd.f32 %v1403, %v1614
      %v1673 = vadd.f32 %v1408, %v1619
      %v1674 = vadd.f32 %v1413, %v1624
      %v1675 = vadd.f32 %v1418, %v1629
      %v1676 = vadd.f32 %v1423, %v1634
      %v1677 = vadd.f32 %v1428, %v1639
      %v1678 = vadd.f32 %v1433, %v1644
      %v1679 = vadd.f32 %v1438, %v1649
      %v1680 = vadd.f32 %v1443, %v1654
      %v1681 = vadd.f32 %v1448, %v1659
      %v1682 = vadd.f32 %v1453, %v1664
      %v1683 = vld [vmem:[%s798] sm:$0xff]
      %v1684 = vld [vmem:[%s798 + $0x8] sm:$0xff]
      %v1685 = vld [vmem:[%s798 + $0x18] sm:$0xff]
      %v1686 = vld [vmem:[%s798 + $0x20] sm:$0xff]
      %v1687 = vld [vmem:[%s798 + $0x30] sm:$0xff]
      %v1688 = vld [vmem:[%s798 + $0x38] sm:$0xff]
      %v1689 = vld [vmem:[%s798 + $0x48] sm:$0xff]
      %v1690 = vld [vmem:[%s798 + $0x50] sm:$0xff]
      %v1691 = vld [vmem:[%s798 + $0x60] sm:$0xff]
      %v1692 = vld [vmem:[%s798 + $0x68] sm:$0xff]
      %v1693 = vld [vmem:[%s798 + $0x78] sm:$0xff]
      %v1694 = vld [vmem:[%s798 + $0x80] sm:$0xff]
      %v1695 = vld [vmem:[%s798 + $0x90] sm:$0xff]
      %v1696 = vld [vmem:[%s798 + $0x98] sm:$0xff]
      %v1697 = vld [vmem:[%s798 + $0xa8] sm:$0xff]
      %v1698 = vld [vmem:[%s798 + $0xb0] sm:$0xff]
      %s1699 = scalar_lea.vmem %s5, 24
      %v1700 = vld [vmem:[%s1699] sm:$0xff]
      %v1702 = vsel %vm492, %v1683, 0
      %v1705 = vsel %vm492, %v1684, 0
      %v1708 = vsel %vm492, %v1685, 0
      %v1711 = vsel %vm492, %v1686, 0
      %v1714 = vsel %vm492, %v1687, 0
      %v1717 = vsel %vm492, %v1688, 0
      %v1720 = vsel %vm492, %v1689, 0
      %v1723 = vsel %vm492, %v1690, 0
      %v1726 = vsel %vm492, %v1691, 0
      %v1729 = vsel %vm492, %v1692, 0
      %v1732 = vsel %vm492, %v1693, 0
      %v1735 = vsel %vm492, %v1694, 0
      %v1738 = vsel %vm492, %v1695, 0
      %v1741 = vsel %vm492, %v1696, 0
      %v1744 = vsel %vm492, %v1697, 0
      %v1747 = vsel %vm492, %v1698, 0
      %1749 = vmatprep.subr.mxu0 0.0
      %1750 = vmatpush1.msra.mxu0 %v1700
      %1751 = vmatprep.subr.mxu0 0.0
      %1752 = vmatpush1.msra.mxu0 0.0
      %1753 = vmatprep.subr.mxu0 0.0
      %1754 = vmatpush1.msra.mxu0 0.0
      %1755 = vmatprep.subr.mxu0 0.0
      %1756 = vmatpush1.msra.mxu0 0.0
      %1757 = vmatprep.subr.mxu0 0.0
      %1758 = vmatpush1.msra.mxu0 0.0
      %1759 = vmatprep.subr.mxu0 0.0
      %1760 = vmatpush1.msra.mxu0 0.0
      %1761 = vmatprep.subr.mxu0 0.0
      %1762 = vmatpush1.msra.mxu0 0.0
      %1763 = vmatprep.subr.mxu0 0.0
      %1764 = vmatpush1.msra.mxu0 0.0
      %1765 = vmatprep.subr.mxu0 0.0
      %1766 = vmatpush1.msra.mxu0 0.0
      %1767 = vmatprep.subr.mxu0 0.0
      %1768 = vmatpush1.msra.mxu0 0.0
      %1769 = vmatprep.subr.mxu0 0.0
      %1770 = vmatpush1.msra.mxu0 0.0
      %1771 = vmatprep.subr.mxu0 0.0
      %1772 = vmatpush1.msra.mxu0 0.0
      %1773 = vmatprep.subr.mxu0 0.0
      %1774 = vmatpush1.msra.mxu0 0.0
      %1775 = vmatprep.subr.mxu0 0.0
      %1776 = vmatpush1.msra.mxu0 0.0
      %1777 = vmatprep.subr.mxu0 0.0
      %1778 = vmatpush1.msra.mxu0 0.0
      %1779 = vmatprep.subr.mxu0 0.0
      %1780 = vmatpush1.msra.mxu0 0.0
      %1781 = vmatprep.subr.mxu0 0.0
      %1782 = vmatpush1.msra.mxu0 0.0
      %1783 = vmatprep.subr.mxu0 0.0
      %1784 = vmatpush1.msra.mxu0 0.0
      %1785 = vmatprep.subr.mxu0 0.0
      %1786 = vmatpush1.msra.mxu0 0.0
      %1787 = vmatprep.subr.mxu0 0.0
      %1788 = vmatpush1.msra.mxu0 0.0
      %1789 = vmatprep.subr.mxu0 0.0
      %1790 = vmatpush1.msra.mxu0 0.0
      %1791 = vmatprep.subr.mxu0 0.0
      %1792 = vmatpush1.msra.mxu0 0.0
      %1793 = vmatprep.subr.mxu0 0.0
      %1794 = vmatpush1.msra.mxu0 0.0
      %1795 = vmatprep.subr.mxu0 0.0
      %1796 = vmatpush1.msra.mxu0 0.0
      %1797 = vmatprep.subr.mxu0 0.0
      %1798 = vmatpush1.msra.mxu0 0.0
      %1799 = vmatprep.subr.mxu0 0.0
      %1800 = vmatpush1.msra.mxu0 0.0
      %1801 = vmatprep.subr.mxu0 0.0
      %1802 = vmatpush1.msra.mxu0 0.0
      %1803 = vmatprep.subr.mxu0 0.0
      %1804 = vmatpush1.msra.mxu0 0.0
      %1805 = vmatprep.subr.mxu0 0.0
      %1806 = vmatpush1.msra.mxu0 0.0
      %1807 = vmatprep.subr.mxu0 0.0
      %1808 = vmatpush1.msra.mxu0 0.0
      %1809 = vmatprep.subr.mxu0 0.0
      %1810 = vmatpush1.msra.mxu0 0.0
      %1811 = vmatprep.subr.mxu0 0.0
      %1812 = vmatpush1.msra.mxu0 0.0
      %1813 = vmatprep.mubr.f32.mxu0 0.0
      %1814 = vmatmul.mubr.f32.gmra.mrb[0].mxu0 %v1702
      %v1815 = vpop.f32.mrb[0].mxu0
      %v1816 = vadd.f32 0.0, %v1815
      %v1817 = vpop.f32.mrb[0].mxu0
      %1818 = vmatprep.mubr.f32.mxu0 0.0
      %1819 = vmatmul.mubr.f32.gmra.mrb[0].mxu0 %v1705
      %v1820 = vpop.f32.mrb[0].mxu0
      %v1821 = vadd.f32 0.0, %v1820
      %v1822 = vpop.f32.mrb[0].mxu0
      %1823 = vmatprep.mubr.f32.mxu0 0.0
      %1824 = vmatmul.mubr.f32.gmra.mrb[0].mxu0 %v1708
      %v1825 = vpop.f32.mrb[0].mxu0
      %v1826 = vadd.f32 0.0, %v1825
      %v1827 = vpop.f32.mrb[0].mxu0
      %1828 = vmatprep.mubr.f32.mxu0 0.0
      %1829 = vmatmul.mubr.f32.gmra.mrb[0].mxu0 %v1711
      %v1830 = vpop.f32.mrb[0].mxu0
      %v1831 = vadd.f32 0.0, %v1830
      %v1832 = vpop.f32.mrb[0].mxu0
      %1833 = vmatprep.mubr.f32.mxu0 0.0
      %1834 = vmatmul.mubr.f32.gmra.mrb[0].mxu0 %v1714
      %v1835 = vpop.f32.mrb[0].mxu0
      %v1836 = vadd.f32 0.0, %v1835
      %v1837 = vpop.f32.mrb[0].mxu0
      %1838 = vmatprep.mubr.f32.mxu0 0.0
      %1839 = vmatmul.mubr.f32.gmra.mrb[0].mxu0 %v1717
      %v1840 = vpop.f32.mrb[0].mxu0
      %v1841 = vadd.f32 0.0, %v1840
      %v1842 = vpop.f32.mrb[0].mxu0
      %1843 = vmatprep.mubr.f32.mxu0 0.0
      %1844 = vmatmul.mubr.f32.gmra.mrb[0].mxu0 %v1720
      %v1845 = vpop.f32.mrb[0].mxu0
      %v1846 = vadd.f32 0.0, %v1845
      %v1847 = vpop.f32.mrb[0].mxu0
      %1848 = vmatprep.mubr.f32.mxu0 0.0
      %1849 = vmatmul.mubr.f32.gmra.mrb[0].mxu0 %v1723
      %v1850 = vpop.f32.mrb[0].mxu0
      %v1851 = vadd.f32 0.0, %v1850
      %v1852 = vpop.f32.mrb[0].mxu0
      %1853 = vmatprep.mubr.f32.mxu0 0.0
      %1854 = vmatmul.mubr.f32.gmra.mrb[0].mxu0 %v1726
      %v1855 = vpop.f32.mrb[0].mxu0
      %v1856 = vadd.f32 0.0, %v1855
      %v1857 = vpop.f32.mrb[0].mxu0
      %1858 = vmatprep.mubr.f32.mxu0 0.0
      %1859 = vmatmul.mubr.f32.gmra.mrb[0].mxu0 %v1729
      %v1860 = vpop.f32.mrb[0].mxu0
      %v1861 = vadd.f32 0.0, %v1860
      %v1862 = vpop.f32.mrb[0].mxu0
      %1863 = vmatprep.mubr.f32.mxu0 0.0
      %1864 = vmatmul.mubr.f32.gmra.mrb[0].mxu0 %v1732
      %v1865 = vpop.f32.mrb[0].mxu0
      %v1866 = vadd.f32 0.0, %v1865
      %v1867 = vpop.f32.mrb[0].mxu0
      %1868 = vmatprep.mubr.f32.mxu0 0.0
      %1869 = vmatmul.mubr.f32.gmra.mrb[0].mxu0 %v1735
      %v1870 = vpop.f32.mrb[0].mxu0
      %v1871 = vadd.f32 0.0, %v1870
      %v1872 = vpop.f32.mrb[0].mxu0
      %1873 = vmatprep.mubr.f32.mxu0 0.0
      %1874 = vmatmul.mubr.f32.gmra.mrb[0].mxu0 %v1738
      %v1875 = vpop.f32.mrb[0].mxu0
      %v1876 = vadd.f32 0.0, %v1875
      %v1877 = vpop.f32.mrb[0].mxu0
      %1878 = vmatprep.mubr.f32.mxu0 0.0
      %1879 = vmatmul.mubr.f32.gmra.mrb[0].mxu0 %v1741
      %v1880 = vpop.f32.mrb[0].mxu0
      %v1881 = vadd.f32 0.0, %v1880
      %v1882 = vpop.f32.mrb[0].mxu0
      %1883 = vmatprep.mubr.f32.mxu0 0.0
      %1884 = vmatmul.mubr.f32.gmra.mrb[0].mxu0 %v1744
      %v1885 = vpop.f32.mrb[0].mxu0
      %v1886 = vadd.f32 0.0, %v1885
      %v1887 = vpop.f32.mrb[0].mxu0
      %1888 = vmatprep.mubr.f32.mxu0 0.0
      %1889 = vmatmul.mubr.f32.gmra.mrb[0].mxu0 %v1747
      %v1890 = vpop.f32.mrb[0].mxu0
      %v1891 = vadd.f32 0.0, %v1890
      %v1892 = vpop.f32.mrb[0].mxu0
      %1893 = vdwg.mxu0
      %v1894 = vadd.f32 %v1667, %v1816
      %v1895 = vadd.f32 %v1668, %v1821
      %v1896 = vadd.f32 %v1669, %v1826
      %v1897 = vadd.f32 %v1670, %v1831
      %v1898 = vadd.f32 %v1671, %v1836
      %v1899 = vadd.f32 %v1672, %v1841
      %v1900 = vadd.f32 %v1673, %v1846
      %v1901 = vadd.f32 %v1674, %v1851
      %v1902 = vadd.f32 %v1675, %v1856
      %v1903 = vadd.f32 %v1676, %v1861
      %v1904 = vadd.f32 %v1677, %v1866
      %v1905 = vadd.f32 %v1678, %v1871
      %v1906 = vadd.f32 %v1679, %v1876
      %v1907 = vadd.f32 %v1680, %v1881
      %v1908 = vadd.f32 %v1681, %v1886
      %v1909 = vadd.f32 %v1682, %v1891
      %v1910 = vld [vmem:[%s798 + $0x1] sm:$0xff]
      %v1911 = vld [vmem:[%s798 + $0x9] sm:$0xff]
      %v1912 = vld [vmem:[%s798 + $0x19] sm:$0xff]
      %v1913 = vld [vmem:[%s798 + $0x21] sm:$0xff]
      %v1914 = vld [vmem:[%s798 + $0x31] sm:$0xff]
      %v1915 = vld [vmem:[%s798 + $0x39] sm:$0xff]
      %v1916 = vld [vmem:[%s798 + $0x49] sm:$0xff]
      %v1917 = vld [vmem:[%s798 + $0x51] sm:$0xff]
      %v1918 = vld [vmem:[%s798 + $0x61] sm:$0xff]
      %v1919 = vld [vmem:[%s798 + $0x69] sm:$0xff]
      %v1920 = vld [vmem:[%s798 + $0x79] sm:$0xff]
      %v1921 = vld [vmem:[%s798 + $0x81] sm:$0xff]
      %v1922 = vld [vmem:[%s798 + $0x91] sm:$0xff]
      %v1923 = vld [vmem:[%s798 + $0x99] sm:$0xff]
      %v1924 = vld [vmem:[%s798 + $0xa9] sm:$0xff]
      %v1925 = vld [vmem:[%s798 + $0xb1] sm:$0xff]
      %s1926 = scalar_lea.vmem %s5, 32
      %v1927 = vld [vmem:[%s1926] sm:$0xff]
      %v1929 = vsel %vm492, %v1910, 0
      %v1932 = vsel %vm492, %v1911, 0
      %v1935 = vsel %vm492, %v1912, 0
      %v1938 = vsel %vm492, %v1913, 0
      %v1941 = vsel %vm492, %v1914, 0
      %v1944 = vsel %vm492, %v1915, 0
      %v1947 = vsel %vm492, %v1916, 0
      %v1950 = vsel %vm492, %v1917, 0
      %v1953 = vsel %vm492, %v1918, 0
      %v1956 = vsel %vm492, %v1919, 0
      %v1959 = vsel %vm492, %v1920, 0
      %v1962 = vsel %vm492, %v1921, 0
      %v1965 = vsel %vm492, %v1922, 0
      %v1968 = vsel %vm492, %v1923, 0
      %v1971 = vsel %vm492, %v1924, 0
      %v1974 = vsel %vm492, %v1925, 0
      %1976 = vmatprep.subr.mxu0 0.0
      %1977 = vmatpush1.msra.mxu0 %v1927
      %1978 = vmatprep.subr.mxu0 0.0
      %1979 = vmatpush1.msra.mxu0 0.0
      %1980 = vmatprep.subr.mxu0 0.0
      %1981 = vmatpush1.msra.mxu0 0.0
      %1982 = vmatprep.subr.mxu0 0.0
      %1983 = vmatpush1.msra.mxu0 0.0
      %1984 = vmatprep.subr.mxu0 0.0
      %1985 = vmatpush1.msra.mxu0 0.0
      %1986 = vmatprep.subr.mxu0 0.0
      %1987 = vmatpush1.msra.mxu0 0.0
      %1988 = vmatprep.subr.mxu0 0.0
      %1989 = vmatpush1.msra.mxu0 0.0
      %1990 = vmatprep.subr.mxu0 0.0
      %1991 = vmatpush1.msra.mxu0 0.0
      %1992 = vmatprep.subr.mxu0 0.0
      %1993 = vmatpush1.msra.mxu0 0.0
      %1994 = vmatprep.subr.mxu0 0.0
      %1995 = vmatpush1.msra.mxu0 0.0
      %1996 = vmatprep.subr.mxu0 0.0
      %1997 = vmatpush1.msra.mxu0 0.0
      %1998 = vmatprep.subr.mxu0 0.0
      %1999 = vmatpush1.msra.mxu0 0.0
      %2000 = vmatprep.subr.mxu0 0.0
      %2001 = vmatpush1.msra.mxu0 0.0
      %2002 = vmatprep.subr.mxu0 0.0
      %2003 = vmatpush1.msra.mxu0 0.0
      %2004 = vmatprep.subr.mxu0 0.0
      %2005 = vmatpush1.msra.mxu0 0.0
      %2006 = vmatprep.subr.mxu0 0.0
      %2007 = vmatpush1.msra.mxu0 0.0
      %2008 = vmatprep.subr.mxu0 0.0
      %2009 = vmatpush1.msra.mxu0 0.0
      %2010 = vmatprep.subr.mxu0 0.0
      %2011 = vmatpush1.msra.mxu0 0.0
      %2012 = vmatprep.subr.mxu0 0.0
      %2013 = vmatpush1.msra.mxu0 0.0
      %2014 = vmatprep.subr.mxu0 0.0
      %2015 = vmatpush1.msra.mxu0 0.0
      %2016 = vmatprep.subr.mxu0 0.0
      %2017 = vmatpush1.msra.mxu0 0.0
      %2018 = vmatprep.subr.mxu0 0.0
      %2019 = vmatpush1.msra.mxu0 0.0
      %2020 = vmatprep.subr.mxu0 0.0
      %2021 = vmatpush1.msra.mxu0 0.0
      %2022 = vmatprep.subr.mxu0 0.0
      %2023 = vmatpush1.msra.mxu0 0.0
      %2024 = vmatprep.subr.mxu0 0.0
      %2025 = vmatpush1.msra.mxu0 0.0
      %2026 = vmatprep.subr.mxu0 0.0
      %2027 = vmatpush1.msra.mxu0 0.0
      %2028 = vmatprep.subr.mxu0 0.0
      %2029 = vmatpush1.msra.mxu0 0.0
      %2030 = vmatprep.subr.mxu0 0.0
      %2031 = vmatpush1.msra.mxu0 0.0
      %2032 = vmatprep.subr.mxu0 0.0
      %2033 = vmatpush1.msra.mxu0 0.0
      %2034 = vmatprep.subr.mxu0 0.0
      %2035 = vmatpush1.msra.mxu0 0.0
      %2036 = vmatprep.subr.mxu0 0.0
      %2037 = vmatpush1.msra.mxu0 0.0
      %2038 = vmatprep.subr.mxu0 0.0
      %2039 = vmatpush1.msra.mxu0 0.0
      %2040 = vmatprep.mubr.f32.mxu0 0.0
      %2041 = vmatmul.mubr.f32.gmra.mrb[0].mxu0 %v1929
      %v2042 = vpop.f32.mrb[0].mxu0
      %v2043 = vadd.f32 0.0, %v2042
      %v2044 = vpop.f32.mrb[0].mxu0
      %2045 = vmatprep.mubr.f32.mxu0 0.0
      %2046 = vmatmul.mubr.f32.gmra.mrb[0].mxu0 %v1932
      %v2047 = vpop.f32.mrb[0].mxu0
      %v2048 = vadd.f32 0.0, %v2047
      %v2049 = vpop.f32.mrb[0].mxu0
      %2050 = vmatprep.mubr.f32.mxu0 0.0
      %2051 = vmatmul.mubr.f32.gmra.mrb[0].mxu0 %v1935
      %v2052 = vpop.f32.mrb[0].mxu0
      %v2053 = vadd.f32 0.0, %v2052
      %v2054 = vpop.f32.mrb[0].mxu0
      %2055 = vmatprep.mubr.f32.mxu0 0.0
      %2056 = vmatmul.mubr.f32.gmra.mrb[0].mxu0 %v1938
      %v2057 = vpop.f32.mrb[0].mxu0
      %v2058 = vadd.f32 0.0, %v2057
      %v2059 = vpop.f32.mrb[0].mxu0
      %2060 = vmatprep.mubr.f32.mxu0 0.0
      %2061 = vmatmul.mubr.f32.gmra.mrb[0].mxu0 %v1941
      %v2062 = vpop.f32.mrb[0].mxu0
      %v2063 = vadd.f32 0.0, %v2062
      %v2064 = vpop.f32.mrb[0].mxu0
      %2065 = vmatprep.mubr.f32.mxu0 0.0
      %2066 = vmatmul.mubr.f32.gmra.mrb[0].mxu0 %v1944
      %v2067 = vpop.f32.mrb[0].mxu0
      %v2068 = vadd.f32 0.0, %v2067
      %v2069 = vpop.f32.mrb[0].mxu0
      %2070 = vmatprep.mubr.f32.mxu0 0.0
      %2071 = vmatmul.mubr.f32.gmra.mrb[0].mxu0 %v1947
      %v2072 = vpop.f32.mrb[0].mxu0
      %v2073 = vadd.f32 0.0, %v2072
      %v2074 = vpop.f32.mrb[0].mxu0
      %2075 = vmatprep.mubr.f32.mxu0 0.0
      %2076 = vmatmul.mubr.f32.gmra.mrb[0].mxu0 %v1950
      %v2077 = vpop.f32.mrb[0].mxu0
      %v2078 = vadd.f32 0.0, %v2077
      %v2079 = vpop.f32.mrb[0].mxu0
      %2080 = vmatprep.mubr.f32.mxu0 0.0
      %2081 = vmatmul.mubr.f32.gmra.mrb[0].mxu0 %v1953
      %v2082 = vpop.f32.mrb[0].mxu0
      %v2083 = vadd.f32 0.0, %v2082
      %v2084 = vpop.f32.mrb[0].mxu0
      %2085 = vmatprep.mubr.f32.mxu0 0.0
      %2086 = vmatmul.mubr.f32.gmra.mrb[0].mxu0 %v1956
      %v2087 = vpop.f32.mrb[0].mxu0
      %v2088 = vadd.f32 0.0, %v2087
      %v2089 = vpop.f32.mrb[0].mxu0
      %2090 = vmatprep.mubr.f32.mxu0 0.0
      %2091 = vmatmul.mubr.f32.gmra.mrb[0].mxu0 %v1959
      %v2092 = vpop.f32.mrb[0].mxu0
      %v2093 = vadd.f32 0.0, %v2092
      %v2094 = vpop.f32.mrb[0].mxu0
      %2095 = vmatprep.mubr.f32.mxu0 0.0
      %2096 = vmatmul.mubr.f32.gmra.mrb[0].mxu0 %v1962
      %v2097 = vpop.f32.mrb[0].mxu0
      %v2098 = vadd.f32 0.0, %v2097
      %v2099 = vpop.f32.mrb[0].mxu0
      %2100 = vmatprep.mubr.f32.mxu0 0.0
      %2101 = vmatmul.mubr.f32.gmra.mrb[0].mxu0 %v1965
      %v2102 = vpop.f32.mrb[0].mxu0
      %v2103 = vadd.f32 0.0, %v2102
      %v2104 = vpop.f32.mrb[0].mxu0
      %2105 = vmatprep.mubr.f32.mxu0 0.0
      %2106 = vmatmul.mubr.f32.gmra.mrb[0].mxu0 %v1968
      %v2107 = vpop.f32.mrb[0].mxu0
      %v2108 = vadd.f32 0.0, %v2107
      %v2109 = vpop.f32.mrb[0].mxu0
      %2110 = vmatprep.mubr.f32.mxu0 0.0
      %2111 = vmatmul.mubr.f32.gmra.mrb[0].mxu0 %v1971
      %v2112 = vpop.f32.mrb[0].mxu0
      %v2113 = vadd.f32 0.0, %v2112
      %v2114 = vpop.f32.mrb[0].mxu0
      %2115 = vmatprep.mubr.f32.mxu0 0.0
      %2116 = vmatmul.mubr.f32.gmra.mrb[0].mxu0 %v1974
      %v2117 = vpop.f32.mrb[0].mxu0
      %v2118 = vadd.f32 0.0, %v2117
      %v2119 = vpop.f32.mrb[0].mxu0
      %2120 = vdwg.mxu0
      %v2121 = vadd.f32 %v1894, %v2043
      %v2122 = vadd.f32 %v1895, %v2048
      %v2123 = vadd.f32 %v1896, %v2053
      %v2124 = vadd.f32 %v1897, %v2058
      %v2125 = vadd.f32 %v1898, %v2063
      %v2126 = vadd.f32 %v1899, %v2068
      %v2127 = vadd.f32 %v1900, %v2073
      %v2128 = vadd.f32 %v1901, %v2078
      %v2129 = vadd.f32 %v1902, %v2083
      %v2130 = vadd.f32 %v1903, %v2088
      %v2131 = vadd.f32 %v1904, %v2093
      %v2132 = vadd.f32 %v1905, %v2098
      %v2133 = vadd.f32 %v1906, %v2103
      %v2134 = vadd.f32 %v1907, %v2108
      %v2135 = vadd.f32 %v1908, %v2113
      %v2136 = vadd.f32 %v1909, %v2118
      %v2137 = vld [vmem:[%s798 + $0x2] sm:$0xff]
      %v2138 = vld [vmem:[%s798 + $0xa] sm:$0xff]
      %v2139 = vld [vmem:[%s798 + $0x1a] sm:$0xff]
      %v2140 = vld [vmem:[%s798 + $0x22] sm:$0xff]
      %v2141 = vld [vmem:[%s798 + $0x32] sm:$0xff]
      %v2142 = vld [vmem:[%s798 + $0x3a] sm:$0xff]
      %v2143 = vld [vmem:[%s798 + $0x4a] sm:$0xff]
      %v2144 = vld [vmem:[%s798 + $0x52] sm:$0xff]
      %v2145 = vld [vmem:[%s798 + $0x62] sm:$0xff]
      %v2146 = vld [vmem:[%s798 + $0x6a] sm:$0xff]
      %v2147 = vld [vmem:[%s798 + $0x7a] sm:$0xff]
      %v2148 = vld [vmem:[%s798 + $0x82] sm:$0xff]
      %v2149 = vld [vmem:[%s798 + $0x92] sm:$0xff]
      %v2150 = vld [vmem:[%s798 + $0x9a] sm:$0xff]
      %v2151 = vld [vmem:[%s798 + $0xaa] sm:$0xff]
      %v2152 = vld [vmem:[%s798 + $0xb2] sm:$0xff]
      %s2153 = scalar_lea.vmem %s5, 40
      %v2154 = vld [vmem:[%s2153] sm:$0xff]
      %v2156 = vsel %vm492, %v2137, 0
      %v2159 = vsel %vm492, %v2138, 0
      %v2162 = vsel %vm492, %v2139, 0
      %v2165 = vsel %vm492, %v2140, 0
      %v2168 = vsel %vm492, %v2141, 0
      %v2171 = vsel %vm492, %v2142, 0
      %v2174 = vsel %vm492, %v2143, 0
      %v2177 = vsel %vm492, %v2144, 0
      %v2180 = vsel %vm492, %v2145, 0
      %v2183 = vsel %vm492, %v2146, 0
      %v2186 = vsel %vm492, %v2147, 0
      %v2189 = vsel %vm492, %v2148, 0
      %v2192 = vsel %vm492, %v2149, 0
      %v2195 = vsel %vm492, %v2150, 0
      %v2198 = vsel %vm492, %v2151, 0
      %v2201 = vsel %vm492, %v2152, 0
      %2203 = vmatprep.subr.mxu0 0.0
      %2204 = vmatpush1.msra.mxu0 %v2154
      %2205 = vmatprep.subr.mxu0 0.0
      %2206 = vmatpush1.msra.mxu0 0.0
      %2207 = vmatprep.subr.mxu0 0.0
      %2208 = vmatpush1.msra.mxu0 0.0
      %2209 = vmatprep.subr.mxu0 0.0
      %2210 = vmatpush1.msra.mxu0 0.0
      %2211 = vmatprep.subr.mxu0 0.0
      %2212 = vmatpush1.msra.mxu0 0.0
      %2213 = vmatprep.subr.mxu0 0.0
      %2214 = vmatpush1.msra.mxu0 0.0
      %2215 = vmatprep.subr.mxu0 0.0
      %2216 = vmatpush1.msra.mxu0 0.0
      %2217 = vmatprep.subr.mxu0 0.0
      %2218 = vmatpush1.msra.mxu0 0.0
      %2219 = vmatprep.subr.mxu0 0.0
      %2220 = vmatpush1.msra.mxu0 0.0
      %2221 = vmatprep.subr.mxu0 0.0
      %2222 = vmatpush1.msra.mxu0 0.0
      %2223 = vmatprep.subr.mxu0 0.0
      %2224 = vmatpush1.msra.mxu0 0.0
      %2225 = vmatprep.subr.mxu0 0.0
      %2226 = vmatpush1.msra.mxu0 0.0
      %2227 = vmatprep.subr.mxu0 0.0
      %2228 = vmatpush1.msra.mxu0 0.0
      %2229 = vmatprep.subr.mxu0 0.0
      %2230 = vmatpush1.msra.mxu0 0.0
      %2231 = vmatprep.subr.mxu0 0.0
      %2232 = vmatpush1.msra.mxu0 0.0
      %2233 = vmatprep.subr.mxu0 0.0
      %2234 = vmatpush1.msra.mxu0 0.0
      %2235 = vmatprep.subr.mxu0 0.0
      %2236 = vmatpush1.msra.mxu0 0.0
      %2237 = vmatprep.subr.mxu0 0.0
      %2238 = vmatpush1.msra.mxu0 0.0
      %2239 = vmatprep.subr.mxu0 0.0
      %2240 = vmatpush1.msra.mxu0 0.0
      %2241 = vmatprep.subr.mxu0 0.0
      %2242 = vmatpush1.msra.mxu0 0.0
      %2243 = vmatprep.subr.mxu0 0.0
      %2244 = vmatpush1.msra.mxu0 0.0
      %2245 = vmatprep.subr.mxu0 0.0
      %2246 = vmatpush1.msra.mxu0 0.0
      %2247 = vmatprep.subr.mxu0 0.0
      %2248 = vmatpush1.msra.mxu0 0.0
      %2249 = vmatprep.subr.mxu0 0.0
      %2250 = vmatpush1.msra.mxu0 0.0
      %2251 = vmatprep.subr.mxu0 0.0
      %2252 = vmatpush1.msra.mxu0 0.0
      %2253 = vmatprep.subr.mxu0 0.0
      %2254 = vmatpush1.msra.mxu0 0.0
      %2255 = vmatprep.subr.mxu0 0.0
      %2256 = vmatpush1.msra.mxu0 0.0
      %2257 = vmatprep.subr.mxu0 0.0
      %2258 = vmatpush1.msra.mxu0 0.0
      %2259 = vmatprep.subr.mxu0 0.0
      %2260 = vmatpush1.msra.mxu0 0.0
      %2261 = vmatprep.subr.mxu0 0.0
      %2262 = vmatpush1.msra.mxu0 0.0
      %2263 = vmatprep.subr.mxu0 0.0
      %2264 = vmatpush1.msra.mxu0 0.0
      %2265 = vmatprep.subr.mxu0 0.0
      %2266 = vmatpush1.msra.mxu0 0.0
      %2267 = vmatprep.mubr.f32.mxu0 0.0
      %2268 = vmatmul.mubr.f32.gmra.mrb[0].mxu0 %v2156
      %v2269 = vpop.f32.mrb[0].mxu0
      %v2270 = vadd.f32 0.0, %v2269
      %v2271 = vpop.f32.mrb[0].mxu0
      %2272 = vmatprep.mubr.f32.mxu0 0.0
      %2273 = vmatmul.mubr.f32.gmra.mrb[0].mxu0 %v2159
      %v2274 = vpop.f32.mrb[0].mxu0
      %v2275 = vadd.f32 0.0, %v2274
      %v2276 = vpop.f32.mrb[0].mxu0
      %2277 = vmatprep.mubr.f32.mxu0 0.0
      %2278 = vmatmul.mubr.f32.gmra.mrb[0].mxu0 %v2162
      %v2279 = vpop.f32.mrb[0].mxu0
      %v2280 = vadd.f32 0.0, %v2279
      %v2281 = vpop.f32.mrb[0].mxu0
      %2282 = vmatprep.mubr.f32.mxu0 0.0
      %2283 = vmatmul.mubr.f32.gmra.mrb[0].mxu0 %v2165
      %v2284 = vpop.f32.mrb[0].mxu0
      %v2285 = vadd.f32 0.0, %v2284
      %v2286 = vpop.f32.mrb[0].mxu0
      %2287 = vmatprep.mubr.f32.mxu0 0.0
      %2288 = vmatmul.mubr.f32.gmra.mrb[0].mxu0 %v2168
      %v2289 = vpop.f32.mrb[0].mxu0
      %v2290 = vadd.f32 0.0, %v2289
      %v2291 = vpop.f32.mrb[0].mxu0
      %2292 = vmatprep.mubr.f32.mxu0 0.0
      %2293 = vmatmul.mubr.f32.gmra.mrb[0].mxu0 %v2171
      %v2294 = vpop.f32.mrb[0].mxu0
      %v2295 = vadd.f32 0.0, %v2294
      %v2296 = vpop.f32.mrb[0].mxu0
      %2297 = vmatprep.mubr.f32.mxu0 0.0
      %2298 = vmatmul.mubr.f32.gmra.mrb[0].mxu0 %v2174
      %v2299 = vpop.f32.mrb[0].mxu0
      %v2300 = vadd.f32 0.0, %v2299
      %v2301 = vpop.f32.mrb[0].mxu0
      %2302 = vmatprep.mubr.f32.mxu0 0.0
      %2303 = vmatmul.mubr.f32.gmra.mrb[0].mxu0 %v2177
      %v2304 = vpop.f32.mrb[0].mxu0
      %v2305 = vadd.f32 0.0, %v2304
      %v2306 = vpop.f32.mrb[0].mxu0
      %2307 = vmatprep.mubr.f32.mxu0 0.0
      %2308 = vmatmul.mubr.f32.gmra.mrb[0].mxu0 %v2180
      %v2309 = vpop.f32.mrb[0].mxu0
      %v2310 = vadd.f32 0.0, %v2309
      %v2311 = vpop.f32.mrb[0].mxu0
      %2312 = vmatprep.mubr.f32.mxu0 0.0
      %2313 = vmatmul.mubr.f32.gmra.mrb[0].mxu0 %v2183
      %v2314 = vpop.f32.mrb[0].mxu0
      %v2315 = vadd.f32 0.0, %v2314
      %v2316 = vpop.f32.mrb[0].mxu0
      %2317 = vmatprep.mubr.f32.mxu0 0.0
      %2318 = vmatmul.mubr.f32.gmra.mrb[0].mxu0 %v2186
      %v2319 = vpop.f32.mrb[0].mxu0
      %v2320 = vadd.f32 0.0, %v2319
      %v2321 = vpop.f32.mrb[0].mxu0
      %2322 = vmatprep.mubr.f32.mxu0 0.0
      %2323 = vmatmul.mubr.f32.gmra.mrb[0].mxu0 %v2189
      %v2324 = vpop.f32.mrb[0].mxu0
      %v2325 = vadd.f32 0.0, %v2324
      %v2326 = vpop.f32.mrb[0].mxu0
      %2327 = vmatprep.mubr.f32.mxu0 0.0
      %2328 = vmatmul.mubr.f32.gmra.mrb[0].mxu0 %v2192
      %v2329 = vpop.f32.mrb[0].mxu0
      %v2330 = vadd.f32 0.0, %v2329
      %v2331 = vpop.f32.mrb[0].mxu0
      %2332 = vmatprep.mubr.f32.mxu0 0.0
      %2333 = vmatmul.mubr.f32.gmra.mrb[0].mxu0 %v2195
      %v2334 = vpop.f32.mrb[0].mxu0
      %v2335 = vadd.f32 0.0, %v2334
      %v2336 = vpop.f32.mrb[0].mxu0
      %2337 = vmatprep.mubr.f32.mxu0 0.0
      %2338 = vmatmul.mubr.f32.gmra.mrb[0].mxu0 %v2198
      %v2339 = vpop.f32.mrb[0].mxu0
      %v2340 = vadd.f32 0.0, %v2339
      %v2341 = vpop.f32.mrb[0].mxu0
      %2342 = vmatprep.mubr.f32.mxu0 0.0
      %2343 = vmatmul.mubr.f32.gmra.mrb[0].mxu0 %v2201
      %v2344 = vpop.f32.mrb[0].mxu0
      %v2345 = vadd.f32 0.0, %v2344
      %v2346 = vpop.f32.mrb[0].mxu0
      %2347 = vdwg.mxu0
      %v2348 = vadd.f32 %v2121, %v2270
      %v2349 = vadd.f32 %v2122, %v2275
      %v2350 = vadd.f32 %v2123, %v2280
      %v2351 = vadd.f32 %v2124, %v2285
      %v2352 = vadd.f32 %v2125, %v2290
      %v2353 = vadd.f32 %v2126, %v2295
      %v2354 = vadd.f32 %v2127, %v2300
      %v2355 = vadd.f32 %v2128, %v2305
      %v2356 = vadd.f32 %v2129, %v2310
      %v2357 = vadd.f32 %v2130, %v2315
      %v2358 = vadd.f32 %v2131, %v2320
      %v2359 = vadd.f32 %v2132, %v2325
      %v2360 = vadd.f32 %v2133, %v2330
      %v2361 = vadd.f32 %v2134, %v2335
      %v2362 = vadd.f32 %v2135, %v2340
      %v2363 = vadd.f32 %v2136, %v2345
      %s2364 = scalar_lea.vmem [#allocation2], 48
      %v2365 = vld [vmem:[%s2364] sm:$0xff]
      %v2366 = vld [vmem:[%s2364 + $0x8] sm:$0xff]
      %v2367 = vld [vmem:[%s2364 + $0x18] sm:$0xff]
      %v2368 = vld [vmem:[%s2364 + $0x20] sm:$0xff]
      %v2369 = vld [vmem:[%s2364 + $0x30] sm:$0xff]
      %v2370 = vld [vmem:[%s2364 + $0x38] sm:$0xff]
      %v2371 = vld [vmem:[%s2364 + $0x48] sm:$0xff]
      %v2372 = vld [vmem:[%s2364 + $0x50] sm:$0xff]
      %v2373 = vld [vmem:[%s2364 + $0x60] sm:$0xff]
      %v2374 = vld [vmem:[%s2364 + $0x68] sm:$0xff]
      %v2375 = vld [vmem:[%s2364 + $0x78] sm:$0xff]
      %v2376 = vld [vmem:[%s2364 + $0x80] sm:$0xff]
      %v2377 = vld [vmem:[%s2364 + $0x90] sm:$0xff]
      %v2378 = vld [vmem:[%s2364 + $0x98] sm:$0xff]
      %v2379 = vld [vmem:[%s2364 + $0xa8] sm:$0xff]
      %v2380 = vld [vmem:[%s2364 + $0xb0] sm:$0xff]
      %s2381 = scalar_lea.vmem %s5, 48
      %v2382 = vld [vmem:[%s2381] sm:$0xff]
      %v2384 = vsel %vm492, %v2365, 0
      %v2387 = vsel %vm492, %v2366, 0
      %v2390 = vsel %vm492, %v2367, 0
      %v2393 = vsel %vm492, %v2368, 0
      %v2396 = vsel %vm492, %v2369, 0
      %v2399 = vsel %vm492, %v2370, 0
      %v2402 = vsel %vm492, %v2371, 0
      %v2405 = vsel %vm492, %v2372, 0
      %v2408 = vsel %vm492, %v2373, 0
      %v2411 = vsel %vm492, %v2374, 0
      %v2414 = vsel %vm492, %v2375, 0
      %v2417 = vsel %vm492, %v2376, 0
      %v2420 = vsel %vm492, %v2377, 0
      %v2423 = vsel %vm492, %v2378, 0
      %v2426 = vsel %vm492, %v2379, 0
      %v2429 = vsel %vm492, %v2380, 0
      %2431 = vmatprep.subr.mxu0 0.0
      %2432 = vmatpush1.msra.mxu0 %v2382
      %2433 = vmatprep.subr.mxu0 0.0
      %2434 = vmatpush1.msra.mxu0 0.0
      %2435 = vmatprep.subr.mxu0 0.0
      %2436 = vmatpush1.msra.mxu0 0.0
      %2437 = vmatprep.subr.mxu0 0.0
      %2438 = vmatpush1.msra.mxu0 0.0
      %2439 = vmatprep.subr.mxu0 0.0
      %2440 = vmatpush1.msra.mxu0 0.0
      %2441 = vmatprep.subr.mxu0 0.0
      %2442 = vmatpush1.msra.mxu0 0.0
      %2443 = vmatprep.subr.mxu0 0.0
      %2444 = vmatpush1.msra.mxu0 0.0
      %2445 = vmatprep.subr.mxu0 0.0
      %2446 = vmatpush1.msra.mxu0 0.0
      %2447 = vmatprep.subr.mxu0 0.0
      %2448 = vmatpush1.msra.mxu0 0.0
      %2449 = vmatprep.subr.mxu0 0.0
      %2450 = vmatpush1.msra.mxu0 0.0
      %2451 = vmatprep.subr.mxu0 0.0
      %2452 = vmatpush1.msra.mxu0 0.0
      %2453 = vmatprep.subr.mxu0 0.0
      %2454 = vmatpush1.msra.mxu0 0.0
      %2455 = vmatprep.subr.mxu0 0.0
      %2456 = vmatpush1.msra.mxu0 0.0
      %2457 = vmatprep.subr.mxu0 0.0
      %2458 = vmatpush1.msra.mxu0 0.0
      %2459 = vmatprep.subr.mxu0 0.0
      %2460 = vmatpush1.msra.mxu0 0.0
      %2461 = vmatprep.subr.mxu0 0.0
      %2462 = vmatpush1.msra.mxu0 0.0
      %2463 = vmatprep.subr.mxu0 0.0
      %2464 = vmatpush1.msra.mxu0 0.0
      %2465 = vmatprep.subr.mxu0 0.0
      %2466 = vmatpush1.msra.mxu0 0.0
      %2467 = vmatprep.subr.mxu0 0.0
      %2468 = vmatpush1.msra.mxu0 0.0
      %2469 = vmatprep.subr.mxu0 0.0
      %2470 = vmatpush1.msra.mxu0 0.0
      %2471 = vmatprep.subr.mxu0 0.0
      %2472 = vmatpush1.msra.mxu0 0.0
      %2473 = vmatprep.subr.mxu0 0.0
      %2474 = vmatpush1.msra.mxu0 0.0
      %2475 = vmatprep.subr.mxu0 0.0
      %2476 = vmatpush1.msra.mxu0 0.0
      %2477 = vmatprep.subr.mxu0 0.0
      %2478 = vmatpush1.msra.mxu0 0.0
      %2479 = vmatprep.subr.mxu0 0.0
      %2480 = vmatpush1.msra.mxu0 0.0
      %2481 = vmatprep.subr.mxu0 0.0
      %2482 = vmatpush1.msra.mxu0 0.0
      %2483 = vmatprep.subr.mxu0 0.0
      %2484 = vmatpush1.msra.mxu0 0.0
      %2485 = vmatprep.subr.mxu0 0.0
      %2486 = vmatpush1.msra.mxu0 0.0
      %2487 = vmatprep.subr.mxu0 0.0
      %2488 = vmatpush1.msra.mxu0 0.0
      %2489 = vmatprep.subr.mxu0 0.0
      %2490 = vmatpush1.msra.mxu0 0.0
      %2491 = vmatprep.subr.mxu0 0.0
      %2492 = vmatpush1.msra.mxu0 0.0
      %2493 = vmatprep.subr.mxu0 0.0
      %2494 = vmatpush1.msra.mxu0 0.0
      %2495 = vmatprep.mubr.f32.mxu0 0.0
      %2496 = vmatmul.mubr.f32.gmra.mrb[0].mxu0 %v2384
      %v2497 = vpop.f32.mrb[0].mxu0
      %v2498 = vadd.f32 0.0, %v2497
      %v2499 = vpop.f32.mrb[0].mxu0
      %2500 = vmatprep.mubr.f32.mxu0 0.0
      %2501 = vmatmul.mubr.f32.gmra.mrb[0].mxu0 %v2387
      %v2502 = vpop.f32.mrb[0].mxu0
      %v2503 = vadd.f32 0.0, %v2502
      %v2504 = vpop.f32.mrb[0].mxu0
      %2505 = vmatprep.mubr.f32.mxu0 0.0
      %2506 = vmatmul.mubr.f32.gmra.mrb[0].mxu0 %v2390
      %v2507 = vpop.f32.mrb[0].mxu0
      %v2508 = vadd.f32 0.0, %v2507
      %v2509 = vpop.f32.mrb[0].mxu0
      %2510 = vmatprep.mubr.f32.mxu0 0.0
      %2511 = vmatmul.mubr.f32.gmra.mrb[0].mxu0 %v2393
      %v2512 = vpop.f32.mrb[0].mxu0
      %v2513 = vadd.f32 0.0, %v2512
      %v2514 = vpop.f32.mrb[0].mxu0
      %2515 = vmatprep.mubr.f32.mxu0 0.0
      %2516 = vmatmul.mubr.f32.gmra.mrb[0].mxu0 %v2396
      %v2517 = vpop.f32.mrb[0].mxu0
      %v2518 = vadd.f32 0.0, %v2517
      %v2519 = vpop.f32.mrb[0].mxu0
      %2520 = vmatprep.mubr.f32.mxu0 0.0
      %2521 = vmatmul.mubr.f32.gmra.mrb[0].mxu0 %v2399
      %v2522 = vpop.f32.mrb[0].mxu0
      %v2523 = vadd.f32 0.0, %v2522
      %v2524 = vpop.f32.mrb[0].mxu0
      %2525 = vmatprep.mubr.f32.mxu0 0.0
      %2526 = vmatmul.mubr.f32.gmra.mrb[0].mxu0 %v2402
      %v2527 = vpop.f32.mrb[0].mxu0
      %v2528 = vadd.f32 0.0, %v2527
      %v2529 = vpop.f32.mrb[0].mxu0
      %2530 = vmatprep.mubr.f32.mxu0 0.0
      %2531 = vmatmul.mubr.f32.gmra.mrb[0].mxu0 %v2405
      %v2532 = vpop.f32.mrb[0].mxu0
      %v2533 = vadd.f32 0.0, %v2532
      %v2534 = vpop.f32.mrb[0].mxu0
      %2535 = vmatprep.mubr.f32.mxu0 0.0
      %2536 = vmatmul.mubr.f32.gmra.mrb[0].mxu0 %v2408
      %v2537 = vpop.f32.mrb[0].mxu0
      %v2538 = vadd.f32 0.0, %v2537
      %v2539 = vpop.f32.mrb[0].mxu0
      %2540 = vmatprep.mubr.f32.mxu0 0.0
      %2541 = vmatmul.mubr.f32.gmra.mrb[0].mxu0 %v2411
      %v2542 = vpop.f32.mrb[0].mxu0
      %v2543 = vadd.f32 0.0, %v2542
      %v2544 = vpop.f32.mrb[0].mxu0
      %2545 = vmatprep.mubr.f32.mxu0 0.0
      %2546 = vmatmul.mubr.f32.gmra.mrb[0].mxu0 %v2414
      %v2547 = vpop.f32.mrb[0].mxu0
      %v2548 = vadd.f32 0.0, %v2547
      %v2549 = vpop.f32.mrb[0].mxu0
      %2550 = vmatprep.mubr.f32.mxu0 0.0
      %2551 = vmatmul.mubr.f32.gmra.mrb[0].mxu0 %v2417
      %v2552 = vpop.f32.mrb[0].mxu0
      %v2553 = vadd.f32 0.0, %v2552
      %v2554 = vpop.f32.mrb[0].mxu0
      %2555 = vmatprep.mubr.f32.mxu0 0.0
      %2556 = vmatmul.mubr.f32.gmra.mrb[0].mxu0 %v2420
      %v2557 = vpop.f32.mrb[0].mxu0
      %v2558 = vadd.f32 0.0, %v2557
      %v2559 = vpop.f32.mrb[0].mxu0
      %2560 = vmatprep.mubr.f32.mxu0 0.0
      %2561 = vmatmul.mubr.f32.gmra.mrb[0].mxu0 %v2423
      %v2562 = vpop.f32.mrb[0].mxu0
      %v2563 = vadd.f32 0.0, %v2562
      %v2564 = vpop.f32.mrb[0].mxu0
      %2565 = vmatprep.mubr.f32.mxu0 0.0
      %2566 = vmatmul.mubr.f32.gmra.mrb[0].mxu0 %v2426
      %v2567 = vpop.f32.mrb[0].mxu0
      %v2568 = vadd.f32 0.0, %v2567
      %v2569 = vpop.f32.mrb[0].mxu0
      %2570 = vmatprep.mubr.f32.mxu0 0.0
      %2571 = vmatmul.mubr.f32.gmra.mrb[0].mxu0 %v2429
      %v2572 = vpop.f32.mrb[0].mxu0
      %v2573 = vadd.f32 0.0, %v2572
      %v2574 = vpop.f32.mrb[0].mxu0
      %2575 = vdwg.mxu0
      %v2576 = vadd.f32 %v2348, %v2498
      %v2577 = vadd.f32 %v2349, %v2503
      %v2578 = vadd.f32 %v2350, %v2508
      %v2579 = vadd.f32 %v2351, %v2513
      %v2580 = vadd.f32 %v2352, %v2518
      %v2581 = vadd.f32 %v2353, %v2523
      %v2582 = vadd.f32 %v2354, %v2528
      %v2583 = vadd.f32 %v2355, %v2533
      %v2584 = vadd.f32 %v2356, %v2538
      %v2585 = vadd.f32 %v2357, %v2543
      %v2586 = vadd.f32 %v2358, %v2548
      %v2587 = vadd.f32 %v2359, %v2553
      %v2588 = vadd.f32 %v2360, %v2558
      %v2589 = vadd.f32 %v2361, %v2563
      %v2590 = vadd.f32 %v2362, %v2568
      %v2591 = vadd.f32 %v2363, %v2573
      %v2592 = vld [vmem:[%s2364 + $0x1] sm:$0xff]
      %v2593 = vld [vmem:[%s2364 + $0x9] sm:$0xff]
      %v2594 = vld [vmem:[%s2364 + $0x19] sm:$0xff]
      %v2595 = vld [vmem:[%s2364 + $0x21] sm:$0xff]
      %v2596 = vld [vmem:[%s2364 + $0x31] sm:$0xff]
      %v2597 = vld [vmem:[%s2364 + $0x39] sm:$0xff]
      %v2598 = vld [vmem:[%s2364 + $0x49] sm:$0xff]
      %v2599 = vld [vmem:[%s2364 + $0x51] sm:$0xff]
      %v2600 = vld [vmem:[%s2364 + $0x61] sm:$0xff]
      %v2601 = vld [vmem:[%s2364 + $0x69] sm:$0xff]
      %v2602 = vld [vmem:[%s2364 + $0x79] sm:$0xff]
      %v2603 = vld [vmem:[%s2364 + $0x81] sm:$0xff]
      %v2604 = vld [vmem:[%s2364 + $0x91] sm:$0xff]
      %v2605 = vld [vmem:[%s2364 + $0x99] sm:$0xff]
      %v2606 = vld [vmem:[%s2364 + $0xa9] sm:$0xff]
      %v2607 = vld [vmem:[%s2364 + $0xb1] sm:$0xff]
      %s2608 = scalar_lea.vmem %s5, 56
      %v2609 = vld [vmem:[%s2608] sm:$0xff]
      %v2611 = vsel %vm492, %v2592, 0
      %v2614 = vsel %vm492, %v2593, 0
      %v2617 = vsel %vm492, %v2594, 0
      %v2620 = vsel %vm492, %v2595, 0
      %v2623 = vsel %vm492, %v2596, 0
      %v2626 = vsel %vm492, %v2597, 0
      %v2629 = vsel %vm492, %v2598, 0
      %v2632 = vsel %vm492, %v2599, 0
      %v2635 = vsel %vm492, %v2600, 0
      %v2638 = vsel %vm492, %v2601, 0
      %v2641 = vsel %vm492, %v2602, 0
      %v2644 = vsel %vm492, %v2603, 0
      %v2647 = vsel %vm492, %v2604, 0
      %v2650 = vsel %vm492, %v2605, 0
      %v2653 = vsel %vm492, %v2606, 0
      %v2656 = vsel %vm492, %v2607, 0
      %2658 = vmatprep.subr.mxu0 0.0
      %2659 = vmatpush1.msra.mxu0 %v2609
      %2660 = vmatprep.subr.mxu0 0.0
      %2661 = vmatpush1.msra.mxu0 0.0
      %2662 = vmatprep.subr.mxu0 0.0
      %2663 = vmatpush1.msra.mxu0 0.0
      %2664 = vmatprep.subr.mxu0 0.0
      %2665 = vmatpush1.msra.mxu0 0.0
      %2666 = vmatprep.subr.mxu0 0.0
      %2667 = vmatpush1.msra.mxu0 0.0
      %2668 = vmatprep.subr.mxu0 0.0
      %2669 = vmatpush1.msra.mxu0 0.0
      %2670 = vmatprep.subr.mxu0 0.0
      %2671 = vmatpush1.msra.mxu0 0.0
      %2672 = vmatprep.subr.mxu0 0.0
      %2673 = vmatpush1.msra.mxu0 0.0
      %2674 = vmatprep.subr.mxu0 0.0
      %2675 = vmatpush1.msra.mxu0 0.0
      %2676 = vmatprep.subr.mxu0 0.0
      %2677 = vmatpush1.msra.mxu0 0.0
      %2678 = vmatprep.subr.mxu0 0.0
      %2679 = vmatpush1.msra.mxu0 0.0
      %2680 = vmatprep.subr.mxu0 0.0
      %2681 = vmatpush1.msra.mxu0 0.0
      %2682 = vmatprep.subr.mxu0 0.0
      %2683 = vmatpush1.msra.mxu0 0.0
      %2684 = vmatprep.subr.mxu0 0.0
      %2685 = vmatpush1.msra.mxu0 0.0
      %2686 = vmatprep.subr.mxu0 0.0
      %2687 = vmatpush1.msra.mxu0 0.0
      %2688 = vmatprep.subr.mxu0 0.0
      %2689 = vmatpush1.msra.mxu0 0.0
      %2690 = vmatprep.subr.mxu0 0.0
      %2691 = vmatpush1.msra.mxu0 0.0
      %2692 = vmatprep.subr.mxu0 0.0
      %2693 = vmatpush1.msra.mxu0 0.0
      %2694 = vmatprep.subr.mxu0 0.0
      %2695 = vmatpush1.msra.mxu0 0.0
      %2696 = vmatprep.subr.mxu0 0.0
      %2697 = vmatpush1.msra.mxu0 0.0
      %2698 = vmatprep.subr.mxu0 0.0
      %2699 = vmatpush1.msra.mxu0 0.0
      %2700 = vmatprep.subr.mxu0 0.0
      %2701 = vmatpush1.msra.mxu0 0.0
      %2702 = vmatprep.subr.mxu0 0.0
      %2703 = vmatpush1.msra.mxu0 0.0
      %2704 = vmatprep.subr.mxu0 0.0
      %2705 = vmatpush1.msra.mxu0 0.0
      %2706 = vmatprep.subr.mxu0 0.0
      %2707 = vmatpush1.msra.mxu0 0.0
      %2708 = vmatprep.subr.mxu0 0.0
      %2709 = vmatpush1.msra.mxu0 0.0
      %2710 = vmatprep.subr.mxu0 0.0
      %2711 = vmatpush1.msra.mxu0 0.0
      %2712 = vmatprep.subr.mxu0 0.0
      %2713 = vmatpush1.msra.mxu0 0.0
      %2714 = vmatprep.subr.mxu0 0.0
      %2715 = vmatpush1.msra.mxu0 0.0
      %2716 = vmatprep.subr.mxu0 0.0
      %2717 = vmatpush1.msra.mxu0 0.0
      %2718 = vmatprep.subr.mxu0 0.0
      %2719 = vmatpush1.msra.mxu0 0.0
      %2720 = vmatprep.subr.mxu0 0.0
      %2721 = vmatpush1.msra.mxu0 0.0
      %2722 = vmatprep.mubr.f32.mxu0 0.0
      %2723 = vmatmul.mubr.f32.gmra.mrb[0].mxu0 %v2611
      %v2724 = vpop.f32.mrb[0].mxu0
      %v2725 = vadd.f32 0.0, %v2724
      %v2726 = vpop.f32.mrb[0].mxu0
      %2727 = vmatprep.mubr.f32.mxu0 0.0
      %2728 = vmatmul.mubr.f32.gmra.mrb[0].mxu0 %v2614
      %v2729 = vpop.f32.mrb[0].mxu0
      %v2730 = vadd.f32 0.0, %v2729
      %v2731 = vpop.f32.mrb[0].mxu0
      %2732 = vmatprep.mubr.f32.mxu0 0.0
      %2733 = vmatmul.mubr.f32.gmra.mrb[0].mxu0 %v2617
      %v2734 = vpop.f32.mrb[0].mxu0
      %v2735 = vadd.f32 0.0, %v2734
      %v2736 = vpop.f32.mrb[0].mxu0
      %2737 = vmatprep.mubr.f32.mxu0 0.0
      %2738 = vmatmul.mubr.f32.gmra.mrb[0].mxu0 %v2620
      %v2739 = vpop.f32.mrb[0].mxu0
      %v2740 = vadd.f32 0.0, %v2739
      %v2741 = vpop.f32.mrb[0].mxu0
      %2742 = vmatprep.mubr.f32.mxu0 0.0
      %2743 = vmatmul.mubr.f32.gmra.mrb[0].mxu0 %v2623
      %v2744 = vpop.f32.mrb[0].mxu0
      %v2745 = vadd.f32 0.0, %v2744
      %v2746 = vpop.f32.mrb[0].mxu0
      %2747 = vmatprep.mubr.f32.mxu0 0.0
      %2748 = vmatmul.mubr.f32.gmra.mrb[0].mxu0 %v2626
      %v2749 = vpop.f32.mrb[0].mxu0
      %v2750 = vadd.f32 0.0, %v2749
      %v2751 = vpop.f32.mrb[0].mxu0
      %2752 = vmatprep.mubr.f32.mxu0 0.0
      %2753 = vmatmul.mubr.f32.gmra.mrb[0].mxu0 %v2629
      %v2754 = vpop.f32.mrb[0].mxu0
      %v2755 = vadd.f32 0.0, %v2754
      %v2756 = vpop.f32.mrb[0].mxu0
      %2757 = vmatprep.mubr.f32.mxu0 0.0
      %2758 = vmatmul.mubr.f32.gmra.mrb[0].mxu0 %v2632
      %v2759 = vpop.f32.mrb[0].mxu0
      %v2760 = vadd.f32 0.0, %v2759
      %v2761 = vpop.f32.mrb[0].mxu0
      %2762 = vmatprep.mubr.f32.mxu0 0.0
      %2763 = vmatmul.mubr.f32.gmra.mrb[0].mxu0 %v2635
      %v2764 = vpop.f32.mrb[0].mxu0
      %v2765 = vadd.f32 0.0, %v2764
      %v2766 = vpop.f32.mrb[0].mxu0
      %2767 = vmatprep.mubr.f32.mxu0 0.0
      %2768 = vmatmul.mubr.f32.gmra.mrb[0].mxu0 %v2638
      %v2769 = vpop.f32.mrb[0].mxu0
      %v2770 = vadd.f32 0.0, %v2769
      %v2771 = vpop.f32.mrb[0].mxu0
      %2772 = vmatprep.mubr.f32.mxu0 0.0
      %2773 = vmatmul.mubr.f32.gmra.mrb[0].mxu0 %v2641
      %v2774 = vpop.f32.mrb[0].mxu0
      %v2775 = vadd.f32 0.0, %v2774
      %v2776 = vpop.f32.mrb[0].mxu0
      %2777 = vmatprep.mubr.f32.mxu0 0.0
      %2778 = vmatmul.mubr.f32.gmra.mrb[0].mxu0 %v2644
      %v2779 = vpop.f32.mrb[0].mxu0
      %v2780 = vadd.f32 0.0, %v2779
      %v2781 = vpop.f32.mrb[0].mxu0
      %2782 = vmatprep.mubr.f32.mxu0 0.0
      %2783 = vmatmul.mubr.f32.gmra.mrb[0].mxu0 %v2647
      %v2784 = vpop.f32.mrb[0].mxu0
      %v2785 = vadd.f32 0.0, %v2784
      %v2786 = vpop.f32.mrb[0].mxu0
      %2787 = vmatprep.mubr.f32.mxu0 0.0
      %2788 = vmatmul.mubr.f32.gmra.mrb[0].mxu0 %v2650
      %v2789 = vpop.f32.mrb[0].mxu0
      %v2790 = vadd.f32 0.0, %v2789
      %v2791 = vpop.f32.mrb[0].mxu0
      %2792 = vmatprep.mubr.f32.mxu0 0.0
      %2793 = vmatmul.mubr.f32.gmra.mrb[0].mxu0 %v2653
      %v2794 = vpop.f32.mrb[0].mxu0
      %v2795 = vadd.f32 0.0, %v2794
      %v2796 = vpop.f32.mrb[0].mxu0
      %2797 = vmatprep.mubr.f32.mxu0 0.0
      %2798 = vmatmul.mubr.f32.gmra.mrb[0].mxu0 %v2656
      %v2799 = vpop.f32.mrb[0].mxu0
      %v2800 = vadd.f32 0.0, %v2799
      %v2801 = vpop.f32.mrb[0].mxu0
      %2802 = vdwg.mxu0
      %v2803 = vadd.f32 %v2576, %v2725
      %v2804 = vadd.f32 %v2577, %v2730
      %v2805 = vadd.f32 %v2578, %v2735
      %v2806 = vadd.f32 %v2579, %v2740
      %v2807 = vadd.f32 %v2580, %v2745
      %v2808 = vadd.f32 %v2581, %v2750
      %v2809 = vadd.f32 %v2582, %v2755
      %v2810 = vadd.f32 %v2583, %v2760
      %v2811 = vadd.f32 %v2584, %v2765
      %v2812 = vadd.f32 %v2585, %v2770
      %v2813 = vadd.f32 %v2586, %v2775
      %v2814 = vadd.f32 %v2587, %v2780
      %v2815 = vadd.f32 %v2588, %v2785
      %v2816 = vadd.f32 %v2589, %v2790
      %v2817 = vadd.f32 %v2590, %v2795
      %v2818 = vadd.f32 %v2591, %v2800
      %v2819 = vld [vmem:[%s2364 + $0x2] sm:$0xff]
      %v2820 = vld [vmem:[%s2364 + $0xa] sm:$0xff]
      %v2821 = vld [vmem:[%s2364 + $0x1a] sm:$0xff]
      %v2822 = vld [vmem:[%s2364 + $0x22] sm:$0xff]
      %v2823 = vld [vmem:[%s2364 + $0x32] sm:$0xff]
      %v2824 = vld [vmem:[%s2364 + $0x3a] sm:$0xff]
      %v2825 = vld [vmem:[%s2364 + $0x4a] sm:$0xff]
      %v2826 = vld [vmem:[%s2364 + $0x52] sm:$0xff]
      %v2827 = vld [vmem:[%s2364 + $0x62] sm:$0xff]
      %v2828 = vld [vmem:[%s2364 + $0x6a] sm:$0xff]
      %v2829 = vld [vmem:[%s2364 + $0x7a] sm:$0xff]
      %v2830 = vld [vmem:[%s2364 + $0x82] sm:$0xff]
      %v2831 = vld [vmem:[%s2364 + $0x92] sm:$0xff]
      %v2832 = vld [vmem:[%s2364 + $0x9a] sm:$0xff]
      %v2833 = vld [vmem:[%s2364 + $0xaa] sm:$0xff]
      %v2834 = vld [vmem:[%s2364 + $0xb2] sm:$0xff]
      %s2835 = scalar_lea.vmem %s5, 64
      %v2836 = vld [vmem:[%s2835] sm:$0xff]
      %v2838 = vsel %vm492, %v2819, 0
      %v2841 = vsel %vm492, %v2820, 0
      %v2844 = vsel %vm492, %v2821, 0
      %v2847 = vsel %vm492, %v2822, 0
      %v2850 = vsel %vm492, %v2823, 0
      %v2853 = vsel %vm492, %v2824, 0
      %v2856 = vsel %vm492, %v2825, 0
      %v2859 = vsel %vm492, %v2826, 0
      %v2862 = vsel %vm492, %v2827, 0
      %v2865 = vsel %vm492, %v2828, 0
      %v2868 = vsel %vm492, %v2829, 0
      %v2871 = vsel %vm492, %v2830, 0
      %v2874 = vsel %vm492, %v2831, 0
      %v2877 = vsel %vm492, %v2832, 0
      %v2880 = vsel %vm492, %v2833, 0
      %v2883 = vsel %vm492, %v2834, 0
      %2885 = vmatprep.subr.mxu0 0.0
      %2886 = vmatpush1.msra.mxu0 %v2836
      %2887 = vmatprep.subr.mxu0 0.0
      %2888 = vmatpush1.msra.mxu0 0.0
      %2889 = vmatprep.subr.mxu0 0.0
      %2890 = vmatpush1.msra.mxu0 0.0
      %2891 = vmatprep.subr.mxu0 0.0
      %2892 = vmatpush1.msra.mxu0 0.0
      %2893 = vmatprep.subr.mxu0 0.0
      %2894 = vmatpush1.msra.mxu0 0.0
      %2895 = vmatprep.subr.mxu0 0.0
      %2896 = vmatpush1.msra.mxu0 0.0
      %2897 = vmatprep.subr.mxu0 0.0
      %2898 = vmatpush1.msra.mxu0 0.0
      %2899 = vmatprep.subr.mxu0 0.0
      %2900 = vmatpush1.msra.mxu0 0.0
      %2901 = vmatprep.subr.mxu0 0.0
      %2902 = vmatpush1.msra.mxu0 0.0
      %2903 = vmatprep.subr.mxu0 0.0
      %2904 = vmatpush1.msra.mxu0 0.0
      %2905 = vmatprep.subr.mxu0 0.0
      %2906 = vmatpush1.msra.mxu0 0.0
      %2907 = vmatprep.subr.mxu0 0.0
      %2908 = vmatpush1.msra.mxu0 0.0
      %2909 = vmatprep.subr.mxu0 0.0
      %2910 = vmatpush1.msra.mxu0 0.0
      %2911 = vmatprep.subr.mxu0 0.0
      %2912 = vmatpush1.msra.mxu0 0.0
      %2913 = vmatprep.subr.mxu0 0.0
      %2914 = vmatpush1.msra.mxu0 0.0
      %2915 = vmatprep.subr.mxu0 0.0
      %2916 = vmatpush1.msra.mxu0 0.0
      %2917 = vmatprep.subr.mxu0 0.0
      %2918 = vmatpush1.msra.mxu0 0.0
      %2919 = vmatprep.subr.mxu0 0.0
      %2920 = vmatpush1.msra.mxu0 0.0
      %2921 = vmatprep.subr.mxu0 0.0
      %2922 = vmatpush1.msra.mxu0 0.0
      %2923 = vmatprep.subr.mxu0 0.0
      %2924 = vmatpush1.msra.mxu0 0.0
      %2925 = vmatprep.subr.mxu0 0.0
      %2926 = vmatpush1.msra.mxu0 0.0
      %2927 = vmatprep.subr.mxu0 0.0
      %2928 = vmatpush1.msra.mxu0 0.0
      %2929 = vmatprep.subr.mxu0 0.0
      %2930 = vmatpush1.msra.mxu0 0.0
      %2931 = vmatprep.subr.mxu0 0.0
      %2932 = vmatpush1.msra.mxu0 0.0
      %2933 = vmatprep.subr.mxu0 0.0
      %2934 = vmatpush1.msra.mxu0 0.0
      %2935 = vmatprep.subr.mxu0 0.0
      %2936 = vmatpush1.msra.mxu0 0.0
      %2937 = vmatprep.subr.mxu0 0.0
      %2938 = vmatpush1.msra.mxu0 0.0
      %2939 = vmatprep.subr.mxu0 0.0
      %2940 = vmatpush1.msra.mxu0 0.0
      %2941 = vmatprep.subr.mxu0 0.0
      %2942 = vmatpush1.msra.mxu0 0.0
      %2943 = vmatprep.subr.mxu0 0.0
      %2944 = vmatpush1.msra.mxu0 0.0
      %2945 = vmatprep.subr.mxu0 0.0
      %2946 = vmatpush1.msra.mxu0 0.0
      %2947 = vmatprep.subr.mxu0 0.0
      %2948 = vmatpush1.msra.mxu0 0.0
      %2949 = vmatprep.mubr.f32.mxu0 0.0
      %2950 = vmatmul.mubr.f32.gmra.mrb[0].mxu0 %v2838
      %v2951 = vpop.f32.mrb[0].mxu0
      %v2952 = vadd.f32 0.0, %v2951
      %v2953 = vpop.f32.mrb[0].mxu0
      %2954 = vmatprep.mubr.f32.mxu0 0.0
      %2955 = vmatmul.mubr.f32.gmra.mrb[0].mxu0 %v2841
      %v2956 = vpop.f32.mrb[0].mxu0
      %v2957 = vadd.f32 0.0, %v2956
      %v2958 = vpop.f32.mrb[0].mxu0
      %2959 = vmatprep.mubr.f32.mxu0 0.0
      %2960 = vmatmul.mubr.f32.gmra.mrb[0].mxu0 %v2844
      %v2961 = vpop.f32.mrb[0].mxu0
      %v2962 = vadd.f32 0.0, %v2961
      %v2963 = vpop.f32.mrb[0].mxu0
      %2964 = vmatprep.mubr.f32.mxu0 0.0
      %2965 = vmatmul.mubr.f32.gmra.mrb[0].mxu0 %v2847
      %v2966 = vpop.f32.mrb[0].mxu0
      %v2967 = vadd.f32 0.0, %v2966
      %v2968 = vpop.f32.mrb[0].mxu0
      %2969 = vmatprep.mubr.f32.mxu0 0.0
      %2970 = vmatmul.mubr.f32.gmra.mrb[0].mxu0 %v2850
      %v2971 = vpop.f32.mrb[0].mxu0
      %v2972 = vadd.f32 0.0, %v2971
      %v2973 = vpop.f32.mrb[0].mxu0
      %2974 = vmatprep.mubr.f32.mxu0 0.0
      %2975 = vmatmul.mubr.f32.gmra.mrb[0].mxu0 %v2853
      %v2976 = vpop.f32.mrb[0].mxu0
      %v2977 = vadd.f32 0.0, %v2976
      %v2978 = vpop.f32.mrb[0].mxu0
      %2979 = vmatprep.mubr.f32.mxu0 0.0
      %2980 = vmatmul.mubr.f32.gmra.mrb[0].mxu0 %v2856
      %v2981 = vpop.f32.mrb[0].mxu0
      %v2982 = vadd.f32 0.0, %v2981
      %v2983 = vpop.f32.mrb[0].mxu0
      %2984 = vmatprep.mubr.f32.mxu0 0.0
      %2985 = vmatmul.mubr.f32.gmra.mrb[0].mxu0 %v2859
      %v2986 = vpop.f32.mrb[0].mxu0
      %v2987 = vadd.f32 0.0, %v2986
      %v2988 = vpop.f32.mrb[0].mxu0
      %2989 = vmatprep.mubr.f32.mxu0 0.0
      %2990 = vmatmul.mubr.f32.gmra.mrb[0].mxu0 %v2862
      %v2991 = vpop.f32.mrb[0].mxu0
      %v2992 = vadd.f32 0.0, %v2991
      %v2993 = vpop.f32.mrb[0].mxu0
      %2994 = vmatprep.mubr.f32.mxu0 0.0
      %2995 = vmatmul.mubr.f32.gmra.mrb[0].mxu0 %v2865
      %v2996 = vpop.f32.mrb[0].mxu0
      %v2997 = vadd.f32 0.0, %v2996
      %v2998 = vpop.f32.mrb[0].mxu0
      %2999 = vmatprep.mubr.f32.mxu0 0.0
      %3000 = vmatmul.mubr.f32.gmra.mrb[0].mxu0 %v2868
      %v3001 = vpop.f32.mrb[0].mxu0
      %v3002 = vadd.f32 0.0, %v3001
      %v3003 = vpop.f32.mrb[0].mxu0
      %3004 = vmatprep.mubr.f32.mxu0 0.0
      %3005 = vmatmul.mubr.f32.gmra.mrb[0].mxu0 %v2871
      %v3006 = vpop.f32.mrb[0].mxu0
      %v3007 = vadd.f32 0.0, %v3006
      %v3008 = vpop.f32.mrb[0].mxu0
      %3009 = vmatprep.mubr.f32.mxu0 0.0
      %3010 = vmatmul.mubr.f32.gmra.mrb[0].mxu0 %v2874
      %v3011 = vpop.f32.mrb[0].mxu0
      %v3012 = vadd.f32 0.0, %v3011
      %v3013 = vpop.f32.mrb[0].mxu0
      %3014 = vmatprep.mubr.f32.mxu0 0.0
      %3015 = vmatmul.mubr.f32.gmra.mrb[0].mxu0 %v2877
      %v3016 = vpop.f32.mrb[0].mxu0
      %v3017 = vadd.f32 0.0, %v3016
      %v3018 = vpop.f32.mrb[0].mxu0
      %3019 = vmatprep.mubr.f32.mxu0 0.0
      %3020 = vmatmul.mubr.f32.gmra.mrb[0].mxu0 %v2880
      %v3021 = vpop.f32.mrb[0].mxu0
      %v3022 = vadd.f32 0.0, %v3021
      %v3023 = vpop.f32.mrb[0].mxu0
      %3024 = vmatprep.mubr.f32.mxu0 0.0
      %3025 = vmatmul.mubr.f32.gmra.mrb[0].mxu0 %v2883
      %v3026 = vpop.f32.mrb[0].mxu0
      %v3027 = vadd.f32 0.0, %v3026
      %v3028 = vpop.f32.mrb[0].mxu0
      %3029 = vdwg.mxu0
      %v3030 = vadd.f32 %v2803, %v2952
      %v3031 = vadd.f32 %v2804, %v2957
      %v3032 = vadd.f32 %v2805, %v2962
      %v3033 = vadd.f32 %v2806, %v2967
      %v3034 = vadd.f32 %v2807, %v2972
      %v3035 = vadd.f32 %v2808, %v2977
      %v3036 = vadd.f32 %v2809, %v2982
      %v3037 = vadd.f32 %v2810, %v2987
      %v3038 = vadd.f32 %v2811, %v2992
      %v3039 = vadd.f32 %v2812, %v2997
      %v3040 = vadd.f32 %v2813, %v3002
      %v3041 = vadd.f32 %v2814, %v3007
      %v3042 = vadd.f32 %v2815, %v3012
      %v3043 = vadd.f32 %v2816, %v3017
      %v3044 = vadd.f32 %v2817, %v3022
      %v3045 = vadd.f32 %v2818, %v3027
      %v3046 = vld [vmem:[%s6] sm:$0x1]
      %v3048 = vlaneseq
      %v3049 = vshrl.u32 %v3048, 7
      %v3050 = vsub.s32 0, %v3049
      %v3051 = vrot.slane %v3046, %v3050
      %v3053 = vadd.f32 %v3030, %v3051
      %v3054 = vadd.f32 %v3031, %v3051
      %v3055 = vadd.f32 %v3032, %v3051
      %v3056 = vadd.f32 %v3033, %v3051
      %v3057 = vadd.f32 %v3034, %v3051
      %v3058 = vadd.f32 %v3035, %v3051
      %v3059 = vadd.f32 %v3036, %v3051
      %v3060 = vadd.f32 %v3037, %v3051
      %v3061 = vadd.f32 %v3038, %v3051
      %v3062 = vadd.f32 %v3039, %v3051
      %v3063 = vadd.f32 %v3040, %v3051
      %v3064 = vadd.f32 %v3041, %v3051
      %v3065 = vadd.f32 %v3042, %v3051
      %v3066 = vadd.f32 %v3043, %v3051
      %v3067 = vadd.f32 %v3044, %v3051
      %v3068 = vadd.f32 %v3045, %v3051
      %v3069 = vsub.f32 0.0, %v3053
      %v3070 = vsub.f32 0.0, %v3054
      %v3071 = vsub.f32 0.0, %v3055
      %v3072 = vsub.f32 0.0, %v3056
      %v3073 = vsub.f32 0.0, %v3057
      %v3074 = vsub.f32 0.0, %v3058
      %v3075 = vsub.f32 0.0, %v3059
      %v3076 = vsub.f32 0.0, %v3060
      %v3077 = vsub.f32 0.0, %v3061
      %v3078 = vsub.f32 0.0, %v3062
      %v3079 = vsub.f32 0.0, %v3063
      %v3080 = vsub.f32 0.0, %v3064
      %v3081 = vsub.f32 0.0, %v3065
      %v3082 = vsub.f32 0.0, %v3066
      %v3083 = vsub.f32 0.0, %v3067
      %v3084 = vsub.f32 0.0, %v3068
      %v3085 = vmul.f32 %v3069, 1.442695
      %v3086 = vpow.pop %v3085
      %v3087 = vmul.f32 %v3070, 1.442695
      %v3088 = vpow.pop %v3087
      %v3089 = vmul.f32 %v3071, 1.442695
      %v3090 = vpow.pop %v3089
      %v3091 = vmul.f32 %v3072, 1.442695
      %v3092 = vpow.pop %v3091
      %v3093 = vmul.f32 %v3073, 1.442695
      %v3094 = vpow.pop %v3093
      %v3095 = vmul.f32 %v3074, 1.442695
      %v3096 = vpow.pop %v3095
      %v3097 = vmul.f32 %v3075, 1.442695
      %v3098 = vpow.pop %v3097
      %v3099 = vmul.f32 %v3076, 1.442695
      %v3100 = vpow.pop %v3099
      %v3101 = vmul.f32 %v3077, 1.442695
      %v3102 = vpow.pop %v3101
      %v3103 = vmul.f32 %v3078, 1.442695
      %v3104 = vpow.pop %v3103
      %v3105 = vmul.f32 %v3079, 1.442695
      %v3106 = vpow.pop %v3105
      %v3107 = vmul.f32 %v3080, 1.442695
      %v3108 = vpow.pop %v3107
      %v3109 = vmul.f32 %v3081, 1.442695
      %v3110 = vpow.pop %v3109
      %v3111 = vmul.f32 %v3082, 1.442695
      %v3112 = vpow.pop %v3111
      %v3113 = vmul.f32 %v3083, 1.442695
      %v3114 = vpow.pop %v3113
      %v3115 = vmul.f32 %v3084, 1.442695
      %v3116 = vpow.pop %v3115
      %v3117 = vadd.f32 %v3086, 1.0
      %v3118 = vadd.f32 %v3088, 1.0
      %v3119 = vadd.f32 %v3090, 1.0
      %v3120 = vadd.f32 %v3092, 1.0
      %v3121 = vadd.f32 %v3094, 1.0
      %v3122 = vadd.f32 %v3096, 1.0
      %v3123 = vadd.f32 %v3098, 1.0
      %v3124 = vadd.f32 %v3100, 1.0
      %v3125 = vadd.f32 %v3102, 1.0
      %v3126 = vadd.f32 %v3104, 1.0
      %v3127 = vadd.f32 %v3106, 1.0
      %v3128 = vadd.f32 %v3108, 1.0
      %v3129 = vadd.f32 %v3110, 1.0
      %v3130 = vadd.f32 %v3112, 1.0
      %v3131 = vadd.f32 %v3114, 1.0
      %v3132 = vadd.f32 %v3116, 1.0
      %v3133 = vrcp.pop %v3117
      %v3134 = vmul.f32 1.0, %v3133
      %v3135 = vrcp.pop %v3118
      %v3136 = vmul.f32 1.0, %v3135
      %v3137 = vrcp.pop %v3119
      %v3138 = vmul.f32 1.0, %v3137
      %v3139 = vrcp.pop %v3120
      %v3140 = vmul.f32 1.0, %v3139
      %v3141 = vrcp.pop %v3121
      %v3142 = vmul.f32 1.0, %v3141
      %v3143 = vrcp.pop %v3122
      %v3144 = vmul.f32 1.0, %v3143
      %v3145 = vrcp.pop %v3123
      %v3146 = vmul.f32 1.0, %v3145
      %v3147 = vrcp.pop %v3124
      %v3148 = vmul.f32 1.0, %v3147
      %v3149 = vrcp.pop %v3125
      %v3150 = vmul.f32 1.0, %v3149
      %v3151 = vrcp.pop %v3126
      %v3152 = vmul.f32 1.0, %v3151
      %v3153 = vrcp.pop %v3127
      %v3154 = vmul.f32 1.0, %v3153
      %v3155 = vrcp.pop %v3128
      %v3156 = vmul.f32 1.0, %v3155
      %v3157 = vrcp.pop %v3129
      %v3158 = vmul.f32 1.0, %v3157
      %v3159 = vrcp.pop %v3130
      %v3160 = vmul.f32 1.0, %v3159
      %v3161 = vrcp.pop %v3131
      %v3162 = vmul.f32 1.0, %v3161
      %v3163 = vrcp.pop %v3132
      %v3164 = vmul.f32 1.0, %v3163
      %v3165 = vmul.f32 %v3053, %v3134
      %v3166 = vmul.f32 %v3054, %v3136
      %v3167 = vmul.f32 %v3055, %v3138
      %v3168 = vmul.f32 %v3056, %v3140
      %v3169 = vmul.f32 %v3057, %v3142
      %v3170 = vmul.f32 %v3058, %v3144
      %v3171 = vmul.f32 %v3059, %v3146
      %v3172 = vmul.f32 %v3060, %v3148
      %v3173 = vmul.f32 %v3061, %v3150
      %v3174 = vmul.f32 %v3062, %v3152
      %v3175 = vmul.f32 %v3063, %v3154
      %v3176 = vmul.f32 %v3064, %v3156
      %v3177 = vmul.f32 %v3065, %v3158
      %v3178 = vmul.f32 %v3066, %v3160
      %v3179 = vmul.f32 %v3067, %v3162
      %v3180 = vmul.f32 %v3068, %v3164
      %v3181 = vld [vmem:[%s400] sm:$0xff]
      %v3182 = vld [vmem:[%s400 + $0x8] sm:$0xff]
      %v3183 = vld [vmem:[%s400 + $0x10] sm:$0xff]
      %v3184 = vld [vmem:[%s400 + $0x18] sm:$0xff]
      %v3185 = vld [vmem:[%s400 + $0x20] sm:$0xff]
      %v3186 = vld [vmem:[%s400 + $0x28] sm:$0xff]
      %v3187 = vld [vmem:[%s400 + $0x30] sm:$0xff]
      %v3188 = vld [vmem:[%s400 + $0x38] sm:$0xff]
      %v3189 = vld [vmem:[%s400 + $0x40] sm:$0xff]
      %v3190 = vld [vmem:[%s400 + $0x48] sm:$0xff]
      %v3191 = vld [vmem:[%s400 + $0x50] sm:$0xff]
      %v3192 = vld [vmem:[%s400 + $0x58] sm:$0xff]
      %v3193 = vld [vmem:[%s400 + $0x60] sm:$0xff]
      %v3194 = vld [vmem:[%s400 + $0x68] sm:$0xff]
      %v3195 = vld [vmem:[%s400 + $0x70] sm:$0xff]
      %v3196 = vld [vmem:[%s400 + $0x78] sm:$0xff]
      %v3197 = vadd.f32 %v3165, %v3181
      %v3198 = vadd.f32 %v3166, %v3182
      %v3199 = vadd.f32 %v3167, %v3183
      %v3200 = vadd.f32 %v3168, %v3184
      %v3201 = vadd.f32 %v3169, %v3185
      %v3202 = vadd.f32 %v3170, %v3186
      %v3203 = vadd.f32 %v3171, %v3187
      %v3204 = vadd.f32 %v3172, %v3188
      %v3205 = vadd.f32 %v3173, %v3189
      %v3206 = vadd.f32 %v3174, %v3190
      %v3207 = vadd.f32 %v3175, %v3191
      %v3208 = vadd.f32 %v3176, %v3192
      %v3209 = vadd.f32 %v3177, %v3193
      %v3210 = vadd.f32 %v3178, %v3194
      %v3211 = vadd.f32 %v3179, %v3195
      %v3212 = vadd.f32 %v3180, %v3196
      %3213 = vst.msk [vmem:[%s445] sm:$0xff] %vm492, %v3197
      %3214 = vst.msk [vmem:[%s445 + $0x8] sm:$0xff] %vm492, %v3198
      %3215 = vst.msk [vmem:[%s445 + $0x10] sm:$0xff] %vm492, %v3199
      %3216 = vst.msk [vmem:[%s445 + $0x18] sm:$0xff] %vm492, %v3200
      %3217 = vst.msk [vmem:[%s445 + $0x20] sm:$0xff] %vm492, %v3201
      %3218 = vst.msk [vmem:[%s445 + $0x28] sm:$0xff] %vm492, %v3202
      %3219 = vst.msk [vmem:[%s445 + $0x30] sm:$0xff] %vm492, %v3203
      %3220 = vst.msk [vmem:[%s445 + $0x38] sm:$0xff] %vm492, %v3204
      %3221 = vst.msk [vmem:[%s445 + $0x40] sm:$0xff] %vm492, %v3205
      %3222 = vst.msk [vmem:[%s445 + $0x48] sm:$0xff] %vm492, %v3206
      %3223 = vst.msk [vmem:[%s445 + $0x50] sm:$0xff] %vm492, %v3207
      %3224 = vst.msk [vmem:[%s445 + $0x58] sm:$0xff] %vm492, %v3208
      %3225 = vst.msk [vmem:[%s445 + $0x60] sm:$0xff] %vm492, %v3209
      %3226 = vst.msk [vmem:[%s445 + $0x68] sm:$0xff] %vm492, %v3210
      %3227 = vst.msk [vmem:[%s445 + $0x70] sm:$0xff] %vm492, %v3211
      %3228 = vst.msk [vmem:[%s445 + $0x78] sm:$0xff] %vm492, %v3212
      %s3229 = smul.u32 8, %s23
      %p3230 = scmp.lt.s32.totalorder %s22, 1
      %s3231 = scalar_select %p3230, %s22, 1
      %p3232 = scmp.lt.s32.totalorder %s3229, 15
      %s3233 = scalar_select %p3232, %s3229, 15
      %s3234 = smul.addr %s3233, 2
      %s3235 = smul.addr %s3231, 32
      %s3236 = sadd.s32 %s3234, %s3235
      %s3237 = smul.addr %s3236, 8
      %s3238 = scalar_lea.vmem %s7, %s3237
      // Predicated region
      $region65: #{tpu_custom_call.1} parent=47 // pred_check
        %p3239 = pneg %p234
      $region66: #{tpu_custom_call.1} parent=47 // pred_check_branch
        %3241 = sbr.rel (%p3239) target = $region68
      $region67: #{tpu_custom_call.1} parent=47 // pred_region
        %s3242 = smul.u32 8, %s23
      $region68: #{tpu_custom_call.1} parent=47 // pred_fallthru
        _
    $region48: #{tpu_custom_call.1} parent=5 // pred_fallthru
      _
    %p3243 = scmp.le.s32.totalorder 2, %s13
    // Predicated region
    $region69: #{tpu_custom_call.1} parent=5 // pred_check
      %p3244 = pneg %p3243
    $region70: #{tpu_custom_call.1} parent=5 // pred_check_branch
      %3246 = sbr.rel (%p3244) target = $region72
    $region71: #{tpu_custom_call.1} parent=5 // pred_region
      %s3247 = ssub.s32 %s13, 2
      // Predicated region
      $region73: #{tpu_custom_call.1} parent=71 // pred_check
        %p3248 = pneg %p240
      $region74: #{tpu_custom_call.1} parent=71 // pred_check_branch
        %3250 = sbr.rel (%p3248) target = $region76
      $region75: #{tpu_custom_call.1} parent=71 // pred_region
        %s3251 = smul.u32 8, %s25
        %p3252 = scmp.lt.s32.totalorder %s24, 1
        %s3253 = scalar_select %p3252, %s24, 1
        %p3254 = scmp.lt.s32.totalorder %s3251, 15
        %s3255 = scalar_select %p3254, %s3251, 15
        %s3256 = smul.addr %s3255, 2
        %s3257 = smul.addr %s3253, 32
        %s3258 = sadd.s32 %s3256, %s3257
        %s3259 = smul.addr %s3258, 8
        %s3260 = scalar_lea.vmem %s7, %s3259
      $region76: #{tpu_custom_call.1} parent=71 // pred_fallthru
        _
    $region72: #{tpu_custom_call.1} parent=5 // pred_fallthru
      _
  $region6: #{tpu_custom_call.1} parent=0 // loop_footer
    %s17 = sadd.s32 1, %s13
  $region7: #{tpu_custom_call.1} parent=0 // loop_footer_branch
    %12 = sbr.rel target = $region3
  $region8: #{tpu_custom_call.1} parent=0 // loop_exit
    _

</llo_original>
